<compile_context>
chip_gen: v5e
topology: v5e:2x2
jax: 0.10.0
libtpu: 0.0.40
codegen_flags: <defaults>
</compile_context>

<pallas_src>
import jax
import jax.numpy as jnp
from jax import lax
from jax.experimental import pallas as pl
from jax.experimental.pallas import tpu as pltpu


def char_rnn_kernel(x_ref, h0_ref, c0_ref,
                    wih0_ref, whh0_ref, b0_ref,
                    w1cat_ref, b1_ref,
                    wout_ref, bout_ref,
                    out_ref, hn_ref, cn_ref,
                    xproj_ref, h1buf_ref, state_ref):
    tq_idx = pl.program_id(0)
    TQ, B, I = x_ref.shape
    H = hn_ref.shape[-1]
    E = out_ref.shape[-1]

    # Initialize carried (h, c) state for both layers on the first time chunk.
    @pl.when(tq_idx == 0)
    def _():
        state_ref[0] = h0_ref[0]
        state_ref[1] = c0_ref[0]
        state_ref[2] = h0_ref[1]
        state_ref[3] = c0_ref[1]

    # ---- hoisted loop invariants (single load / broadcast per chunk) -------
    whh0 = whh0_ref[...]                                    # (H, 4H)
    w1cat = w1cat_ref[...]                                  # (2H, 4H)
    b1 = jnp.broadcast_to(b1_ref[...], (B, 4 * H))          # (B, 4H)

    # ---- layer-0 input projection for the whole chunk (one big matmul) -----
    x_flat = x_ref[...].reshape(TQ * B, I)
    xproj = (jnp.dot(x_flat, wih0_ref[...], preferred_element_type=jnp.float32)
             + b0_ref[...])
    xproj_ref[...] = xproj.reshape(TQ, B, 4 * H)

    def gates_to_hc(gates, c):
        # PyTorch gate order: i, f, g, o; H % 128 == 0 -> aligned vreg slices.
        i = jax.nn.sigmoid(gates[:, 0 * H:1 * H])
        f = jax.nn.sigmoid(gates[:, 1 * H:2 * H])
        g = jnp.tanh(gates[:, 2 * H:3 * H])
        o = jax.nn.sigmoid(gates[:, 3 * H:4 * H])
        c_new = f * c + i * g
        h_new = o * jnp.tanh(c_new)
        return h_new, c_new

    def step(t, carry):
        h0, c0, h1, c1 = carry
        # Layer 0: only the recurrent matmul (input part precomputed above).
        g0 = xproj_ref[t] + jnp.dot(h0, whh0,
                                    preferred_element_type=jnp.float32)
        h0, c0 = gates_to_hc(g0, c0)
        # Layer 1: one fused matmul over [h0_t, h1_{t-1}].
        g1 = (jnp.dot(jnp.concatenate([h0, h1], axis=-1), w1cat,
                      preferred_element_type=jnp.float32) + b1)
        h1, c1 = gates_to_hc(g1, c1)
        h1buf_ref[t] = h1          # stage for the batched output projection
        return (h0, c0, h1, c1)

    init = (state_ref[0], state_ref[1], state_ref[2], state_ref[3])
    h0f, c0f, h1f, c1f = lax.fori_loop(0, TQ, step, init, unroll=True)

    # Carry state to the next time chunk.
    state_ref[0] = h0f
    state_ref[1] = c0f
    state_ref[2] = h1f
    state_ref[3] = c1f

    # ---- batched output projection: one lane-dense store per chunk ---------
    h1_flat = h1buf_ref[...].reshape(TQ * B, H)
    emb = (jnp.dot(h1_flat, wout_ref[...], preferred_element_type=jnp.float32)
           + bout_ref[...])
    out_ref[...] = emb.reshape(TQ, B, E)

    # Final hidden/cell state (resident output block; last chunk writes it).
    @pl.when(tq_idx == pl.num_programs(0) - 1)
    def _():
        hn_ref[0] = h0f
        hn_ref[1] = h1f
        cn_ref[0] = c0f
        cn_ref[1] = c1f


def _round_up(x, m):
    return ((x + m - 1) // m) * m


def characterwise_rnn_forward(x, hidden, params, *, time_chunk=8):
    """x: (T, B, I); hidden = (h0, c0), each (2, B, H).
    Returns (emb (T, B, E), (h_n, c_n) each (2, B, H))."""
    h0, c0 = hidden
    T, B, I = x.shape
    H = params["w_hh0_t"].shape[0]
    E = params["w_out_t"].shape[1]

    # Pad batch to a multiple of 8 sublanes (rows are independent -> safe).
    B_pad = max(8, _round_up(B, 8))
    if B_pad != B:
        x = jnp.pad(x, ((0, 0), (0, B_pad - B), (0, 0)))
        h0 = jnp.pad(h0, ((0, 0), (0, B_pad - B), (0, 0)))
        c0 = jnp.pad(c0, ((0, 0), (0, B_pad - B), (0, 0)))

    # Time chunking for the pipelined grid.
    TQ = time_chunk if (T % time_chunk == 0) else T
    n_chunks = T // TQ

    flt = jnp.float32
    # Pre-concatenated layer-1 weight: [W_ih1^T ; W_hh1^T] -> (2H, 4H).
    w1cat = jnp.concatenate([params["w_ih1_t"], params["w_hh1_t"]], axis=0)

    def full2d(shape):
        return pl.BlockSpec(shape, lambda t: (0, 0))

    out_emb, h_n, c_n = pl.pallas_call(
        char_rnn_kernel,
        out_shape=(
            jax.ShapeDtypeStruct((T, B_pad, E), flt),
            jax.ShapeDtypeStruct((2, B_pad, H), flt),
            jax.ShapeDtypeStruct((2, B_pad, H), flt),
        ),
        grid_spec=pltpu.PrefetchScalarGridSpec(
            num_scalar_prefetch=0,
            grid=(n_chunks,),
            in_specs=[
                pl.BlockSpec((TQ, B_pad, I), lambda t: (t, 0, 0)),   # x chunk
                pl.BlockSpec((2, B_pad, H), lambda t: (0, 0, 0)),    # h0
                pl.BlockSpec((2, B_pad, H), lambda t: (0, 0, 0)),    # c0
                full2d((I, 4 * H)),                                  # w_ih0_t
                full2d((H, 4 * H)),                                  # w_hh0_t
                full2d((1, 4 * H)),                                  # b0
                full2d((2 * H, 4 * H)),                              # w1cat
                full2d((1, 4 * H)),                                  # b1
                full2d((H, E)),                                      # w_out_t
                full2d((1, E)),                                      # b_out
            ],
            out_specs=(
                pl.BlockSpec((TQ, B_pad, E), lambda t: (t, 0, 0)),
                pl.BlockSpec((2, B_pad, H), lambda t: (0, 0, 0)),
                pl.BlockSpec((2, B_pad, H), lambda t: (0, 0, 0)),
            ),
            scratch_shapes=[
                pltpu.VMEM((TQ, B_pad, 4 * H), flt),   # hoisted x-projection
                pltpu.VMEM((TQ, B_pad, H), flt),       # per-chunk h1 staging
                pltpu.VMEM((4, B_pad, H), flt),        # carried (h0,c0,h1,c1)
            ],
        ),
        compiler_params=pltpu.CompilerParams(
            dimension_semantics=("arbitrary",)),
    )(x, h0, c0,
      params["w_ih0_t"], params["w_hh0_t"], params["b0"],
      w1cat, params["b1"],
      params["w_out_t"], params["b_out"])

    return out_emb[:, :B], (h_n[:, :B], c_n[:, :B])


def init_params(key, input_size, hidden_size, embedding_size):
    """Deterministic init mimicking PyTorch's U(-1/sqrt(H), 1/sqrt(H))."""
    k = 1.0 / jnp.sqrt(jnp.float32(hidden_size))
    keys = jax.random.split(key, 11)
    u = lambda kk, shape: jax.random.uniform(kk, shape, jnp.float32, -k, k)
    H, I, E = hidden_size, input_size, embedding_size
    # PyTorch stores W_ih: (4H, I), W_hh: (4H, H); pre-transpose for x @ W^T.
    w_ih0 = u(keys[0], (4 * H, I))
    w_hh0 = u(keys[1], (4 * H, H))
    b0 = u(keys[2], (4 * H,)) + u(keys[3], (4 * H,))        # b_ih + b_hh
    w_ih1 = u(keys[4], (4 * H, H))
    w_hh1 = u(keys[5], (4 * H, H))
    b1 = u(keys[6], (4 * H,)) + u(keys[7], (4 * H,))
    w_out = u(keys[8], (E, H))
    b_out = u(keys[9], (E,))
    return {
        "w_ih0_t": w_ih0.T, "w_hh0_t": w_hh0.T, "b0": b0.reshape(1, 4 * H),
        "w_ih1_t": w_ih1.T, "w_hh1_t": w_hh1.T, "b1": b1.reshape(1, 4 * H),
        "w_out_t": w_out.T, "b_out": b_out.reshape(1, E),
    }


def reference_forward(x, hidden, params):
    """Pure-JAX reference (no Pallas) for correctness checking."""
    h0, c0 = hidden
    H = params["w_hh0_t"].shape[0]

    def cell(x_t, h, c, wih, whh, b):
        g = x_t @ wih + h @ whh + b
        i = jax.nn.sigmoid(g[:, 0:H])
        f = jax.nn.sigmoid(g[:, H:2 * H])
        gg = jnp.tanh(g[:, 2 * H:3 * H])
        o = jax.nn.sigmoid(g[:, 3 * H:4 * H])
        c = f * c + i * gg
        return o * jnp.tanh(c), c

    def step(carry, x_t):
        h0_, c0_, h1_, c1_ = carry
        h0_, c0_ = cell(x_t, h0_, c0_, params["w_ih0_t"], params["w_hh0_t"],
                        params["b0"])
        h1_, c1_ = cell(h0_, h1_, c1_, params["w_ih1_t"], params["w_hh1_t"],
                        params["b1"])
        emb = h1_ @ params["w_out_t"] + params["b_out"]
        return (h0_, c0_, h1_, c1_), emb

    carry, emb = lax.scan(step, (h0[0], c0[0], h0[1], c0[1]), x)
    h0f, c0f, h1f, c1f = carry
    return emb, (jnp.stack([h0f, h1f]), jnp.stack([c0f, c1f]))


if __name__ == "__main__":
    # Module spec: c_hidden = 128, embedding_size = 128 (lane-aligned).
    # Small shapes: seq=16, batch=2, input_size=64.
    T, B, I, H, E = 16, 2, 64, 128, 128

    key = jax.random.PRNGKey(0)
    k_x, k_p = jax.random.split(key)
    x = jax.random.normal(k_x, (T, B, I), dtype=jnp.float32)
    # initHidden(): zeros for both h and c.
    h0 = jnp.zeros((2, B, H), dtype=jnp.float32)
    c0 = jnp.zeros((2, B, H), dtype=jnp.float32)

    params = init_params(k_p, I, H, E)

    out_emb, (h_n, c_n) = characterwise_rnn_forward(x, (h0, c0), params)
    jax.block_until_ready(out_emb)
    jax.block_until_ready(h_n)
    jax.block_until_ready(c_n)

    # Correctness check against pure-JAX reference.
    ref_emb, (ref_h, ref_c) = reference_forward(x, (h0, c0), params)
    assert jnp.allclose(out_emb, ref_emb, atol=1e-4, rtol=1e-4)
    assert jnp.allclose(h_n, ref_h, atol=1e-4, rtol=1e-4)
    assert jnp.allclose(c_n, ref_c, atol=1e-4, rtol=1e-4)

    print("KERNEL_OK")
</pallas_src>

<mosaic_0001>
module attributes {stable_mosaic.version = 11 : i64} {
  func.func @char_rnn_kernel(%arg0: i32, %arg1: memref<8x8x64xf32, #tpu.memory_space<vmem>>, %arg2: memref<2x8x128xf32, #tpu.memory_space<vmem>>, %arg3: memref<2x8x128xf32, #tpu.memory_space<vmem>>, %arg4: memref<64x512xf32, #tpu.memory_space<vmem>>, %arg5: memref<128x512xf32, #tpu.memory_space<vmem>>, %arg6: memref<1x512xf32, #tpu.memory_space<vmem>>, %arg7: memref<256x512xf32, #tpu.memory_space<vmem>>, %arg8: memref<1x512xf32, #tpu.memory_space<vmem>>, %arg9: memref<128x128xf32, #tpu.memory_space<vmem>>, %arg10: memref<1x128xf32, #tpu.memory_space<vmem>>, %arg11: memref<8x8x128xf32, #tpu.memory_space<vmem>>, %arg12: memref<2x8x128xf32, #tpu.memory_space<vmem>>, %arg13: memref<2x8x128xf32, #tpu.memory_space<vmem>>, %arg14: memref<8x8x512xf32, #tpu.memory_space<vmem>>, %arg15: memref<8x8x128xf32, #tpu.memory_space<vmem>>, %arg16: memref<4x8x128xf32, #tpu.memory_space<vmem>>) attributes {dimension_semantics = [#tpu.dimension_semantics<arbitrary>], iteration_bounds = array<i64: 2>, scalar_prefetch = 0 : i64, scratch_operands = 3 : i64, tpu.core_type = #tpu.core_type<tc>, window_params = [{transform_indices = @transform_0, window_bounds = array<i64: 8, 8, 64>}, {pipeline_mode = #tpu.pipeline_mode<synchronous>, transform_indices = @transform_1, window_bounds = array<i64: 2, 8, 128>}, {pipeline_mode = #tpu.pipeline_mode<synchronous>, transform_indices = @transform_2, window_bounds = array<i64: 2, 8, 128>}, {pipeline_mode = #tpu.pipeline_mode<synchronous>, transform_indices = @transform_3, window_bounds = array<i64: 64, 512>}, {pipeline_mode = #tpu.pipeline_mode<synchronous>, transform_indices = @transform_4, window_bounds = array<i64: 128, 512>}, {pipeline_mode = #tpu.pipeline_mode<synchronous>, transform_indices = @transform_5, window_bounds = array<i64: 1, 512>}, {pipeline_mode = #tpu.pipeline_mode<synchronous>, transform_indices = @transform_6, window_bounds = array<i64: 256, 512>}, {pipeline_mode = #tpu.pipeline_mode<synchronous>, transform_indices = @transform_7, window_bounds = array<i64: 1, 512>}, {pipeline_mode = #tpu.pipeline_mode<synchronous>, transform_indices = @transform_8, window_bounds = array<i64: 128, 128>}, {pipeline_mode = #tpu.pipeline_mode<synchronous>, transform_indices = @transform_9, window_bounds = array<i64: 1, 128>}, {transform_indices = @transform_10, window_bounds = array<i64: 8, 8, 128>}, {pipeline_mode = #tpu.pipeline_mode<synchronous>, transform_indices = @transform_11, window_bounds = array<i64: 2, 8, 128>}, {pipeline_mode = #tpu.pipeline_mode<synchronous>, transform_indices = @transform_12, window_bounds = array<i64: 2, 8, 128>}]} {
    %c0_i32 = arith.constant 0 : i32
    %0 = arith.cmpi eq, %arg0, %c0_i32 : i32
    %1 = arith.extui %0 : i1 to i32
    %c0_i32_0 = arith.constant 0 : i32
    %2 = arith.cmpi ne, %1, %c0_i32_0 : i32
    scf.if %2 {
      %c0_147 = arith.constant 0 : index
      %c0_148 = arith.constant 0 : index
      %c0_149 = arith.constant 0 : index
      %545 = vector.load %arg2[%c0_147, %c0_148, %c0_149] : memref<2x8x128xf32, #tpu.memory_space<vmem>>, vector<1x8x128xf32>
      %546 = vector.shape_cast %545 : vector<1x8x128xf32> to vector<8x128xf32>
      %c0_150 = arith.constant 0 : index
      %c0_151 = arith.constant 0 : index
      %c0_152 = arith.constant 0 : index
      %547 = vector.load %arg16[%c0_150, %c0_151, %c0_152] : memref<4x8x128xf32, #tpu.memory_space<vmem>>, vector<1x8x128xf32>
      %548 = vector.shape_cast %547 : vector<1x8x128xf32> to vector<8x128xf32>
      %549 = vector.shape_cast %546 : vector<8x128xf32> to vector<1x8x128xf32>
      tpu.vector_store %arg16[%c0_150, %c0_151, %c0_152], %549 {strides = array<i32>} : memref<4x8x128xf32, #tpu.memory_space<vmem>>, vector<1x8x128xf32>,
      %c0_153 = arith.constant 0 : index
      %c0_154 = arith.constant 0 : index
      %c0_155 = arith.constant 0 : index
      %550 = vector.load %arg3[%c0_153, %c0_154, %c0_155] : memref<2x8x128xf32, #tpu.memory_space<vmem>>, vector<1x8x128xf32>
      %551 = vector.shape_cast %550 : vector<1x8x128xf32> to vector<8x128xf32>
      %c1_156 = arith.constant 1 : index
      %c0_157 = arith.constant 0 : index
      %c0_158 = arith.constant 0 : index
      %552 = vector.load %arg16[%c1_156, %c0_157, %c0_158] : memref<4x8x128xf32, #tpu.memory_space<vmem>>, vector<1x8x128xf32>
      %553 = vector.shape_cast %552 : vector<1x8x128xf32> to vector<8x128xf32>
      %554 = vector.shape_cast %551 : vector<8x128xf32> to vector<1x8x128xf32>
      tpu.vector_store %arg16[%c1_156, %c0_157, %c0_158], %554 {strides = array<i32>} : memref<4x8x128xf32, #tpu.memory_space<vmem>>, vector<1x8x128xf32>,
      %c1_159 = arith.constant 1 : index
      %c0_160 = arith.constant 0 : index
      %c0_161 = arith.constant 0 : index
      %555 = vector.load %arg2[%c1_159, %c0_160, %c0_161] : memref<2x8x128xf32, #tpu.memory_space<vmem>>, vector<1x8x128xf32>
      %556 = vector.shape_cast %555 : vector<1x8x128xf32> to vector<8x128xf32>
      %c2_162 = arith.constant 2 : index
      %c0_163 = arith.constant 0 : index
      %c0_164 = arith.constant 0 : index
      %557 = vector.load %arg16[%c2_162, %c0_163, %c0_164] : memref<4x8x128xf32, #tpu.memory_space<vmem>>, vector<1x8x128xf32>
      %558 = vector.shape_cast %557 : vector<1x8x128xf32> to vector<8x128xf32>
      %559 = vector.shape_cast %556 : vector<8x128xf32> to vector<1x8x128xf32>
      tpu.vector_store %arg16[%c2_162, %c0_163, %c0_164], %559 {strides = array<i32>} : memref<4x8x128xf32, #tpu.memory_space<vmem>>, vector<1x8x128xf32>,
      %c1_165 = arith.constant 1 : index
      %c0_166 = arith.constant 0 : index
      %c0_167 = arith.constant 0 : index
      %560 = vector.load %arg3[%c1_165, %c0_166, %c0_167] : memref<2x8x128xf32, #tpu.memory_space<vmem>>, vector<1x8x128xf32>
      %561 = vector.shape_cast %560 : vector<1x8x128xf32> to vector<8x128xf32>
      %c3_168 = arith.constant 3 : index
      %c0_169 = arith.constant 0 : index
      %c0_170 = arith.constant 0 : index
      %562 = vector.load %arg16[%c3_168, %c0_169, %c0_170] : memref<4x8x128xf32, #tpu.memory_space<vmem>>, vector<1x8x128xf32>
      %563 = vector.shape_cast %562 : vector<1x8x128xf32> to vector<8x128xf32>
      %564 = vector.shape_cast %561 : vector<8x128xf32> to vector<1x8x128xf32>
      tpu.vector_store %arg16[%c3_168, %c0_169, %c0_170], %564 {strides = array<i32>} : memref<4x8x128xf32, #tpu.memory_space<vmem>>, vector<1x8x128xf32>,
    } else {
    }
    %c0 = arith.constant 0 : index
    %c0_1 = arith.constant 0 : index
    %3 = vector.load %arg5[%c0, %c0_1] : memref<128x512xf32, #tpu.memory_space<vmem>>, vector<128x512xf32>
    %c0_2 = arith.constant 0 : index
    %c0_3 = arith.constant 0 : index
    %4 = vector.load %arg7[%c0_2, %c0_3] : memref<256x512xf32, #tpu.memory_space<vmem>>, vector<256x512xf32>
    %c0_4 = arith.constant 0 : index
    %c0_5 = arith.constant 0 : index
    %5 = vector.load %arg8[%c0_4, %c0_5] : memref<1x512xf32, #tpu.memory_space<vmem>>, vector<1x512xf32>
    %6 = vector.shape_cast %5 : vector<1x512xf32> to vector<1x512xf32>
    %7 = vector.broadcast %6 : vector<1x512xf32> to vector<8x512xf32>
    %c0_6 = arith.constant 0 : index
    %c0_7 = arith.constant 0 : index
    %c0_8 = arith.constant 0 : index
    %8 = vector.load %arg1[%c0_6, %c0_7, %c0_8] : memref<8x8x64xf32, #tpu.memory_space<vmem>>, vector<8x8x64xf32>
    %9 = vector.shape_cast %8 : vector<8x8x64xf32> to vector<64x64xf32>
    %c0_9 = arith.constant 0 : index
    %c0_10 = arith.constant 0 : index
    %10 = vector.load %arg4[%c0_9, %c0_10] : memref<64x512xf32, #tpu.memory_space<vmem>>, vector<64x512xf32>
    %cst = arith.constant dense<0.000000e+00> : vector<64x512xf32>
    %11 = tpu.matmul %9, %10, %cst {dimension_numbers = #tpu.dot_dimension_numbers<[1], [0], [0], [1], [0, 0, 1, 1], [], []>} : vector<64x64xf32>, vector<64x512xf32>, vector<64x512xf32> -> vector<64x512xf32>
    %c0_11 = arith.constant 0 : index
    %c0_12 = arith.constant 0 : index
    %12 = vector.load %arg6[%c0_11, %c0_12] : memref<1x512xf32, #tpu.memory_space<vmem>>, vector<1x512xf32>
    %13 = vector.broadcast %12 : vector<1x512xf32> to vector<64x512xf32>
    %14 = arith.addf %11, %13 : vector<64x512xf32>
    %15 = vector.shape_cast %14 : vector<64x512xf32> to vector<8x8x512xf32>
    %c0_13 = arith.constant 0 : index
    %c0_14 = arith.constant 0 : index
    %c0_15 = arith.constant 0 : index
    %16 = vector.load %arg14[%c0_13, %c0_14, %c0_15] : memref<8x8x512xf32, #tpu.memory_space<vmem>>, vector<8x8x512xf32>
    tpu.vector_store %arg14[%c0_13, %c0_14, %c0_15], %15 {strides = array<i32>} : memref<8x8x512xf32, #tpu.memory_space<vmem>>, vector<8x8x512xf32>,
    %c0_16 = arith.constant 0 : index
    %c0_17 = arith.constant 0 : index
    %c0_18 = arith.constant 0 : index
    %17 = vector.load %arg16[%c0_16, %c0_17, %c0_18] : memref<4x8x128xf32, #tpu.memory_space<vmem>>, vector<1x8x128xf32>
    %18 = vector.shape_cast %17 : vector<1x8x128xf32> to vector<8x128xf32>
    %c1 = arith.constant 1 : index
    %c0_19 = arith.constant 0 : index
    %c0_20 = arith.constant 0 : index
    %19 = vector.load %arg16[%c1, %c0_19, %c0_20] : memref<4x8x128xf32, #tpu.memory_space<vmem>>, vector<1x8x128xf32>
    %20 = vector.shape_cast %19 : vector<1x8x128xf32> to vector<8x128xf32>
    %c2 = arith.constant 2 : index
    %c0_21 = arith.constant 0 : index
    %c0_22 = arith.constant 0 : index
    %21 = vector.load %arg16[%c2, %c0_21, %c0_22] : memref<4x8x128xf32, #tpu.memory_space<vmem>>, vector<1x8x128xf32>
    %22 = vector.shape_cast %21 : vector<1x8x128xf32> to vector<8x128xf32>
    %c3 = arith.constant 3 : index
    %c0_23 = arith.constant 0 : index
    %c0_24 = arith.constant 0 : index
    %23 = vector.load %arg16[%c3, %c0_23, %c0_24] : memref<4x8x128xf32, #tpu.memory_space<vmem>>, vector<1x8x128xf32>
    %24 = vector.shape_cast %23 : vector<1x8x128xf32> to vector<8x128xf32>
    %c0_i32_25 = arith.constant 0 : i32
    %25 = arith.index_cast %c0_i32_25 : i32 to index
    %c0_26 = arith.constant 0 : index
    %c0_27 = arith.constant 0 : index
    %26 = vector.load %arg14[%25, %c0_26, %c0_27] : memref<8x8x512xf32, #tpu.memory_space<vmem>>, vector<1x8x512xf32>
    %27 = vector.shape_cast %26 : vector<1x8x512xf32> to vector<8x512xf32>
    %cst_28 = arith.constant dense<0.000000e+00> : vector<8x512xf32>
    %28 = tpu.matmul %18, %3, %cst_28 {dimension_numbers = #tpu.dot_dimension_numbers<[1], [0], [0], [1], [0, 0, 1, 1], [], []>} : vector<8x128xf32>, vector<128x512xf32>, vector<8x512xf32> -> vector<8x512xf32>
    %29 = arith.addf %27, %28 : vector<8x512xf32>
    %30 = vector.extract_strided_slice %29 {offsets = [0, 0], sizes = [8, 128], strides = [1, 1]} : vector<8x512xf32> to vector<8x128xf32>
    %31 = arith.negf %30 : vector<8x128xf32>
    %32 = math.exp %31 : vector<8x128xf32>
    %cst_29 = arith.constant 1.000000e+00 : f32
    %33 = vector.broadcast %cst_29 : f32 to vector<8x128xf32>
    %34 = arith.addf %33, %32 : vector<8x128xf32>
    %35 = arith.divf %33, %34 : vector<8x128xf32>
    %36 = vector.extract_strided_slice %29 {offsets = [0, 128], sizes = [8, 128], strides = [1, 1]} : vector<8x512xf32> to vector<8x128xf32>
    %37 = arith.negf %36 : vector<8x128xf32>
    %38 = math.exp %37 : vector<8x128xf32>
    %cst_30 = arith.constant 1.000000e+00 : f32
    %39 = vector.broadcast %cst_30 : f32 to vector<8x128xf32>
    %40 = arith.addf %39, %38 : vector<8x128xf32>
    %41 = arith.divf %39, %40 : vector<8x128xf32>
    %42 = vector.extract_strided_slice %29 {offsets = [0, 256], sizes = [8, 128], strides = [1, 1]} : vector<8x512xf32> to vector<8x128xf32>
    %43 = math.tanh %42 : vector<8x128xf32>
    %44 = vector.extract_strided_slice %29 {offsets = [0, 384], sizes = [8, 128], strides = [1, 1]} : vector<8x512xf32> to vector<8x128xf32>
    %45 = arith.negf %44 : vector<8x128xf32>
    %46 = math.exp %45 : vector<8x128xf32>
    %cst_31 = arith.constant 1.000000e+00 : f32
    %47 = vector.broadcast %cst_31 : f32 to vector<8x128xf32>
    %48 = arith.addf %47, %46 : vector<8x128xf32>
    %49 = arith.divf %47, %48 : vector<8x128xf32>
    %50 = arith.mulf %41, %20 : vector<8x128xf32>
    %51 = arith.mulf %35, %43 : vector<8x128xf32>
    %52 = arith.addf %50, %51 : vector<8x128xf32>
    %53 = math.tanh %52 : vector<8x128xf32>
    %54 = arith.mulf %49, %53 : vector<8x128xf32>
    %55 = tpu.concatenate %54, %22 in 1 : vector<8x128xf32>, vector<8x128xf32> -> vector<8x256xf32>
    %cst_32 = arith.constant dense<0.000000e+00> : vector<8x512xf32>
    %56 = tpu.matmul %55, %4, %cst_32 {dimension_numbers = #tpu.dot_dimension_numbers<[1], [0], [0], [1], [0, 0, 1, 1], [], []>} : vector<8x256xf32>, vector<256x512xf32>, vector<8x512xf32> -> vector<8x512xf32>
    %57 = arith.addf %56, %7 : vector<8x512xf32>
    %58 = vector.extract_strided_slice %57 {offsets = [0, 0], sizes = [8, 128], strides = [1, 1]} : vector<8x512xf32> to vector<8x128xf32>
    %59 = arith.negf %58 : vector<8x128xf32>
    %60 = math.exp %59 : vector<8x128xf32>
    %cst_33 = arith.constant 1.000000e+00 : f32
    %61 = vector.broadcast %cst_33 : f32 to vector<8x128xf32>
    %62 = arith.addf %61, %60 : vector<8x128xf32>
    %63 = arith.divf %61, %62 : vector<8x128xf32>
    %64 = vector.extract_strided_slice %57 {offsets = [0, 128], sizes = [8, 128], strides = [1, 1]} : vector<8x512xf32> to vector<8x128xf32>
    %65 = arith.negf %64 : vector<8x128xf32>
    %66 = math.exp %65 : vector<8x128xf32>
    %cst_34 = arith.constant 1.000000e+00 : f32
    %67 = vector.broadcast %cst_34 : f32 to vector<8x128xf32>
    %68 = arith.addf %67, %66 : vector<8x128xf32>
    %69 = arith.divf %67, %68 : vector<8x128xf32>
    %70 = vector.extract_strided_slice %57 {offsets = [0, 256], sizes = [8, 128], strides = [1, 1]} : vector<8x512xf32> to vector<8x128xf32>
    %71 = math.tanh %70 : vector<8x128xf32>
    %72 = vector.extract_strided_slice %57 {offsets = [0, 384], sizes = [8, 128], strides = [1, 1]} : vector<8x512xf32> to vector<8x128xf32>
    %73 = arith.negf %72 : vector<8x128xf32>
    %74 = math.exp %73 : vector<8x128xf32>
    %cst_35 = arith.constant 1.000000e+00 : f32
    %75 = vector.broadcast %cst_35 : f32 to vector<8x128xf32>
    %76 = arith.addf %75, %74 : vector<8x128xf32>
    %77 = arith.divf %75, %76 : vector<8x128xf32>
    %78 = arith.mulf %69, %24 : vector<8x128xf32>
    %79 = arith.mulf %63, %71 : vector<8x128xf32>
    %80 = arith.addf %78, %79 : vector<8x128xf32>
    %81 = math.tanh %80 : vector<8x128xf32>
    %82 = arith.mulf %77, %81 : vector<8x128xf32>
    %83 = arith.index_cast %c0_i32_25 : i32 to index
    %c0_36 = arith.constant 0 : index
    %c0_37 = arith.constant 0 : index
    %84 = vector.load %arg15[%83, %c0_36, %c0_37] : memref<8x8x128xf32, #tpu.memory_space<vmem>>, vector<1x8x128xf32>
    %85 = vector.shape_cast %84 : vector<1x8x128xf32> to vector<8x128xf32>
    %86 = vector.shape_cast %82 : vector<8x128xf32> to vector<1x8x128xf32>
    tpu.vector_store %arg15[%83, %c0_36, %c0_37], %86 {strides = array<i32>} : memref<8x8x128xf32, #tpu.memory_space<vmem>>, vector<1x8x128xf32>,
    %c1_i32 = arith.constant 1 : i32
    %87 = arith.index_cast %c1_i32 : i32 to index
    %c0_38 = arith.constant 0 : index
    %c0_39 = arith.constant 0 : index
    %88 = vector.load %arg14[%87, %c0_38, %c0_39] : memref<8x8x512xf32, #tpu.memory_space<vmem>>, vector<1x8x512xf32>
    %89 = vector.shape_cast %88 : vector<1x8x512xf32> to vector<8x512xf32>
    %cst_40 = arith.constant dense<0.000000e+00> : vector<8x512xf32>
    %90 = tpu.matmul %54, %3, %cst_40 {dimension_numbers = #tpu.dot_dimension_numbers<[1], [0], [0], [1], [0, 0, 1, 1], [], []>} : vector<8x128xf32>, vector<128x512xf32>, vector<8x512xf32> -> vector<8x512xf32>
    %91 = arith.addf %89, %90 : vector<8x512xf32>
    %92 = vector.extract_strided_slice %91 {offsets = [0, 0], sizes = [8, 128], strides = [1, 1]} : vector<8x512xf32> to vector<8x128xf32>
    %93 = arith.negf %92 : vector<8x128xf32>
    %94 = math.exp %93 : vector<8x128xf32>
    %cst_41 = arith.constant 1.000000e+00 : f32
    %95 = vector.broadcast %cst_41 : f32 to vector<8x128xf32>
    %96 = arith.addf %95, %94 : vector<8x128xf32>
    %97 = arith.divf %95, %96 : vector<8x128xf32>
    %98 = vector.extract_strided_slice %91 {offsets = [0, 128], sizes = [8, 128], strides = [1, 1]} : vector<8x512xf32> to vector<8x128xf32>
    %99 = arith.negf %98 : vector<8x128xf32>
    %100 = math.exp %99 : vector<8x128xf32>
    %cst_42 = arith.constant 1.000000e+00 : f32
    %101 = vector.broadcast %cst_42 : f32 to vector<8x128xf32>
    %102 = arith.addf %101, %100 : vector<8x128xf32>
    %103 = arith.divf %101, %102 : vector<8x128xf32>
    %104 = vector.extract_strided_slice %91 {offsets = [0, 256], sizes = [8, 128], strides = [1, 1]} : vector<8x512xf32> to vector<8x128xf32>
    %105 = math.tanh %104 : vector<8x128xf32>
    %106 = vector.extract_strided_slice %91 {offsets = [0, 384], sizes = [8, 128], strides = [1, 1]} : vector<8x512xf32> to vector<8x128xf32>
    %107 = arith.negf %106 : vector<8x128xf32>
    %108 = math.exp %107 : vector<8x128xf32>
    %cst_43 = arith.constant 1.000000e+00 : f32
    %109 = vector.broadcast %cst_43 : f32 to vector<8x128xf32>
    %110 = arith.addf %109, %108 : vector<8x128xf32>
    %111 = arith.divf %109, %110 : vector<8x128xf32>
    %112 = arith.mulf %103, %52 : vector<8x128xf32>
    %113 = arith.mulf %97, %105 : vector<8x128xf32>
    %114 = arith.addf %112, %113 : vector<8x128xf32>
    %115 = math.tanh %114 : vector<8x128xf32>
    %116 = arith.mulf %111, %115 : vector<8x128xf32>
    %117 = tpu.concatenate %116, %82 in 1 : vector<8x128xf32>, vector<8x128xf32> -> vector<8x256xf32>
    %cst_44 = arith.constant dense<0.000000e+00> : vector<8x512xf32>
    %118 = tpu.matmul %117, %4, %cst_44 {dimension_numbers = #tpu.dot_dimension_numbers<[1], [0], [0], [1], [0, 0, 1, 1], [], []>} : vector<8x256xf32>, vector<256x512xf32>, vector<8x512xf32> -> vector<8x512xf32>
    %119 = arith.addf %118, %7 : vector<8x512xf32>
    %120 = vector.extract_strided_slice %119 {offsets = [0, 0], sizes = [8, 128], strides = [1, 1]} : vector<8x512xf32> to vector<8x128xf32>
    %121 = arith.negf %120 : vector<8x128xf32>
    %122 = math.exp %121 : vector<8x128xf32>
    %cst_45 = arith.constant 1.000000e+00 : f32
    %123 = vector.broadcast %cst_45 : f32 to vector<8x128xf32>
    %124 = arith.addf %123, %122 : vector<8x128xf32>
    %125 = arith.divf %123, %124 : vector<8x128xf32>
    %126 = vector.extract_strided_slice %119 {offsets = [0, 128], sizes = [8, 128], strides = [1, 1]} : vector<8x512xf32> to vector<8x128xf32>
    %127 = arith.negf %126 : vector<8x128xf32>
    %128 = math.exp %127 : vector<8x128xf32>
    %cst_46 = arith.constant 1.000000e+00 : f32
    %129 = vector.broadcast %cst_46 : f32 to vector<8x128xf32>
    %130 = arith.addf %129, %128 : vector<8x128xf32>
    %131 = arith.divf %129, %130 : vector<8x128xf32>
    %132 = vector.extract_strided_slice %119 {offsets = [0, 256], sizes = [8, 128], strides = [1, 1]} : vector<8x512xf32> to vector<8x128xf32>
    %133 = math.tanh %132 : vector<8x128xf32>
    %134 = vector.extract_strided_slice %119 {offsets = [0, 384], sizes = [8, 128], strides = [1, 1]} : vector<8x512xf32> to vector<8x128xf32>
    %135 = arith.negf %134 : vector<8x128xf32>
    %136 = math.exp %135 : vector<8x128xf32>
    %cst_47 = arith.constant 1.000000e+00 : f32
    %137 = vector.broadcast %cst_47 : f32 to vector<8x128xf32>
    %138 = arith.addf %137, %136 : vector<8x128xf32>
    %139 = arith.divf %137, %138 : vector<8x128xf32>
    %140 = arith.mulf %131, %80 : vector<8x128xf32>
    %141 = arith.mulf %125, %133 : vector<8x128xf32>
    %142 = arith.addf %140, %141 : vector<8x128xf32>
    %143 = math.tanh %142 : vector<8x128xf32>
    %144 = arith.mulf %139, %143 : vector<8x128xf32>
    %145 = arith.index_cast %c1_i32 : i32 to index
    %c0_48 = arith.constant 0 : index
    %c0_49 = arith.constant 0 : index
    %146 = vector.load %arg15[%145, %c0_48, %c0_49] : memref<8x8x128xf32, #tpu.memory_space<vmem>>, vector<1x8x128xf32>
    %147 = vector.shape_cast %146 : vector<1x8x128xf32> to vector<8x128xf32>
    %148 = vector.shape_cast %144 : vector<8x128xf32> to vector<1x8x128xf32>
    tpu.vector_store %arg15[%145, %c0_48, %c0_49], %148 {strides = array<i32>} : memref<8x8x128xf32, #tpu.memory_space<vmem>>, vector<1x8x128xf32>,
    %c2_i32 = arith.constant 2 : i32
    %149 = arith.index_cast %c2_i32 : i32 to index
    %c0_50 = arith.constant 0 : index
    %c0_51 = arith.constant 0 : index
    %150 = vector.load %arg14[%149, %c0_50, %c0_51] : memref<8x8x512xf32, #tpu.memory_space<vmem>>, vector<1x8x512xf32>
    %151 = vector.shape_cast %150 : vector<1x8x512xf32> to vector<8x512xf32>
    %cst_52 = arith.constant dense<0.000000e+00> : vector<8x512xf32>
    %152 = tpu.matmul %116, %3, %cst_52 {dimension_numbers = #tpu.dot_dimension_numbers<[1], [0], [0], [1], [0, 0, 1, 1], [], []>} : vector<8x128xf32>, vector<128x512xf32>, vector<8x512xf32> -> vector<8x512xf32>
    %153 = arith.addf %151, %152 : vector<8x512xf32>
    %154 = vector.extract_strided_slice %153 {offsets = [0, 0], sizes = [8, 128], strides = [1, 1]} : vector<8x512xf32> to vector<8x128xf32>
    %155 = arith.negf %154 : vector<8x128xf32>
    %156 = math.exp %155 : vector<8x128xf32>
    %cst_53 = arith.constant 1.000000e+00 : f32
    %157 = vector.broadcast %cst_53 : f32 to vector<8x128xf32>
    %158 = arith.addf %157, %156 : vector<8x128xf32>
    %159 = arith.divf %157, %158 : vector<8x128xf32>
    %160 = vector.extract_strided_slice %153 {offsets = [0, 128], sizes = [8, 128], strides = [1, 1]} : vector<8x512xf32> to vector<8x128xf32>
    %161 = arith.negf %160 : vector<8x128xf32>
    %162 = math.exp %161 : vector<8x128xf32>
    %cst_54 = arith.constant 1.000000e+00 : f32
    %163 = vector.broadcast %cst_54 : f32 to vector<8x128xf32>
    %164 = arith.addf %163, %162 : vector<8x128xf32>
    %165 = arith.divf %163, %164 : vector<8x128xf32>
    %166 = vector.extract_strided_slice %153 {offsets = [0, 256], sizes = [8, 128], strides = [1, 1]} : vector<8x512xf32> to vector<8x128xf32>
    %167 = math.tanh %166 : vector<8x128xf32>
    %168 = vector.extract_strided_slice %153 {offsets = [0, 384], sizes = [8, 128], strides = [1, 1]} : vector<8x512xf32> to vector<8x128xf32>
    %169 = arith.negf %168 : vector<8x128xf32>
    %170 = math.exp %169 : vector<8x128xf32>
    %cst_55 = arith.constant 1.000000e+00 : f32
    %171 = vector.broadcast %cst_55 : f32 to vector<8x128xf32>
    %172 = arith.addf %171, %170 : vector<8x128xf32>
    %173 = arith.divf %171, %172 : vector<8x128xf32>
    %174 = arith.mulf %165, %114 : vector<8x128xf32>
    %175 = arith.mulf %159, %167 : vector<8x128xf32>
    %176 = arith.addf %174, %175 : vector<8x128xf32>
    %177 = math.tanh %176 : vector<8x128xf32>
    %178 = arith.mulf %173, %177 : vector<8x128xf32>
    %179 = tpu.concatenate %178, %144 in 1 : vector<8x128xf32>, vector<8x128xf32> -> vector<8x256xf32>
    %cst_56 = arith.constant dense<0.000000e+00> : vector<8x512xf32>
    %180 = tpu.matmul %179, %4, %cst_56 {dimension_numbers = #tpu.dot_dimension_numbers<[1], [0], [0], [1], [0, 0, 1, 1], [], []>} : vector<8x256xf32>, vector<256x512xf32>, vector<8x512xf32> -> vector<8x512xf32>
    %181 = arith.addf %180, %7 : vector<8x512xf32>
    %182 = vector.extract_strided_slice %181 {offsets = [0, 0], sizes = [8, 128], strides = [1, 1]} : vector<8x512xf32> to vector<8x128xf32>
    %183 = arith.negf %182 : vector<8x128xf32>
    %184 = math.exp %183 : vector<8x128xf32>
    %cst_57 = arith.constant 1.000000e+00 : f32
    %185 = vector.broadcast %cst_57 : f32 to vector<8x128xf32>
    %186 = arith.addf %185, %184 : vector<8x128xf32>
    %187 = arith.divf %185, %186 : vector<8x128xf32>
    %188 = vector.extract_strided_slice %181 {offsets = [0, 128], sizes = [8, 128], strides = [1, 1]} : vector<8x512xf32> to vector<8x128xf32>
    %189 = arith.negf %188 : vector<8x128xf32>
    %190 = math.exp %189 : vector<8x128xf32>
    %cst_58 = arith.constant 1.000000e+00 : f32
    %191 = vector.broadcast %cst_58 : f32 to vector<8x128xf32>
    %192 = arith.addf %191, %190 : vector<8x128xf32>
    %193 = arith.divf %191, %192 : vector<8x128xf32>
    %194 = vector.extract_strided_slice %181 {offsets = [0, 256], sizes = [8, 128], strides = [1, 1]} : vector<8x512xf32> to vector<8x128xf32>
    %195 = math.tanh %194 : vector<8x128xf32>
    %196 = vector.extract_strided_slice %181 {offsets = [0, 384], sizes = [8, 128], strides = [1, 1]} : vector<8x512xf32> to vector<8x128xf32>
    %197 = arith.negf %196 : vector<8x128xf32>
    %198 = math.exp %197 : vector<8x128xf32>
    %cst_59 = arith.constant 1.000000e+00 : f32
    %199 = vector.broadcast %cst_59 : f32 to vector<8x128xf32>
    %200 = arith.addf %199, %198 : vector<8x128xf32>
    %201 = arith.divf %199, %200 : vector<8x128xf32>
    %202 = arith.mulf %193, %142 : vector<8x128xf32>
    %203 = arith.mulf %187, %195 : vector<8x128xf32>
    %204 = arith.addf %202, %203 : vector<8x128xf32>
    %205 = math.tanh %204 : vector<8x128xf32>
    %206 = arith.mulf %201, %205 : vector<8x128xf32>
    %207 = arith.index_cast %c2_i32 : i32 to index
    %c0_60 = arith.constant 0 : index
    %c0_61 = arith.constant 0 : index
    %208 = vector.load %arg15[%207, %c0_60, %c0_61] : memref<8x8x128xf32, #tpu.memory_space<vmem>>, vector<1x8x128xf32>
    %209 = vector.shape_cast %208 : vector<1x8x128xf32> to vector<8x128xf32>
    %210 = vector.shape_cast %206 : vector<8x128xf32> to vector<1x8x128xf32>
    tpu.vector_store %arg15[%207, %c0_60, %c0_61], %210 {strides = array<i32>} : memref<8x8x128xf32, #tpu.memory_space<vmem>>, vector<1x8x128xf32>,
    %c3_i32 = arith.constant 3 : i32
    %211 = arith.index_cast %c3_i32 : i32 to index
    %c0_62 = arith.constant 0 : index
    %c0_63 = arith.constant 0 : index
    %212 = vector.load %arg14[%211, %c0_62, %c0_63] : memref<8x8x512xf32, #tpu.memory_space<vmem>>, vector<1x8x512xf32>
    %213 = vector.shape_cast %212 : vector<1x8x512xf32> to vector<8x512xf32>
    %cst_64 = arith.constant dense<0.000000e+00> : vector<8x512xf32>
    %214 = tpu.matmul %178, %3, %cst_64 {dimension_numbers = #tpu.dot_dimension_numbers<[1], [0], [0], [1], [0, 0, 1, 1], [], []>} : vector<8x128xf32>, vector<128x512xf32>, vector<8x512xf32> -> vector<8x512xf32>
    %215 = arith.addf %213, %214 : vector<8x512xf32>
    %216 = vector.extract_strided_slice %215 {offsets = [0, 0], sizes = [8, 128], strides = [1, 1]} : vector<8x512xf32> to vector<8x128xf32>
    %217 = arith.negf %216 : vector<8x128xf32>
    %218 = math.exp %217 : vector<8x128xf32>
    %cst_65 = arith.constant 1.000000e+00 : f32
    %219 = vector.broadcast %cst_65 : f32 to vector<8x128xf32>
    %220 = arith.addf %219, %218 : vector<8x128xf32>
    %221 = arith.divf %219, %220 : vector<8x128xf32>
    %222 = vector.extract_strided_slice %215 {offsets = [0, 128], sizes = [8, 128], strides = [1, 1]} : vector<8x512xf32> to vector<8x128xf32>
    %223 = arith.negf %222 : vector<8x128xf32>
    %224 = math.exp %223 : vector<8x128xf32>
    %cst_66 = arith.constant 1.000000e+00 : f32
    %225 = vector.broadcast %cst_66 : f32 to vector<8x128xf32>
    %226 = arith.addf %225, %224 : vector<8x128xf32>
    %227 = arith.divf %225, %226 : vector<8x128xf32>
    %228 = vector.extract_strided_slice %215 {offsets = [0, 256], sizes = [8, 128], strides = [1, 1]} : vector<8x512xf32> to vector<8x128xf32>
    %229 = math.tanh %228 : vector<8x128xf32>
    %230 = vector.extract_strided_slice %215 {offsets = [0, 384], sizes = [8, 128], strides = [1, 1]} : vector<8x512xf32> to vector<8x128xf32>
    %231 = arith.negf %230 : vector<8x128xf32>
    %232 = math.exp %231 : vector<8x128xf32>
    %cst_67 = arith.constant 1.000000e+00 : f32
    %233 = vector.broadcast %cst_67 : f32 to vector<8x128xf32>
    %234 = arith.addf %233, %232 : vector<8x128xf32>
    %235 = arith.divf %233, %234 : vector<8x128xf32>
    %236 = arith.mulf %227, %176 : vector<8x128xf32>
    %237 = arith.mulf %221, %229 : vector<8x128xf32>
    %238 = arith.addf %236, %237 : vector<8x128xf32>
    %239 = math.tanh %238 : vector<8x128xf32>
    %240 = arith.mulf %235, %239 : vector<8x128xf32>
    %241 = tpu.concatenate %240, %206 in 1 : vector<8x128xf32>, vector<8x128xf32> -> vector<8x256xf32>
    %cst_68 = arith.constant dense<0.000000e+00> : vector<8x512xf32>
    %242 = tpu.matmul %241, %4, %cst_68 {dimension_numbers = #tpu.dot_dimension_numbers<[1], [0], [0], [1], [0, 0, 1, 1], [], []>} : vector<8x256xf32>, vector<256x512xf32>, vector<8x512xf32> -> vector<8x512xf32>
    %243 = arith.addf %242, %7 : vector<8x512xf32>
    %244 = vector.extract_strided_slice %243 {offsets = [0, 0], sizes = [8, 128], strides = [1, 1]} : vector<8x512xf32> to vector<8x128xf32>
    %245 = arith.negf %244 : vector<8x128xf32>
    %246 = math.exp %245 : vector<8x128xf32>
    %cst_69 = arith.constant 1.000000e+00 : f32
    %247 = vector.broadcast %cst_69 : f32 to vector<8x128xf32>
    %248 = arith.addf %247, %246 : vector<8x128xf32>
    %249 = arith.divf %247, %248 : vector<8x128xf32>
    %250 = vector.extract_strided_slice %243 {offsets = [0, 128], sizes = [8, 128], strides = [1, 1]} : vector<8x512xf32> to vector<8x128xf32>
    %251 = arith.negf %250 : vector<8x128xf32>
    %252 = math.exp %251 : vector<8x128xf32>
    %cst_70 = arith.constant 1.000000e+00 : f32
    %253 = vector.broadcast %cst_70 : f32 to vector<8x128xf32>
    %254 = arith.addf %253, %252 : vector<8x128xf32>
    %255 = arith.divf %253, %254 : vector<8x128xf32>
    %256 = vector.extract_strided_slice %243 {offsets = [0, 256], sizes = [8, 128], strides = [1, 1]} : vector<8x512xf32> to vector<8x128xf32>
    %257 = math.tanh %256 : vector<8x128xf32>
    %258 = vector.extract_strided_slice %243 {offsets = [0, 384], sizes = [8, 128], strides = [1, 1]} : vector<8x512xf32> to vector<8x128xf32>
    %259 = arith.negf %258 : vector<8x128xf32>
    %260 = math.exp %259 : vector<8x128xf32>
    %cst_71 = arith.constant 1.000000e+00 : f32
    %261 = vector.broadcast %cst_71 : f32 to vector<8x128xf32>
    %262 = arith.addf %261, %260 : vector<8x128xf32>
    %263 = arith.divf %261, %262 : vector<8x128xf32>
    %264 = arith.mulf %255, %204 : vector<8x128xf32>
    %265 = arith.mulf %249, %257 : vector<8x128xf32>
    %266 = arith.addf %264, %265 : vector<8x128xf32>
    %267 = math.tanh %266 : vector<8x128xf32>
    %268 = arith.mulf %263, %267 : vector<8x128xf32>
    %269 = arith.index_cast %c3_i32 : i32 to index
    %c0_72 = arith.constant 0 : index
    %c0_73 = arith.constant 0 : index
    %270 = vector.load %arg15[%269, %c0_72, %c0_73] : memref<8x8x128xf32, #tpu.memory_space<vmem>>, vector<1x8x128xf32>
    %271 = vector.shape_cast %270 : vector<1x8x128xf32> to vector<8x128xf32>
    %272 = vector.shape_cast %268 : vector<8x128xf32> to vector<1x8x128xf32>
    tpu.vector_store %arg15[%269, %c0_72, %c0_73], %272 {strides = array<i32>} : memref<8x8x128xf32, #tpu.memory_space<vmem>>, vector<1x8x128xf32>,
    %c4_i32 = arith.constant 4 : i32
    %273 = arith.index_cast %c4_i32 : i32 to index
    %c0_74 = arith.constant 0 : index
    %c0_75 = arith.constant 0 : index
    %274 = vector.load %arg14[%273, %c0_74, %c0_75] : memref<8x8x512xf32, #tpu.memory_space<vmem>>, vector<1x8x512xf32>
    %275 = vector.shape_cast %274 : vector<1x8x512xf32> to vector<8x512xf32>
    %cst_76 = arith.constant dense<0.000000e+00> : vector<8x512xf32>
    %276 = tpu.matmul %240, %3, %cst_76 {dimension_numbers = #tpu.dot_dimension_numbers<[1], [0], [0], [1], [0, 0, 1, 1], [], []>} : vector<8x128xf32>, vector<128x512xf32>, vector<8x512xf32> -> vector<8x512xf32>
    %277 = arith.addf %275, %276 : vector<8x512xf32>
    %278 = vector.extract_strided_slice %277 {offsets = [0, 0], sizes = [8, 128], strides = [1, 1]} : vector<8x512xf32> to vector<8x128xf32>
    %279 = arith.negf %278 : vector<8x128xf32>
    %280 = math.exp %279 : vector<8x128xf32>
    %cst_77 = arith.constant 1.000000e+00 : f32
    %281 = vector.broadcast %cst_77 : f32 to vector<8x128xf32>
    %282 = arith.addf %281, %280 : vector<8x128xf32>
    %283 = arith.divf %281, %282 : vector<8x128xf32>
    %284 = vector.extract_strided_slice %277 {offsets = [0, 128], sizes = [8, 128], strides = [1, 1]} : vector<8x512xf32> to vector<8x128xf32>
    %285 = arith.negf %284 : vector<8x128xf32>
    %286 = math.exp %285 : vector<8x128xf32>
    %cst_78 = arith.constant 1.000000e+00 : f32
    %287 = vector.broadcast %cst_78 : f32 to vector<8x128xf32>
    %288 = arith.addf %287, %286 : vector<8x128xf32>
    %289 = arith.divf %287, %288 : vector<8x128xf32>
    %290 = vector.extract_strided_slice %277 {offsets = [0, 256], sizes = [8, 128], strides = [1, 1]} : vector<8x512xf32> to vector<8x128xf32>
    %291 = math.tanh %290 : vector<8x128xf32>
    %292 = vector.extract_strided_slice %277 {offsets = [0, 384], sizes = [8, 128], strides = [1, 1]} : vector<8x512xf32> to vector<8x128xf32>
    %293 = arith.negf %292 : vector<8x128xf32>
    %294 = math.exp %293 : vector<8x128xf32>
    %cst_79 = arith.constant 1.000000e+00 : f32
    %295 = vector.broadcast %cst_79 : f32 to vector<8x128xf32>
    %296 = arith.addf %295, %294 : vector<8x128xf32>
    %297 = arith.divf %295, %296 : vector<8x128xf32>
    %298 = arith.mulf %289, %238 : vector<8x128xf32>
    %299 = arith.mulf %283, %291 : vector<8x128xf32>
    %300 = arith.addf %298, %299 : vector<8x128xf32>
    %301 = math.tanh %300 : vector<8x128xf32>
    %302 = arith.mulf %297, %301 : vector<8x128xf32>
    %303 = tpu.concatenate %302, %268 in 1 : vector<8x128xf32>, vector<8x128xf32> -> vector<8x256xf32>
    %cst_80 = arith.constant dense<0.000000e+00> : vector<8x512xf32>
    %304 = tpu.matmul %303, %4, %cst_80 {dimension_numbers = #tpu.dot_dimension_numbers<[1], [0], [0], [1], [0, 0, 1, 1], [], []>} : vector<8x256xf32>, vector<256x512xf32>, vector<8x512xf32> -> vector<8x512xf32>
    %305 = arith.addf %304, %7 : vector<8x512xf32>
    %306 = vector.extract_strided_slice %305 {offsets = [0, 0], sizes = [8, 128], strides = [1, 1]} : vector<8x512xf32> to vector<8x128xf32>
    %307 = arith.negf %306 : vector<8x128xf32>
    %308 = math.exp %307 : vector<8x128xf32>
    %cst_81 = arith.constant 1.000000e+00 : f32
    %309 = vector.broadcast %cst_81 : f32 to vector<8x128xf32>
    %310 = arith.addf %309, %308 : vector<8x128xf32>
    %311 = arith.divf %309, %310 : vector<8x128xf32>
    %312 = vector.extract_strided_slice %305 {offsets = [0, 128], sizes = [8, 128], strides = [1, 1]} : vector<8x512xf32> to vector<8x128xf32>
    %313 = arith.negf %312 : vector<8x128xf32>
    %314 = math.exp %313 : vector<8x128xf32>
    %cst_82 = arith.constant 1.000000e+00 : f32
    %315 = vector.broadcast %cst_82 : f32 to vector<8x128xf32>
    %316 = arith.addf %315, %314 : vector<8x128xf32>
    %317 = arith.divf %315, %316 : vector<8x128xf32>
    %318 = vector.extract_strided_slice %305 {offsets = [0, 256], sizes = [8, 128], strides = [1, 1]} : vector<8x512xf32> to vector<8x128xf32>
    %319 = math.tanh %318 : vector<8x128xf32>
    %320 = vector.extract_strided_slice %305 {offsets = [0, 384], sizes = [8, 128], strides = [1, 1]} : vector<8x512xf32> to vector<8x128xf32>
    %321 = arith.negf %320 : vector<8x128xf32>
    %322 = math.exp %321 : vector<8x128xf32>
    %cst_83 = arith.constant 1.000000e+00 : f32
    %323 = vector.broadcast %cst_83 : f32 to vector<8x128xf32>
    %324 = arith.addf %323, %322 : vector<8x128xf32>
    %325 = arith.divf %323, %324 : vector<8x128xf32>
    %326 = arith.mulf %317, %266 : vector<8x128xf32>
    %327 = arith.mulf %311, %319 : vector<8x128xf32>
    %328 = arith.addf %326, %327 : vector<8x128xf32>
    %329 = math.tanh %328 : vector<8x128xf32>
    %330 = arith.mulf %325, %329 : vector<8x128xf32>
    %331 = arith.index_cast %c4_i32 : i32 to index
    %c0_84 = arith.constant 0 : index
    %c0_85 = arith.constant 0 : index
    %332 = vector.load %arg15[%331, %c0_84, %c0_85] : memref<8x8x128xf32, #tpu.memory_space<vmem>>, vector<1x8x128xf32>
    %333 = vector.shape_cast %332 : vector<1x8x128xf32> to vector<8x128xf32>
    %334 = vector.shape_cast %330 : vector<8x128xf32> to vector<1x8x128xf32>
    tpu.vector_store %arg15[%331, %c0_84, %c0_85], %334 {strides = array<i32>} : memref<8x8x128xf32, #tpu.memory_space<vmem>>, vector<1x8x128xf32>,
    %c5_i32 = arith.constant 5 : i32
    %335 = arith.index_cast %c5_i32 : i32 to index
    %c0_86 = arith.constant 0 : index
    %c0_87 = arith.constant 0 : index
    %336 = vector.load %arg14[%335, %c0_86, %c0_87] : memref<8x8x512xf32, #tpu.memory_space<vmem>>, vector<1x8x512xf32>
    %337 = vector.shape_cast %336 : vector<1x8x512xf32> to vector<8x512xf32>
    %cst_88 = arith.constant dense<0.000000e+00> : vector<8x512xf32>
    %338 = tpu.matmul %302, %3, %cst_88 {dimension_numbers = #tpu.dot_dimension_numbers<[1], [0], [0], [1], [0, 0, 1, 1], [], []>} : vector<8x128xf32>, vector<128x512xf32>, vector<8x512xf32> -> vector<8x512xf32>
    %339 = arith.addf %337, %338 : vector<8x512xf32>
    %340 = vector.extract_strided_slice %339 {offsets = [0, 0], sizes = [8, 128], strides = [1, 1]} : vector<8x512xf32> to vector<8x128xf32>
    %341 = arith.negf %340 : vector<8x128xf32>
    %342 = math.exp %341 : vector<8x128xf32>
    %cst_89 = arith.constant 1.000000e+00 : f32
    %343 = vector.broadcast %cst_89 : f32 to vector<8x128xf32>
    %344 = arith.addf %343, %342 : vector<8x128xf32>
    %345 = arith.divf %343, %344 : vector<8x128xf32>
    %346 = vector.extract_strided_slice %339 {offsets = [0, 128], sizes = [8, 128], strides = [1, 1]} : vector<8x512xf32> to vector<8x128xf32>
    %347 = arith.negf %346 : vector<8x128xf32>
    %348 = math.exp %347 : vector<8x128xf32>
    %cst_90 = arith.constant 1.000000e+00 : f32
    %349 = vector.broadcast %cst_90 : f32 to vector<8x128xf32>
    %350 = arith.addf %349, %348 : vector<8x128xf32>
    %351 = arith.divf %349, %350 : vector<8x128xf32>
    %352 = vector.extract_strided_slice %339 {offsets = [0, 256], sizes = [8, 128], strides = [1, 1]} : vector<8x512xf32> to vector<8x128xf32>
    %353 = math.tanh %352 : vector<8x128xf32>
    %354 = vector.extract_strided_slice %339 {offsets = [0, 384], sizes = [8, 128], strides = [1, 1]} : vector<8x512xf32> to vector<8x128xf32>
    %355 = arith.negf %354 : vector<8x128xf32>
    %356 = math.exp %355 : vector<8x128xf32>
    %cst_91 = arith.constant 1.000000e+00 : f32
    %357 = vector.broadcast %cst_91 : f32 to vector<8x128xf32>
    %358 = arith.addf %357, %356 : vector<8x128xf32>
    %359 = arith.divf %357, %358 : vector<8x128xf32>
    %360 = arith.mulf %351, %300 : vector<8x128xf32>
    %361 = arith.mulf %345, %353 : vector<8x128xf32>
    %362 = arith.addf %360, %361 : vector<8x128xf32>
    %363 = math.tanh %362 : vector<8x128xf32>
    %364 = arith.mulf %359, %363 : vector<8x128xf32>
    %365 = tpu.concatenate %364, %330 in 1 : vector<8x128xf32>, vector<8x128xf32> -> vector<8x256xf32>
    %cst_92 = arith.constant dense<0.000000e+00> : vector<8x512xf32>
    %366 = tpu.matmul %365, %4, %cst_92 {dimension_numbers = #tpu.dot_dimension_numbers<[1], [0], [0], [1], [0, 0, 1, 1], [], []>} : vector<8x256xf32>, vector<256x512xf32>, vector<8x512xf32> -> vector<8x512xf32>
    %367 = arith.addf %366, %7 : vector<8x512xf32>
    %368 = vector.extract_strided_slice %367 {offsets = [0, 0], sizes = [8, 128], strides = [1, 1]} : vector<8x512xf32> to vector<8x128xf32>
    %369 = arith.negf %368 : vector<8x128xf32>
    %370 = math.exp %369 : vector<8x128xf32>
    %cst_93 = arith.constant 1.000000e+00 : f32
    %371 = vector.broadcast %cst_93 : f32 to vector<8x128xf32>
    %372 = arith.addf %371, %370 : vector<8x128xf32>
    %373 = arith.divf %371, %372 : vector<8x128xf32>
    %374 = vector.extract_strided_slice %367 {offsets = [0, 128], sizes = [8, 128], strides = [1, 1]} : vector<8x512xf32> to vector<8x128xf32>
    %375 = arith.negf %374 : vector<8x128xf32>
    %376 = math.exp %375 : vector<8x128xf32>
    %cst_94 = arith.constant 1.000000e+00 : f32
    %377 = vector.broadcast %cst_94 : f32 to vector<8x128xf32>
    %378 = arith.addf %377, %376 : vector<8x128xf32>
    %379 = arith.divf %377, %378 : vector<8x128xf32>
    %380 = vector.extract_strided_slice %367 {offsets = [0, 256], sizes = [8, 128], strides = [1, 1]} : vector<8x512xf32> to vector<8x128xf32>
    %381 = math.tanh %380 : vector<8x128xf32>
    %382 = vector.extract_strided_slice %367 {offsets = [0, 384], sizes = [8, 128], strides = [1, 1]} : vector<8x512xf32> to vector<8x128xf32>
    %383 = arith.negf %382 : vector<8x128xf32>
    %384 = math.exp %383 : vector<8x128xf32>
    %cst_95 = arith.constant 1.000000e+00 : f32
    %385 = vector.broadcast %cst_95 : f32 to vector<8x128xf32>
    %386 = arith.addf %385, %384 : vector<8x128xf32>
    %387 = arith.divf %385, %386 : vector<8x128xf32>
    %388 = arith.mulf %379, %328 : vector<8x128xf32>
    %389 = arith.mulf %373, %381 : vector<8x128xf32>
    %390 = arith.addf %388, %389 : vector<8x128xf32>
    %391 = math.tanh %390 : vector<8x128xf32>
    %392 = arith.mulf %387, %391 : vector<8x128xf32>
    %393 = arith.index_cast %c5_i32 : i32 to index
    %c0_96 = arith.constant 0 : index
    %c0_97 = arith.constant 0 : index
    %394 = vector.load %arg15[%393, %c0_96, %c0_97] : memref<8x8x128xf32, #tpu.memory_space<vmem>>, vector<1x8x128xf32>
    %395 = vector.shape_cast %394 : vector<1x8x128xf32> to vector<8x128xf32>
    %396 = vector.shape_cast %392 : vector<8x128xf32> to vector<1x8x128xf32>
    tpu.vector_store %arg15[%393, %c0_96, %c0_97], %396 {strides = array<i32>} : memref<8x8x128xf32, #tpu.memory_space<vmem>>, vector<1x8x128xf32>,
    %c6_i32 = arith.constant 6 : i32
    %397 = arith.index_cast %c6_i32 : i32 to index
    %c0_98 = arith.constant 0 : index
    %c0_99 = arith.constant 0 : index
    %398 = vector.load %arg14[%397, %c0_98, %c0_99] : memref<8x8x512xf32, #tpu.memory_space<vmem>>, vector<1x8x512xf32>
    %399 = vector.shape_cast %398 : vector<1x8x512xf32> to vector<8x512xf32>
    %cst_100 = arith.constant dense<0.000000e+00> : vector<8x512xf32>
    %400 = tpu.matmul %364, %3, %cst_100 {dimension_numbers = #tpu.dot_dimension_numbers<[1], [0], [0], [1], [0, 0, 1, 1], [], []>} : vector<8x128xf32>, vector<128x512xf32>, vector<8x512xf32> -> vector<8x512xf32>
    %401 = arith.addf %399, %400 : vector<8x512xf32>
    %402 = vector.extract_strided_slice %401 {offsets = [0, 0], sizes = [8, 128], strides = [1, 1]} : vector<8x512xf32> to vector<8x128xf32>
    %403 = arith.negf %402 : vector<8x128xf32>
    %404 = math.exp %403 : vector<8x128xf32>
    %cst_101 = arith.constant 1.000000e+00 : f32
    %405 = vector.broadcast %cst_101 : f32 to vector<8x128xf32>
    %406 = arith.addf %405, %404 : vector<8x128xf32>
    %407 = arith.divf %405, %406 : vector<8x128xf32>
    %408 = vector.extract_strided_slice %401 {offsets = [0, 128], sizes = [8, 128], strides = [1, 1]} : vector<8x512xf32> to vector<8x128xf32>
    %409 = arith.negf %408 : vector<8x128xf32>
    %410 = math.exp %409 : vector<8x128xf32>
    %cst_102 = arith.constant 1.000000e+00 : f32
    %411 = vector.broadcast %cst_102 : f32 to vector<8x128xf32>
    %412 = arith.addf %411, %410 : vector<8x128xf32>
    %413 = arith.divf %411, %412 : vector<8x128xf32>
    %414 = vector.extract_strided_slice %401 {offsets = [0, 256], sizes = [8, 128], strides = [1, 1]} : vector<8x512xf32> to vector<8x128xf32>
    %415 = math.tanh %414 : vector<8x128xf32>
    %416 = vector.extract_strided_slice %401 {offsets = [0, 384], sizes = [8, 128], strides = [1, 1]} : vector<8x512xf32> to vector<8x128xf32>
    %417 = arith.negf %416 : vector<8x128xf32>
    %418 = math.exp %417 : vector<8x128xf32>
    %cst_103 = arith.constant 1.000000e+00 : f32
    %419 = vector.broadcast %cst_103 : f32 to vector<8x128xf32>
    %420 = arith.addf %419, %418 : vector<8x128xf32>
    %421 = arith.divf %419, %420 : vector<8x128xf32>
    %422 = arith.mulf %413, %362 : vector<8x128xf32>
    %423 = arith.mulf %407, %415 : vector<8x128xf32>
    %424 = arith.addf %422, %423 : vector<8x128xf32>
    %425 = math.tanh %424 : vector<8x128xf32>
    %426 = arith.mulf %421, %425 : vector<8x128xf32>
    %427 = tpu.concatenate %426, %392 in 1 : vector<8x128xf32>, vector<8x128xf32> -> vector<8x256xf32>
    %cst_104 = arith.constant dense<0.000000e+00> : vector<8x512xf32>
    %428 = tpu.matmul %427, %4, %cst_104 {dimension_numbers = #tpu.dot_dimension_numbers<[1], [0], [0], [1], [0, 0, 1, 1], [], []>} : vector<8x256xf32>, vector<256x512xf32>, vector<8x512xf32> -> vector<8x512xf32>
    %429 = arith.addf %428, %7 : vector<8x512xf32>
    %430 = vector.extract_strided_slice %429 {offsets = [0, 0], sizes = [8, 128], strides = [1, 1]} : vector<8x512xf32> to vector<8x128xf32>
    %431 = arith.negf %430 : vector<8x128xf32>
    %432 = math.exp %431 : vector<8x128xf32>
    %cst_105 = arith.constant 1.000000e+00 : f32
    %433 = vector.broadcast %cst_105 : f32 to vector<8x128xf32>
    %434 = arith.addf %433, %432 : vector<8x128xf32>
    %435 = arith.divf %433, %434 : vector<8x128xf32>
    %436 = vector.extract_strided_slice %429 {offsets = [0, 128], sizes = [8, 128], strides = [1, 1]} : vector<8x512xf32> to vector<8x128xf32>
    %437 = arith.negf %436 : vector<8x128xf32>
    %438 = math.exp %437 : vector<8x128xf32>
    %cst_106 = arith.constant 1.000000e+00 : f32
    %439 = vector.broadcast %cst_106 : f32 to vector<8x128xf32>
    %440 = arith.addf %439, %438 : vector<8x128xf32>
    %441 = arith.divf %439, %440 : vector<8x128xf32>
    %442 = vector.extract_strided_slice %429 {offsets = [0, 256], sizes = [8, 128], strides = [1, 1]} : vector<8x512xf32> to vector<8x128xf32>
    %443 = math.tanh %442 : vector<8x128xf32>
    %444 = vector.extract_strided_slice %429 {offsets = [0, 384], sizes = [8, 128], strides = [1, 1]} : vector<8x512xf32> to vector<8x128xf32>
    %445 = arith.negf %444 : vector<8x128xf32>
    %446 = math.exp %445 : vector<8x128xf32>
    %cst_107 = arith.constant 1.000000e+00 : f32
    %447 = vector.broadcast %cst_107 : f32 to vector<8x128xf32>
    %448 = arith.addf %447, %446 : vector<8x128xf32>
    %449 = arith.divf %447, %448 : vector<8x128xf32>
    %450 = arith.mulf %441, %390 : vector<8x128xf32>
    %451 = arith.mulf %435, %443 : vector<8x128xf32>
    %452 = arith.addf %450, %451 : vector<8x128xf32>
    %453 = math.tanh %452 : vector<8x128xf32>
    %454 = arith.mulf %449, %453 : vector<8x128xf32>
    %455 = arith.index_cast %c6_i32 : i32 to index
    %c0_108 = arith.constant 0 : index
    %c0_109 = arith.constant 0 : index
    %456 = vector.load %arg15[%455, %c0_108, %c0_109] : memref<8x8x128xf32, #tpu.memory_space<vmem>>, vector<1x8x128xf32>
    %457 = vector.shape_cast %456 : vector<1x8x128xf32> to vector<8x128xf32>
    %458 = vector.shape_cast %454 : vector<8x128xf32> to vector<1x8x128xf32>
    tpu.vector_store %arg15[%455, %c0_108, %c0_109], %458 {strides = array<i32>} : memref<8x8x128xf32, #tpu.memory_space<vmem>>, vector<1x8x128xf32>,
    %c7_i32 = arith.constant 7 : i32
    %459 = arith.index_cast %c7_i32 : i32 to index
    %c0_110 = arith.constant 0 : index
    %c0_111 = arith.constant 0 : index
    %460 = vector.load %arg14[%459, %c0_110, %c0_111] : memref<8x8x512xf32, #tpu.memory_space<vmem>>, vector<1x8x512xf32>
    %461 = vector.shape_cast %460 : vector<1x8x512xf32> to vector<8x512xf32>
    %cst_112 = arith.constant dense<0.000000e+00> : vector<8x512xf32>
    %462 = tpu.matmul %426, %3, %cst_112 {dimension_numbers = #tpu.dot_dimension_numbers<[1], [0], [0], [1], [0, 0, 1, 1], [], []>} : vector<8x128xf32>, vector<128x512xf32>, vector<8x512xf32> -> vector<8x512xf32>
    %463 = arith.addf %461, %462 : vector<8x512xf32>
    %464 = vector.extract_strided_slice %463 {offsets = [0, 0], sizes = [8, 128], strides = [1, 1]} : vector<8x512xf32> to vector<8x128xf32>
    %465 = arith.negf %464 : vector<8x128xf32>
    %466 = math.exp %465 : vector<8x128xf32>
    %cst_113 = arith.constant 1.000000e+00 : f32
    %467 = vector.broadcast %cst_113 : f32 to vector<8x128xf32>
    %468 = arith.addf %467, %466 : vector<8x128xf32>
    %469 = arith.divf %467, %468 : vector<8x128xf32>
    %470 = vector.extract_strided_slice %463 {offsets = [0, 128], sizes = [8, 128], strides = [1, 1]} : vector<8x512xf32> to vector<8x128xf32>
    %471 = arith.negf %470 : vector<8x128xf32>
    %472 = math.exp %471 : vector<8x128xf32>
    %cst_114 = arith.constant 1.000000e+00 : f32
    %473 = vector.broadcast %cst_114 : f32 to vector<8x128xf32>
    %474 = arith.addf %473, %472 : vector<8x128xf32>
    %475 = arith.divf %473, %474 : vector<8x128xf32>
    %476 = vector.extract_strided_slice %463 {offsets = [0, 256], sizes = [8, 128], strides = [1, 1]} : vector<8x512xf32> to vector<8x128xf32>
    %477 = math.tanh %476 : vector<8x128xf32>
    %478 = vector.extract_strided_slice %463 {offsets = [0, 384], sizes = [8, 128], strides = [1, 1]} : vector<8x512xf32> to vector<8x128xf32>
    %479 = arith.negf %478 : vector<8x128xf32>
    %480 = math.exp %479 : vector<8x128xf32>
    %cst_115 = arith.constant 1.000000e+00 : f32
    %481 = vector.broadcast %cst_115 : f32 to vector<8x128xf32>
    %482 = arith.addf %481, %480 : vector<8x128xf32>
    %483 = arith.divf %481, %482 : vector<8x128xf32>
    %484 = arith.mulf %475, %424 : vector<8x128xf32>
    %485 = arith.mulf %469, %477 : vector<8x128xf32>
    %486 = arith.addf %484, %485 : vector<8x128xf32>
    %487 = math.tanh %486 : vector<8x128xf32>
    %488 = arith.mulf %483, %487 : vector<8x128xf32>
    %489 = tpu.concatenate %488, %454 in 1 : vector<8x128xf32>, vector<8x128xf32> -> vector<8x256xf32>
    %cst_116 = arith.constant dense<0.000000e+00> : vector<8x512xf32>
    %490 = tpu.matmul %489, %4, %cst_116 {dimension_numbers = #tpu.dot_dimension_numbers<[1], [0], [0], [1], [0, 0, 1, 1], [], []>} : vector<8x256xf32>, vector<256x512xf32>, vector<8x512xf32> -> vector<8x512xf32>
    %491 = arith.addf %490, %7 : vector<8x512xf32>
    %492 = vector.extract_strided_slice %491 {offsets = [0, 0], sizes = [8, 128], strides = [1, 1]} : vector<8x512xf32> to vector<8x128xf32>
    %493 = arith.negf %492 : vector<8x128xf32>
    %494 = math.exp %493 : vector<8x128xf32>
    %cst_117 = arith.constant 1.000000e+00 : f32
    %495 = vector.broadcast %cst_117 : f32 to vector<8x128xf32>
    %496 = arith.addf %495, %494 : vector<8x128xf32>
    %497 = arith.divf %495, %496 : vector<8x128xf32>
    %498 = vector.extract_strided_slice %491 {offsets = [0, 128], sizes = [8, 128], strides = [1, 1]} : vector<8x512xf32> to vector<8x128xf32>
    %499 = arith.negf %498 : vector<8x128xf32>
    %500 = math.exp %499 : vector<8x128xf32>
    %cst_118 = arith.constant 1.000000e+00 : f32
    %501 = vector.broadcast %cst_118 : f32 to vector<8x128xf32>
    %502 = arith.addf %501, %500 : vector<8x128xf32>
    %503 = arith.divf %501, %502 : vector<8x128xf32>
    %504 = vector.extract_strided_slice %491 {offsets = [0, 256], sizes = [8, 128], strides = [1, 1]} : vector<8x512xf32> to vector<8x128xf32>
    %505 = math.tanh %504 : vector<8x128xf32>
    %506 = vector.extract_strided_slice %491 {offsets = [0, 384], sizes = [8, 128], strides = [1, 1]} : vector<8x512xf32> to vector<8x128xf32>
    %507 = arith.negf %506 : vector<8x128xf32>
    %508 = math.exp %507 : vector<8x128xf32>
    %cst_119 = arith.constant 1.000000e+00 : f32
    %509 = vector.broadcast %cst_119 : f32 to vector<8x128xf32>
    %510 = arith.addf %509, %508 : vector<8x128xf32>
    %511 = arith.divf %509, %510 : vector<8x128xf32>
    %512 = arith.mulf %503, %452 : vector<8x128xf32>
    %513 = arith.mulf %497, %505 : vector<8x128xf32>
    %514 = arith.addf %512, %513 : vector<8x128xf32>
    %515 = math.tanh %514 : vector<8x128xf32>
    %516 = arith.mulf %511, %515 : vector<8x128xf32>
    %517 = arith.index_cast %c7_i32 : i32 to index
    %c0_120 = arith.constant 0 : index
    %c0_121 = arith.constant 0 : index
    %518 = vector.load %arg15[%517, %c0_120, %c0_121] : memref<8x8x128xf32, #tpu.memory_space<vmem>>, vector<1x8x128xf32>
    %519 = vector.shape_cast %518 : vector<1x8x128xf32> to vector<8x128xf32>
    %520 = vector.shape_cast %516 : vector<8x128xf32> to vector<1x8x128xf32>
    tpu.vector_store %arg15[%517, %c0_120, %c0_121], %520 {strides = array<i32>} : memref<8x8x128xf32, #tpu.memory_space<vmem>>, vector<1x8x128xf32>,
    %c8_i32 = arith.constant 8 : i32
    %c0_122 = arith.constant 0 : index
    %c0_123 = arith.constant 0 : index
    %c0_124 = arith.constant 0 : index
    %521 = vector.load %arg16[%c0_122, %c0_123, %c0_124] : memref<4x8x128xf32, #tpu.memory_space<vmem>>, vector<1x8x128xf32>
    %522 = vector.shape_cast %521 : vector<1x8x128xf32> to vector<8x128xf32>
    %523 = vector.shape_cast %488 : vector<8x128xf32> to vector<1x8x128xf32>
    tpu.vector_store %arg16[%c0_122, %c0_123, %c0_124], %523 {strides = array<i32>} : memref<4x8x128xf32, #tpu.memory_space<vmem>>, vector<1x8x128xf32>,
    %c1_125 = arith.constant 1 : index
    %c0_126 = arith.constant 0 : index
    %c0_127 = arith.constant 0 : index
    %524 = vector.load %arg16[%c1_125, %c0_126, %c0_127] : memref<4x8x128xf32, #tpu.memory_space<vmem>>, vector<1x8x128xf32>
    %525 = vector.shape_cast %524 : vector<1x8x128xf32> to vector<8x128xf32>
    %526 = vector.shape_cast %486 : vector<8x128xf32> to vector<1x8x128xf32>
    tpu.vector_store %arg16[%c1_125, %c0_126, %c0_127], %526 {strides = array<i32>} : memref<4x8x128xf32, #tpu.memory_space<vmem>>, vector<1x8x128xf32>,
    %c2_128 = arith.constant 2 : index
    %c0_129 = arith.constant 0 : index
    %c0_130 = arith.constant 0 : index
    %527 = vector.load %arg16[%c2_128, %c0_129, %c0_130] : memref<4x8x128xf32, #tpu.memory_space<vmem>>, vector<1x8x128xf32>
    %528 = vector.shape_cast %527 : vector<1x8x128xf32> to vector<8x128xf32>
    %529 = vector.shape_cast %516 : vector<8x128xf32> to vector<1x8x128xf32>
    tpu.vector_store %arg16[%c2_128, %c0_129, %c0_130], %529 {strides = array<i32>} : memref<4x8x128xf32, #tpu.memory_space<vmem>>, vector<1x8x128xf32>,
    %c3_131 = arith.constant 3 : index
    %c0_132 = arith.constant 0 : index
    %c0_133 = arith.constant 0 : index
    %530 = vector.load %arg16[%c3_131, %c0_132, %c0_133] : memref<4x8x128xf32, #tpu.memory_space<vmem>>, vector<1x8x128xf32>
    %531 = vector.shape_cast %530 : vector<1x8x128xf32> to vector<8x128xf32>
    %532 = vector.shape_cast %514 : vector<8x128xf32> to vector<1x8x128xf32>
    tpu.vector_store %arg16[%c3_131, %c0_132, %c0_133], %532 {strides = array<i32>} : memref<4x8x128xf32, #tpu.memory_space<vmem>>, vector<1x8x128xf32>,
    %c0_134 = arith.constant 0 : index
    %c0_135 = arith.constant 0 : index
    %c0_136 = arith.constant 0 : index
    %533 = vector.load %arg15[%c0_134, %c0_135, %c0_136] : memref<8x8x128xf32, #tpu.memory_space<vmem>>, vector<8x8x128xf32>
    %534 = vector.shape_cast %533 : vector<8x8x128xf32> to vector<64x128xf32>
    %c0_137 = arith.constant 0 : index
    %c0_138 = arith.constant 0 : index
    %535 = vector.load %arg9[%c0_137, %c0_138] : memref<128x128xf32, #tpu.memory_space<vmem>>, vector<128x128xf32>
    %cst_139 = arith.constant dense<0.000000e+00> : vector<64x128xf32>
    %536 = tpu.matmul %534, %535, %cst_139 {dimension_numbers = #tpu.dot_dimension_numbers<[1], [0], [0], [1], [0, 0, 1, 1], [], []>} : vector<64x128xf32>, vector<128x128xf32>, vector<64x128xf32> -> vector<64x128xf32>
    %c0_140 = arith.constant 0 : index
    %c0_141 = arith.constant 0 : index
    %537 = vector.load %arg10[%c0_140, %c0_141] : memref<1x128xf32, #tpu.memory_space<vmem>>, vector<1x128xf32>
    %538 = vector.broadcast %537 : vector<1x128xf32> to vector<64x128xf32>
    %539 = arith.addf %536, %538 : vector<64x128xf32>
    %540 = vector.shape_cast %539 : vector<64x128xf32> to vector<8x8x128xf32>
    %c0_142 = arith.constant 0 : index
    %c0_143 = arith.constant 0 : index
    %c0_144 = arith.constant 0 : index
    %541 = vector.load %arg11[%c0_142, %c0_143, %c0_144] : memref<8x8x128xf32, #tpu.memory_space<vmem>>, vector<8x8x128xf32>
    tpu.vector_store %arg11[%c0_142, %c0_143, %c0_144], %540 {strides = array<i32>} : memref<8x8x128xf32, #tpu.memory_space<vmem>>, vector<8x8x128xf32>,
    %c1_i32_145 = arith.constant 1 : i32
    %542 = arith.cmpi eq, %arg0, %c1_i32_145 : i32
    %543 = arith.extui %542 : i1 to i32
    %c0_i32_146 = arith.constant 0 : i32
    %544 = arith.cmpi ne, %543, %c0_i32_146 : i32
    scf.if %544 {
      %c0_147 = arith.constant 0 : index
      %c0_148 = arith.constant 0 : index
      %c0_149 = arith.constant 0 : index
      %545 = vector.load %arg12[%c0_147, %c0_148, %c0_149] : memref<2x8x128xf32, #tpu.memory_space<vmem>>, vector<1x8x128xf32>
      %546 = vector.shape_cast %545 : vector<1x8x128xf32> to vector<8x128xf32>
      %547 = vector.shape_cast %488 : vector<8x128xf32> to vector<1x8x128xf32>
      tpu.vector_store %arg12[%c0_147, %c0_148, %c0_149], %547 {strides = array<i32>} : memref<2x8x128xf32, #tpu.memory_space<vmem>>, vector<1x8x128xf32>,
      %c1_150 = arith.constant 1 : index
      %c0_151 = arith.constant 0 : index
      %c0_152 = arith.constant 0 : index
      %548 = vector.load %arg12[%c1_150, %c0_151, %c0_152] : memref<2x8x128xf32, #tpu.memory_space<vmem>>, vector<1x8x128xf32>
      %549 = vector.shape_cast %548 : vector<1x8x128xf32> to vector<8x128xf32>
      %550 = vector.shape_cast %516 : vector<8x128xf32> to vector<1x8x128xf32>
      tpu.vector_store %arg12[%c1_150, %c0_151, %c0_152], %550 {strides = array<i32>} : memref<2x8x128xf32, #tpu.memory_space<vmem>>, vector<1x8x128xf32>,
      %c0_153 = arith.constant 0 : index
      %c0_154 = arith.constant 0 : index
      %c0_155 = arith.constant 0 : index
      %551 = vector.load %arg13[%c0_153, %c0_154, %c0_155] : memref<2x8x128xf32, #tpu.memory_space<vmem>>, vector<1x8x128xf32>
      %552 = vector.shape_cast %551 : vector<1x8x128xf32> to vector<8x128xf32>
      %553 = vector.shape_cast %486 : vector<8x128xf32> to vector<1x8x128xf32>
      tpu.vector_store %arg13[%c0_153, %c0_154, %c0_155], %553 {strides = array<i32>} : memref<2x8x128xf32, #tpu.memory_space<vmem>>, vector<1x8x128xf32>,
      %c1_156 = arith.constant 1 : index
      %c0_157 = arith.constant 0 : index
      %c0_158 = arith.constant 0 : index
      %554 = vector.load %arg13[%c1_156, %c0_157, %c0_158] : memref<2x8x128xf32, #tpu.memory_space<vmem>>, vector<1x8x128xf32>
      %555 = vector.shape_cast %554 : vector<1x8x128xf32> to vector<8x128xf32>
      %556 = vector.shape_cast %514 : vector<8x128xf32> to vector<1x8x128xf32>
      tpu.vector_store %arg13[%c1_156, %c0_157, %c0_158], %556 {strides = array<i32>} : memref<2x8x128xf32, #tpu.memory_space<vmem>>, vector<1x8x128xf32>,
    } else {
    }
    return
  }
  func.func @transform_0(%arg0: i32) -> (i32, i32, i32) {
    %c0_i32 = arith.constant 0 : i32
    %c0_i32_0 = arith.constant 0 : i32
    %c0_i32_1 = arith.constant 0 : i32
    return %arg0, %c0_i32, %c0_i32_0 : i32, i32, i32
  }
  func.func @transform_1(%arg0: i32) -> (i32, i32, i32) {
    %c0_i32 = arith.constant 0 : i32
    %c0_i32_0 = arith.constant 0 : i32
    %c0_i32_1 = arith.constant 0 : i32
    %c0_i32_2 = arith.constant 0 : i32
    return %c0_i32, %c0_i32_0, %c0_i32_1 : i32, i32, i32
  }
  func.func @transform_2(%arg0: i32) -> (i32, i32, i32) {
    %c0_i32 = arith.constant 0 : i32
    %c0_i32_0 = arith.constant 0 : i32
    %c0_i32_1 = arith.constant 0 : i32
    %c0_i32_2 = arith.constant 0 : i32
    return %c0_i32, %c0_i32_0, %c0_i32_1 : i32, i32, i32
  }
  func.func @transform_3(%arg0: i32) -> (i32, i32) {
    %c0_i32 = arith.constant 0 : i32
    %c0_i32_0 = arith.constant 0 : i32
    %c0_i32_1 = arith.constant 0 : i32
    return %c0_i32, %c0_i32_0 : i32, i32
  }
  func.func @transform_4(%arg0: i32) -> (i32, i32) {
    %c0_i32 = arith.constant 0 : i32
    %c0_i32_0 = arith.constant 0 : i32
    %c0_i32_1 = arith.constant 0 : i32
    return %c0_i32, %c0_i32_0 : i32, i32
  }
  func.func @transform_5(%arg0: i32) -> (i32, i32) {
    %c0_i32 = arith.constant 0 : i32
    %c0_i32_0 = arith.constant 0 : i32
    %c0_i32_1 = arith.constant 0 : i32
    return %c0_i32, %c0_i32_0 : i32, i32
  }
  func.func @transform_6(%arg0: i32) -> (i32, i32) {
    %c0_i32 = arith.constant 0 : i32
    %c0_i32_0 = arith.constant 0 : i32
    %c0_i32_1 = arith.constant 0 : i32
    return %c0_i32, %c0_i32_0 : i32, i32
  }
  func.func @transform_7(%arg0: i32) -> (i32, i32) {
    %c0_i32 = arith.constant 0 : i32
    %c0_i32_0 = arith.constant 0 : i32
    %c0_i32_1 = arith.constant 0 : i32
    return %c0_i32, %c0_i32_0 : i32, i32
  }
  func.func @transform_8(%arg0: i32) -> (i32, i32) {
    %c0_i32 = arith.constant 0 : i32
    %c0_i32_0 = arith.constant 0 : i32
    %c0_i32_1 = arith.constant 0 : i32
    return %c0_i32, %c0_i32_0 : i32, i32
  }
  func.func @transform_9(%arg0: i32) -> (i32, i32) {
    %c0_i32 = arith.constant 0 : i32
    %c0_i32_0 = arith.constant 0 : i32
    %c0_i32_1 = arith.constant 0 : i32
    return %c0_i32, %c0_i32_0 : i32, i32
  }
  func.func @transform_10(%arg0: i32) -> (i32, i32, i32) {
    %c0_i32 = arith.constant 0 : i32
    %c0_i32_0 = arith.constant 0 : i32
    %c0_i32_1 = arith.constant 0 : i32
    return %arg0, %c0_i32, %c0_i32_0 : i32, i32, i32
  }
  func.func @transform_11(%arg0: i32) -> (i32, i32, i32) {
    %c0_i32 = arith.constant 0 : i32
    %c0_i32_0 = arith.constant 0 : i32
    %c0_i32_1 = arith.constant 0 : i32
    %c0_i32_2 = arith.constant 0 : i32
    return %c0_i32, %c0_i32_0, %c0_i32_1 : i32, i32, i32
  }
  func.func @transform_12(%arg0: i32) -> (i32, i32, i32) {
    %c0_i32 = arith.constant 0 : i32
    %c0_i32_0 = arith.constant 0 : i32
    %c0_i32_1 = arith.constant 0 : i32
    %c0_i32_2 = arith.constant 0 : i32
    return %c0_i32, %c0_i32_0, %c0_i32_1 : i32, i32, i32
  }
}

</mosaic_0001>

<llo_original>
// kernel: tpu_custom_call.1
$region0: #{tpu_custom_call.1}
  #allocation0 [shape = 'u32[]', space=smem, size = 0x4, offset = 0x4, fixed_abs, tag = 'smem constant byte address 0x4 - core index']
  #allocation1 [shape = 'u32[72,128]{1,0:T(1,128)}', space=vmem, size = 0x9000, scoped, tag = 'internal scratch']
  #allocation2 [shape = 'f32[8,8,512]{2,1,0:T(8,128)}', space=vmem, size = 0x20000, scoped, tag = 'scratch operand']
  #allocation3 [shape = 'f32[8,8,128]{2,1,0:T(8,128)}', space=vmem, size = 0x8000, scoped, tag = 'scratch operand']
  #allocation4 [shape = 'f32[4,8,128]{2,1,0:T(8,128)}', space=vmem, size = 0x4000, scoped, tag = 'scratch operand']
  %s0 = inlined_call_operand.hbm [shape: f32[16,8,64], index: 0, kind: input, shape index: {}]
  %s1 = inlined_call_operand.hbm [shape: f32[2,8,128], index: 1, kind: input, shape index: {}]
  %s2 = inlined_call_operand.hbm [shape: f32[2,8,128], index: 2, kind: input, shape index: {}]
  %s3 = inlined_call_operand.hbm [shape: f32[64,512], index: 3, kind: input, shape index: {}]
  %s4 = inlined_call_operand.hbm [shape: f32[128,512], index: 4, kind: input, shape index: {}]
  %s5 = inlined_call_operand.vmem [shape: f32[1,512], index: 5, kind: input, shape index: {}]
  %s6 = inlined_call_operand.hbm [shape: f32[256,512], index: 6, kind: input, shape index: {}]
  %s7 = inlined_call_operand.hbm [shape: f32[1,512], index: 7, kind: input, shape index: {}]
  %s8 = inlined_call_operand.hbm [shape: f32[128,128], index: 8, kind: input, shape index: {}]
  %s9 = inlined_call_operand.vmem [shape: f32[1,128], index: 9, kind: input, shape index: {}]
  %s10 = inlined_call_operand.hbm [shape: f32[16,8,128], index: 10, kind: output, shape index: {0}]
  %s11 = inlined_call_operand.hbm [shape: f32[2,8,128], index: 11, kind: output, shape index: {1}]
  %s12 = inlined_call_operand.hbm [shape: f32[2,8,128], index: 12, kind: output, shape index: {2}]
  %13 = xla_tuple %s10, %s11, %s12
  %s14 = sld [smem:[#allocation0]]
  $region129: #{tpu_custom_call.1} parent=0
    _
  %s16 = ssub.s32 1, %s14
  %s17 = scalar_select 0, %s16, %s14
  $region1: #{tpu_custom_call.1} parent=0
    #allocation5 [shape = 'u8[65536]{0}', space=vmem, size = 0x10000, scoped, tag = 'input window, operand 0']
    #allocation6 [shape = 's32[2]{0}', space=sflag, size = 0x8, scoped, tag = 'scoped memory for tpu_custom_call.1']
    #allocation7 [shape = 's32[2]{0}', space=sflag, size = 0x8, scoped, tag = 'scoped memory for tpu_custom_call.1']
    #allocation8 [shape = 'u8[8192]{0}', space=vmem, size = 0x2000, scoped, tag = 'input window, operand 1, single buffered']
    #allocation9 [shape = 's32[1]{0}', space=sflag, size = 0x4, scoped, tag = 'scoped memory for tpu_custom_call.1']
    #allocation10 [shape = 'u8[8192]{0}', space=vmem, size = 0x2000, scoped, tag = 'input window, operand 2, single buffered']
    #allocation11 [shape = 'u8[131072]{0}', space=vmem, size = 0x20000, scoped, tag = 'input window, operand 3, single buffered']
    #allocation12 [shape = 's32[1]{0}', space=sflag, size = 0x4, scoped, tag = 'scoped memory for tpu_custom_call.1']
    #allocation13 [shape = 'u8[262144]{0}', space=vmem, size = 0x40000, scoped, tag = 'input window, operand 4, single buffered']
    #allocation14 [shape = 'u8[524288]{0}', space=vmem, size = 0x80000, scoped, tag = 'input window, operand 6, single buffered']
    #allocation15 [shape = 's32[1]{0}', space=sflag, size = 0x4, scoped, tag = 'scoped memory for tpu_custom_call.1']
    #allocation16 [shape = 'u8[2048]{0}', space=vmem, size = 0x800, scoped, tag = 'input window, operand 7, single buffered']
    #allocation17 [shape = 'u8[65536]{0}', space=vmem, size = 0x10000, scoped, tag = 'input window, operand 8, single buffered']
    #allocation18 [shape = 's32[1]{0}', space=sflag, size = 0x4, scoped, tag = 'scoped memory for tpu_custom_call.1']
    #allocation19 [shape = 'u8[65536]{0}', space=vmem, size = 0x10000, scoped, tag = 'output window, operand 0']
    #allocation20 [shape = 'u8[8192]{0}', space=vmem, size = 0x2000, scoped, tag = 'output window, operand 1, single buffered']
    #allocation21 [shape = 's32[1]{0}', space=sflag, size = 0x4, scoped, tag = 'scoped memory for tpu_custom_call.1']
    #allocation22 [shape = 'u8[8192]{0}', space=vmem, size = 0x2000, scoped, tag = 'output window, operand 2, single buffered']
    %18 = vsyncpa [#allocation6], 0
    %s19 = scalar_lea.sflag [#allocation6], 1
    %20 = vsyncpa %s19, 0
    %21 = vsyncpa [#allocation9], 0
    %22 = vsyncpa [#allocation12], 0
    %23 = vsyncpa [#allocation15], 0
    %24 = vsyncpa [#allocation18], 0
    %25 = vsyncpa [#allocation7], 0
    %s26 = scalar_lea.sflag [#allocation7], 1
    %27 = vsyncpa %s26, 0
    %28 = vsyncpa [#allocation21], 0
    loop: start=0, step=1, limit=4
    $region2: #{tpu_custom_call.1} parent=1 // loop_pre_header
      _
    $region3: #{tpu_custom_call.1} parent=1 // loop_header
      %s30 = sphi 0, %s34
      %p31 = scmp.ge.s32.totalorder %s30, 4
      %s40 = sphi 0, %s42
      %s43 = sphi 0, %s40
      %s44 = sphi 0, %s43
      %s60 = sphi 0, %s44
      %s64 = sphi 0, %s64
      %s66 = sphi 0, %s64
      %s67 = sphi 0, %s66
      %s81 = sphi 0, %s67
      %s85 = sphi 0, %s85
      %s87 = sphi 0, %s85
      %s88 = sphi 0, %s87
      %s102 = sphi 0, %s88
      %s106 = sphi 0, %s106
      %s108 = sphi 0, %s106
      %s109 = sphi 0, %s108
      %s123 = sphi 0, %s109
      %s127 = sphi 0, %s127
      %s129 = sphi 0, %s127
      %s130 = sphi 0, %s129
      %s144 = sphi 0, %s130
      %s148 = sphi 0, %s148
      %s150 = sphi 0, %s148
      %s151 = sphi 0, %s150
      %s165 = sphi 0, %s151
      %s169 = sphi 0, %s169
      %s171 = sphi 0, %s169
      %s172 = sphi 0, %s171
      %s186 = sphi 0, %s172
      %s190 = sphi 0, %s190
      %s192 = sphi 0, %s190
      %s193 = sphi 0, %s192
      %s207 = sphi 0, %s193
      %s211 = sphi 0, %s211
      %s213 = sphi 0, %s211
      %s214 = sphi 0, %s213
      %s228 = sphi 0, %s214
      %s232 = sphi 0, %s232
      %s234 = sphi 0, %s232
      %s235 = sphi 0, %s234
      %s249 = sphi 0, %s235
      %s255 = sphi 0, %s257
      %s258 = sphi 0, %s255
      %s259 = sphi 0, %s258
      %s275 = sphi 0, %s259
      %s279 = sphi 0, %s279
      %s281 = sphi 0, %s279
      %s282 = sphi 0, %s281
      %s296 = sphi 0, %s282
      %s300 = sphi 0, %s300
      %s302 = sphi 0, %s300
      %s303 = sphi 0, %s302
      %s317 = sphi 0, %s303
    $region4: #{tpu_custom_call.1} parent=1 // loop_header_branch
      %33 = sbr.rel (%p31) target = $region8
    $region5: #{tpu_custom_call.1} parent=1 // loop_body
      %s35 = ssub.s32 %s30, 1
      %s36 = ssub.s32 %s30, 2
      %s37 = sadd.s32 %s30, 1
      %s38 = ssub.s32 %s30, %s37
      %p39 = scmp.eq.s32.totalorder %s38, 0
      %s41 = sadd.s32 %s40, 1
      %s42 = scalar_select %p39, %s40, %s41
      %p45 = pneg %p39
      %p46 = scmp.eq.s32.totalorder %s30, 1
      %p47 = por %p45, %p46
      %p48 = scmp.ne.s32.totalorder %s40, %s43
      %p49 = scmp.eq.s32.totalorder %s30, 0
      %p50 = por %p48, %p49
      %p51 = scmp.ne.s32.totalorder %s40, %s43
      %p52 = scmp.eq.s32.totalorder %s35, 1
      %p53 = por %p51, %p52
      %p54 = scmp.ne.s32.totalorder %s43, %s44
      %p55 = scmp.eq.s32.totalorder %s35, 0
      %p56 = por %p54, %p55
      %p57 = scmp.ne.s32.totalorder %s43, %s44
      %p58 = scmp.eq.s32.totalorder %s36, 1
      %p59 = por %p57, %p58
      %p61 = scmp.ne.s32.totalorder %s44, %s60
      %p62 = scmp.eq.s32.totalorder %s36, 0
      %p63 = por %p61, %p62
      %s65 = sadd.s32 %s64, 1
      %p68 = scmp.eq.s32.totalorder %s30, 1
      %p69 = scmp.ne.s32.totalorder %s64, %s66
      %p70 = scmp.eq.s32.totalorder %s30, 0
      %p71 = por %p69, %p70
      %p72 = scmp.ne.s32.totalorder %s64, %s66
      %p73 = scmp.eq.s32.totalorder %s35, 1
      %p74 = por %p72, %p73
      %p75 = scmp.ne.s32.totalorder %s66, %s67
      %p76 = scmp.eq.s32.totalorder %s35, 0
      %p77 = por %p75, %p76
      %p78 = scmp.ne.s32.totalorder %s66, %s67
      %p79 = scmp.eq.s32.totalorder %s36, 1
      %p80 = por %p78, %p79
      %p82 = scmp.ne.s32.totalorder %s67, %s81
      %p83 = scmp.eq.s32.totalorder %s36, 0
      %p84 = por %p82, %p83
      %s86 = sadd.s32 %s85, 1
      %p89 = scmp.eq.s32.totalorder %s30, 1
      %p90 = scmp.ne.s32.totalorder %s85, %s87
      %p91 = scmp.eq.s32.totalorder %s30, 0
      %p92 = por %p90, %p91
      %p93 = scmp.ne.s32.totalorder %s85, %s87
      %p94 = scmp.eq.s32.totalorder %s35, 1
      %p95 = por %p93, %p94
      %p96 = scmp.ne.s32.totalorder %s87, %s88
      %p97 = scmp.eq.s32.totalorder %s35, 0
      %p98 = por %p96, %p97
      %p99 = scmp.ne.s32.totalorder %s87, %s88
      %p100 = scmp.eq.s32.totalorder %s36, 1
      %p101 = por %p99, %p100
      %p103 = scmp.ne.s32.totalorder %s88, %s102
      %p104 = scmp.eq.s32.totalorder %s36, 0
      %p105 = por %p103, %p104
      %s107 = sadd.s32 %s106, 1
      %p110 = scmp.eq.s32.totalorder %s30, 1
      %p111 = scmp.ne.s32.totalorder %s106, %s108
      %p112 = scmp.eq.s32.totalorder %s30, 0
      %p113 = por %p111, %p112
      %p114 = scmp.ne.s32.totalorder %s106, %s108
      %p115 = scmp.eq.s32.totalorder %s35, 1
      %p116 = por %p114, %p115
      %p117 = scmp.ne.s32.totalorder %s108, %s109
      %p118 = scmp.eq.s32.totalorder %s35, 0
      %p119 = por %p117, %p118
      %p120 = scmp.ne.s32.totalorder %s108, %s109
      %p121 = scmp.eq.s32.totalorder %s36, 1
      %p122 = por %p120, %p121
      %p124 = scmp.ne.s32.totalorder %s109, %s123
      %p125 = scmp.eq.s32.totalorder %s36, 0
      %p126 = por %p124, %p125
      %s128 = sadd.s32 %s127, 1
      %p131 = scmp.eq.s32.totalorder %s30, 1
      %p132 = scmp.ne.s32.totalorder %s127, %s129
      %p133 = scmp.eq.s32.totalorder %s30, 0
      %p134 = por %p132, %p133
      %p135 = scmp.ne.s32.totalorder %s127, %s129
      %p136 = scmp.eq.s32.totalorder %s35, 1
      %p137 = por %p135, %p136
      %p138 = scmp.ne.s32.totalorder %s129, %s130
      %p139 = scmp.eq.s32.totalorder %s35, 0
      %p140 = por %p138, %p139
      %p141 = scmp.ne.s32.totalorder %s129, %s130
      %p142 = scmp.eq.s32.totalorder %s36, 1
      %p143 = por %p141, %p142
      %p145 = scmp.ne.s32.totalorder %s130, %s144
      %p146 = scmp.eq.s32.totalorder %s36, 0
      %p147 = por %p145, %p146
      %s149 = sadd.s32 %s148, 1
      %p152 = scmp.eq.s32.totalorder %s30, 1
      %p153 = scmp.ne.s32.totalorder %s148, %s150
      %p154 = scmp.eq.s32.totalorder %s30, 0
      %p155 = por %p153, %p154
      %p156 = scmp.ne.s32.totalorder %s148, %s150
      %p157 = scmp.eq.s32.totalorder %s35, 1
      %p158 = por %p156, %p157
      %p159 = scmp.ne.s32.totalorder %s150, %s151
      %p160 = scmp.eq.s32.totalorder %s35, 0
      %p161 = por %p159, %p160
      %p162 = scmp.ne.s32.totalorder %s150, %s151
      %p163 = scmp.eq.s32.totalorder %s36, 1
      %p164 = por %p162, %p163
      %p166 = scmp.ne.s32.totalorder %s151, %s165
      %p167 = scmp.eq.s32.totalorder %s36, 0
      %p168 = por %p166, %p167
      %s170 = sadd.s32 %s169, 1
      %p173 = scmp.eq.s32.totalorder %s30, 1
      %p174 = scmp.ne.s32.totalorder %s169, %s171
      %p175 = scmp.eq.s32.totalorder %s30, 0
      %p176 = por %p174, %p175
      %p177 = scmp.ne.s32.totalorder %s169, %s171
      %p178 = scmp.eq.s32.totalorder %s35, 1
      %p179 = por %p177, %p178
      %p180 = scmp.ne.s32.totalorder %s171, %s172
      %p181 = scmp.eq.s32.totalorder %s35, 0
      %p182 = por %p180, %p181
      %p183 = scmp.ne.s32.totalorder %s171, %s172
      %p184 = scmp.eq.s32.totalorder %s36, 1
      %p185 = por %p183, %p184
      %p187 = scmp.ne.s32.totalorder %s172, %s186
      %p188 = scmp.eq.s32.totalorder %s36, 0
      %p189 = por %p187, %p188
      %s191 = sadd.s32 %s190, 1
      %p194 = scmp.eq.s32.totalorder %s30, 1
      %p195 = scmp.ne.s32.totalorder %s190, %s192
      %p196 = scmp.eq.s32.totalorder %s30, 0
      %p197 = por %p195, %p196
      %p198 = scmp.ne.s32.totalorder %s190, %s192
      %p199 = scmp.eq.s32.totalorder %s35, 1
      %p200 = por %p198, %p199
      %p201 = scmp.ne.s32.totalorder %s192, %s193
      %p202 = scmp.eq.s32.totalorder %s35, 0
      %p203 = por %p201, %p202
      %p204 = scmp.ne.s32.totalorder %s192, %s193
      %p205 = scmp.eq.s32.totalorder %s36, 1
      %p206 = por %p204, %p205
      %p208 = scmp.ne.s32.totalorder %s193, %s207
      %p209 = scmp.eq.s32.totalorder %s36, 0
      %p210 = por %p208, %p209
      %s212 = sadd.s32 %s211, 1
      %p215 = scmp.eq.s32.totalorder %s30, 1
      %p216 = scmp.ne.s32.totalorder %s211, %s213
      %p217 = scmp.eq.s32.totalorder %s30, 0
      %p218 = por %p216, %p217
      %p219 = scmp.ne.s32.totalorder %s211, %s213
      %p220 = scmp.eq.s32.totalorder %s35, 1
      %p221 = por %p219, %p220
      %p222 = scmp.ne.s32.totalorder %s213, %s214
      %p223 = scmp.eq.s32.totalorder %s35, 0
      %p224 = por %p222, %p223
      %p225 = scmp.ne.s32.totalorder %s213, %s214
      %p226 = scmp.eq.s32.totalorder %s36, 1
      %p227 = por %p225, %p226
      %p229 = scmp.ne.s32.totalorder %s214, %s228
      %p230 = scmp.eq.s32.totalorder %s36, 0
      %p231 = por %p229, %p230
      %s233 = sadd.s32 %s232, 1
      %p236 = scmp.eq.s32.totalorder %s30, 1
      %p237 = scmp.ne.s32.totalorder %s232, %s234
      %p238 = scmp.eq.s32.totalorder %s30, 0
      %p239 = por %p237, %p238
      %p240 = scmp.ne.s32.totalorder %s232, %s234
      %p241 = scmp.eq.s32.totalorder %s35, 1
      %p242 = por %p240, %p241
      %p243 = scmp.ne.s32.totalorder %s234, %s235
      %p244 = scmp.eq.s32.totalorder %s35, 0
      %p245 = por %p243, %p244
      %p246 = scmp.ne.s32.totalorder %s234, %s235
      %p247 = scmp.eq.s32.totalorder %s36, 1
      %p248 = por %p246, %p247
      %p250 = scmp.ne.s32.totalorder %s235, %s249
      %p251 = scmp.eq.s32.totalorder %s36, 0
      %p252 = por %p250, %p251
      %s253 = ssub.s32 %s30, %s37
      %p254 = scmp.eq.s32.totalorder %s253, 0
      %s256 = sadd.s32 %s255, 1
      %s257 = scalar_select %p254, %s255, %s256
      %p260 = pneg %p254
      %p261 = scmp.eq.s32.totalorder %s30, 1
      %p262 = por %p260, %p261
      %p263 = scmp.ne.s32.totalorder %s255, %s258
      %p264 = scmp.eq.s32.totalorder %s30, 0
      %p265 = por %p263, %p264
      %p266 = scmp.ne.s32.totalorder %s255, %s258
      %p267 = scmp.eq.s32.totalorder %s35, 1
      %p268 = por %p266, %p267
      %p269 = scmp.ne.s32.totalorder %s258, %s259
      %p270 = scmp.eq.s32.totalorder %s35, 0
      %p271 = por %p269, %p270
      %p272 = scmp.ne.s32.totalorder %s258, %s259
      %p273 = scmp.eq.s32.totalorder %s36, 1
      %p274 = por %p272, %p273
      %p276 = scmp.ne.s32.totalorder %s259, %s275
      %p277 = scmp.eq.s32.totalorder %s36, 0
      %p278 = por %p276, %p277
      %s280 = sadd.s32 %s279, 1
      %p283 = scmp.eq.s32.totalorder %s30, 1
      %p284 = scmp.ne.s32.totalorder %s279, %s281
      %p285 = scmp.eq.s32.totalorder %s30, 0
      %p286 = por %p284, %p285
      %p287 = scmp.ne.s32.totalorder %s279, %s281
      %p288 = scmp.eq.s32.totalorder %s35, 1
      %p289 = por %p287, %p288
      %p290 = scmp.ne.s32.totalorder %s281, %s282
      %p291 = scmp.eq.s32.totalorder %s35, 0
      %p292 = por %p290, %p291
      %p293 = scmp.ne.s32.totalorder %s281, %s282
      %p294 = scmp.eq.s32.totalorder %s36, 1
      %p295 = por %p293, %p294
      %p297 = scmp.ne.s32.totalorder %s282, %s296
      %p298 = scmp.eq.s32.totalorder %s36, 0
      %p299 = por %p297, %p298
      %s301 = sadd.s32 %s300, 1
      %p304 = scmp.eq.s32.totalorder %s30, 1
      %p305 = scmp.ne.s32.totalorder %s300, %s302
      %p306 = scmp.eq.s32.totalorder %s30, 0
      %p307 = por %p305, %p306
      %p308 = scmp.ne.s32.totalorder %s300, %s302
      %p309 = scmp.eq.s32.totalorder %s35, 1
      %p310 = por %p308, %p309
      %p311 = scmp.ne.s32.totalorder %s302, %s303
      %p312 = scmp.eq.s32.totalorder %s35, 0
      %p313 = por %p311, %p312
      %p314 = scmp.ne.s32.totalorder %s302, %s303
      %p315 = scmp.eq.s32.totalorder %s36, 1
      %p316 = por %p314, %p315
      %p318 = scmp.ne.s32.totalorder %s303, %s317
      %p319 = scmp.eq.s32.totalorder %s36, 0
      %p320 = por %p318, %p319
      %p321 = scmp.le.s32.totalorder 1, %s30
      %p322 = scmp.lt.s32.totalorder %s30, 3
      %p323 = pnand %p321, %p322
      %p324 = pneg %p323
      // Predicated region
      $region9: #{tpu_custom_call.1} parent=5 // pred_check
        _
      $region10: #{tpu_custom_call.1} parent=5 // pred_check_branch
        %326 = sbr.rel (%p323) target = $region12
      $region11: #{tpu_custom_call.1} parent=5 // pred_region
        %s327 = ssub.s32 %s30, 1
        // Predicated region
        $region13: #{tpu_custom_call.1} parent=11 // pred_check
          %p328 = pneg %p77
        $region14: #{tpu_custom_call.1} parent=11 // pred_check_branch
          %330 = sbr.rel (%p328) target = $region16
        $region15: #{tpu_custom_call.1} parent=11 // pred_region
          %332 = vsyncadd [#allocation9], 0
          %s333 = sshll.u32 %s1, 4
          %s334 = int_to_ptr.hbm [resolvable:$true] %s333
          %s335 = sshll.u32 [#allocation8], 4
          %s336 = int_to_ptr.vmem [resolvable:$true] %s335
          %341 = dma.hbm_to_vmem [thread:$0]  %s334, 256, %s336, [#allocation9], 128, 128, 8
        $region16: #{tpu_custom_call.1} parent=11 // pred_fallthru
          _
        // Predicated region
        $region17: #{tpu_custom_call.1} parent=11 // pred_check
          %p342 = pneg %p98
        $region18: #{tpu_custom_call.1} parent=11 // pred_check_branch
          %344 = sbr.rel (%p342) target = $region20
        $region19: #{tpu_custom_call.1} parent=11 // pred_region
          %346 = vsyncadd [#allocation9], 0
          %s347 = sshll.u32 %s2, 4
          %s348 = int_to_ptr.hbm [resolvable:$true] %s347
          %s349 = sshll.u32 [#allocation10], 4
          %s350 = int_to_ptr.vmem [resolvable:$true] %s349
          %355 = dma.hbm_to_vmem [thread:$0]  %s348, 256, %s350, [#allocation9], 128, 128, 8
        $region20: #{tpu_custom_call.1} parent=11 // pred_fallthru
          _
        // Predicated region
        $region21: #{tpu_custom_call.1} parent=11 // pred_check
          %p356 = pneg %p119
        $region22: #{tpu_custom_call.1} parent=11 // pred_check_branch
          %358 = sbr.rel (%p356) target = $region24
        $region23: #{tpu_custom_call.1} parent=11 // pred_region
          %360 = vsyncadd [#allocation12], 0
          %s361 = sshll.u32 %s3, 4
          %s362 = int_to_ptr.hbm [resolvable:$true] %s361
          %s363 = sshll.u32 [#allocation11], 4
          %s364 = int_to_ptr.vmem [resolvable:$true] %s363
          %369 = dma.hbm_to_vmem [thread:$0]  %s362, 4096, %s364, [#allocation12], 512, 512, 32
        $region24: #{tpu_custom_call.1} parent=11 // pred_fallthru
          _
        // Predicated region
        $region25: #{tpu_custom_call.1} parent=11 // pred_check
          %p370 = pneg %p140
        $region26: #{tpu_custom_call.1} parent=11 // pred_check_branch
          %372 = sbr.rel (%p370) target = $region28
        $region27: #{tpu_custom_call.1} parent=11 // pred_region
          %374 = vsyncadd [#allocation12], 0
          %s375 = sshll.u32 %s4, 4
          %s376 = int_to_ptr.hbm [resolvable:$true] %s375
          %s377 = sshll.u32 [#allocation13], 4
          %s378 = int_to_ptr.vmem [resolvable:$true] %s377
          %383 = dma.hbm_to_vmem [thread:$0]  %s376, 8192, %s378, [#allocation12], 512, 512, 32
        $region28: #{tpu_custom_call.1} parent=11 // pred_fallthru
          _
        // Predicated region
        $region29: #{tpu_custom_call.1} parent=11 // pred_check
          %p384 = pneg %p161
        $region30: #{tpu_custom_call.1} parent=11 // pred_check_branch
          %386 = sbr.rel (%p384) target = $region32
        $region31: #{tpu_custom_call.1} parent=11 // pred_region
          _
        $region32: #{tpu_custom_call.1} parent=11 // pred_fallthru
          _
        // Predicated region
        $region33: #{tpu_custom_call.1} parent=11 // pred_check
          %p387 = pneg %p182
        $region34: #{tpu_custom_call.1} parent=11 // pred_check_branch
          %389 = sbr.rel (%p387) target = $region36
        $region35: #{tpu_custom_call.1} parent=11 // pred_region
          %391 = vsyncadd [#allocation15], 0
          %s392 = sshll.u32 %s6, 4
          %s393 = int_to_ptr.hbm [resolvable:$true] %s392
          %s394 = sshll.u32 [#allocation14], 4
          %s395 = int_to_ptr.vmem [resolvable:$true] %s394
          %400 = dma.hbm_to_vmem [thread:$0]  %s393, 16384, %s395, [#allocation15], 512, 512, 32
        $region36: #{tpu_custom_call.1} parent=11 // pred_fallthru
          _
        // Predicated region
        $region37: #{tpu_custom_call.1} parent=11 // pred_check
          %p401 = pneg %p203
        $region38: #{tpu_custom_call.1} parent=11 // pred_check_branch
          %403 = sbr.rel (%p401) target = $region40
        $region39: #{tpu_custom_call.1} parent=11 // pred_region
          %405 = vsyncadd [#allocation15], 0
          %s407 = sshll.u32 %s7, 4
          %s408 = int_to_ptr.hbm [resolvable:$true] %s407
          %s409 = sshll.u32 [#allocation16], 4
          %s410 = int_to_ptr.vmem [resolvable:$true] %s409
          %412 = dma.hbm_to_vmem [thread:$0]  %s408, 64, %s410, [#allocation15]
        $region40: #{tpu_custom_call.1} parent=11 // pred_fallthru
          _
        // Predicated region
        $region41: #{tpu_custom_call.1} parent=11 // pred_check
          %p413 = pneg %p224
        $region42: #{tpu_custom_call.1} parent=11 // pred_check_branch
          %415 = sbr.rel (%p413) target = $region44
        $region43: #{tpu_custom_call.1} parent=11 // pred_region
          %417 = vsyncadd [#allocation18], 0
          %s418 = sshll.u32 %s8, 4
          %s419 = int_to_ptr.hbm [resolvable:$true] %s418
          %s420 = sshll.u32 [#allocation17], 4
          %s421 = int_to_ptr.vmem [resolvable:$true] %s420
          %426 = dma.hbm_to_vmem [thread:$0]  %s419, 2048, %s421, [#allocation18], 128, 128, 8
        $region44: #{tpu_custom_call.1} parent=11 // pred_fallthru
          _
        // Predicated region
        $region45: #{tpu_custom_call.1} parent=11 // pred_check
          %p427 = pneg %p245
        $region46: #{tpu_custom_call.1} parent=11 // pred_check_branch
          %429 = sbr.rel (%p427) target = $region48
        $region47: #{tpu_custom_call.1} parent=11 // pred_region
          _
        $region48: #{tpu_custom_call.1} parent=11 // pred_fallthru
          _
      $region12: #{tpu_custom_call.1} parent=5 // pred_fallthru
        _
      %p430 = scmp.lt.s32.totalorder %s30, 2
      // Predicated region
      $region49: #{tpu_custom_call.1} parent=5 // pred_check
        %p431 = pneg %p430
      $region50: #{tpu_custom_call.1} parent=5 // pred_check_branch
        %433 = sbr.rel (%p431) target = $region52
      $region51: #{tpu_custom_call.1} parent=5 // pred_region
        // Predicated region
        $region53: #{tpu_custom_call.1} parent=51 // pred_check
          %p434 = pneg %p50
        $region54: #{tpu_custom_call.1} parent=51 // pred_check_branch
          %436 = sbr.rel (%p434) target = $region56
        $region55: #{tpu_custom_call.1} parent=51 // pred_region
          %s437 = sand.u32 %s40, 1
          %s438 = scalar_lea.sflag [#allocation6], %s437
          %s439 = sand.u32 %s40, 1
          %s440 = smul.addr %s439, 64
          %s441 = scalar_lea.vmem [#allocation5], %s440
          %s442 = smul.u32 8, %s30
          %444 = vsyncadd %s438, 0
          %s445 = smul.addr %s442, 8
          %s446 = scalar_lea.hbm %s0, %s445
          %s447 = sshll.u32 %s446, 4
          %s448 = int_to_ptr.hbm [resolvable:$true] %s447
          %s449 = sshll.u32 %s441, 4
          %s450 = int_to_ptr.vmem [resolvable:$true] %s449
          %455 = dma.hbm_to_vmem [thread:$0]  %s448, 1024, %s450, %s438, 128, 128, 8
        $region56: #{tpu_custom_call.1} parent=51 // pred_fallthru
          _
      $region52: #{tpu_custom_call.1} parent=5 // pred_fallthru
        _
      %p456 = scmp.le.s32.totalorder 1, %s30
      %p457 = scmp.lt.s32.totalorder %s30, 3
      %p458 = pnand %p456, %p457
      %p459 = pneg %p458
      // Predicated region
      $region57: #{tpu_custom_call.1} parent=5 // pred_check
        _
      $region58: #{tpu_custom_call.1} parent=5 // pred_check_branch
        %461 = sbr.rel (%p458) target = $region60
      $region59: #{tpu_custom_call.1} parent=5 // pred_region
        %s462 = ssub.s32 %s30, 1
        %s463 = sand.u32 %s43, 1
        %s464 = scalar_lea.sflag [#allocation6], %s463
        %s465 = sand.u32 %s43, 1
        %s466 = smul.addr %s465, 64
        %s467 = scalar_lea.vmem [#allocation5], %s466
        // Predicated region
        $region61: #{tpu_custom_call.1} parent=59 // pred_check
          %p468 = pneg %p56
        $region62: #{tpu_custom_call.1} parent=59 // pred_check_branch
          %470 = sbr.rel (%p468) target = $region64
        $region63: #{tpu_custom_call.1} parent=59 // pred_region
          %472 = dma.done %s464, 1024
        $region64: #{tpu_custom_call.1} parent=59 // pred_fallthru
          _
        // Predicated region
        $region65: #{tpu_custom_call.1} parent=59 // pred_check
          %p473 = pneg %p77
        $region66: #{tpu_custom_call.1} parent=59 // pred_check_branch
          %475 = sbr.rel (%p473) target = $region68
        $region67: #{tpu_custom_call.1} parent=59 // pred_region
          %477 = dma.done [#allocation9], 256
        $region68: #{tpu_custom_call.1} parent=59 // pred_fallthru
          _
        // Predicated region
        $region69: #{tpu_custom_call.1} parent=59 // pred_check
          %p478 = pneg %p98
        $region70: #{tpu_custom_call.1} parent=59 // pred_check_branch
          %480 = sbr.rel (%p478) target = $region72
        $region71: #{tpu_custom_call.1} parent=59 // pred_region
          %482 = dma.done [#allocation9], 256
        $region72: #{tpu_custom_call.1} parent=59 // pred_fallthru
          _
        // Predicated region
        $region73: #{tpu_custom_call.1} parent=59 // pred_check
          %p483 = pneg %p119
        $region74: #{tpu_custom_call.1} parent=59 // pred_check_branch
          %485 = sbr.rel (%p483) target = $region76
        $region75: #{tpu_custom_call.1} parent=59 // pred_region
          %487 = dma.done [#allocation12], 4096
        $region76: #{tpu_custom_call.1} parent=59 // pred_fallthru
          _
        // Predicated region
        $region77: #{tpu_custom_call.1} parent=59 // pred_check
          %p488 = pneg %p140
        $region78: #{tpu_custom_call.1} parent=59 // pred_check_branch
          %490 = sbr.rel (%p488) target = $region80
        $region79: #{tpu_custom_call.1} parent=59 // pred_region
          %492 = dma.done [#allocation12], 8192
        $region80: #{tpu_custom_call.1} parent=59 // pred_fallthru
          _
        // Predicated region
        $region81: #{tpu_custom_call.1} parent=59 // pred_check
          %p493 = pneg %p182
        $region82: #{tpu_custom_call.1} parent=59 // pred_check_branch
          %495 = sbr.rel (%p493) target = $region84
        $region83: #{tpu_custom_call.1} parent=59 // pred_region
          %497 = dma.done [#allocation15], 16384
        $region84: #{tpu_custom_call.1} parent=59 // pred_fallthru
          _
        // Predicated region
        $region85: #{tpu_custom_call.1} parent=59 // pred_check
          %p498 = pneg %p203
        $region86: #{tpu_custom_call.1} parent=59 // pred_check_branch
          %500 = sbr.rel (%p498) target = $region88
        $region87: #{tpu_custom_call.1} parent=59 // pred_region
          %502 = dma.done [#allocation15], 64
        $region88: #{tpu_custom_call.1} parent=59 // pred_fallthru
          _
        // Predicated region
        $region89: #{tpu_custom_call.1} parent=59 // pred_check
          %p503 = pneg %p224
        $region90: #{tpu_custom_call.1} parent=59 // pred_check_branch
          %505 = sbr.rel (%p503) target = $region92
        $region91: #{tpu_custom_call.1} parent=59 // pred_region
          %507 = dma.done [#allocation18], 2048
        $region92: #{tpu_custom_call.1} parent=59 // pred_fallthru
          _
        %s508 = sand.u32 %s43, 1
        %s509 = scalar_lea.sflag [#allocation6], %s508
        %s510 = sand.u32 %s43, 1
        %s511 = smul.addr %s510, 64
        %s512 = scalar_lea.vmem [#allocation5], %s511
        %p513 = pneg %p56
        %p514 = pneg %p53
        %p515 = pneg %p77
        %p516 = pneg %p74
        %p517 = pneg %p98
        %p518 = pneg %p95
        %p519 = pneg %p119
        %p520 = pneg %p116
        %p521 = pneg %p140
        %p522 = pneg %p137
        %p523 = pneg %p161
        %p524 = pneg %p158
        %p525 = pneg %p182
        %p526 = pneg %p179
        %p527 = pneg %p203
        %p528 = pneg %p200
        %p529 = pneg %p224
        %p530 = pneg %p221
        %p531 = pneg %p245
        %p532 = pneg %p242
        %p533 = pneg %p271
        %p534 = pneg %p268
        %s535 = sand.u32 %s258, 1
        %s536 = scalar_lea.sflag [#allocation7], %s535
        %s537 = sand.u32 %s258, 1
        %s538 = smul.addr %s537, 64
        %s539 = scalar_lea.vmem [#allocation19], %s538
        %p540 = pneg %p292
        %p541 = pneg %p289
        %p542 = pneg %p313
        %p543 = pneg %p310
        %s544 = smul.u32 8, %s35
        %s545 = smul.u32 8, %s35
        %p546 = scmp.eq.s32.totalorder %s35, 0
        // Predicated region
        $region93: #{tpu_custom_call.1} parent=59 // pred_check
          %p547 = pneg %p546
        $region94: #{tpu_custom_call.1} parent=59 // pred_check_branch
          %549 = sbr.rel (%p547) target = $region96
        $region95: #{tpu_custom_call.1} parent=59 // pred_region
          %v550 = vld [vmem:[#allocation8] sm:$0xff]
          %551 = vst [vmem:[#allocation4] sm:$0xff] %v550
          %v552 = vld [vmem:[#allocation10] sm:$0xff]
          %s553 = scalar_lea.vmem [#allocation4], 8
          %554 = vst [vmem:[%s553] sm:$0xff] %v552
          %s555 = scalar_lea.vmem [#allocation8], 8
          %v556 = vld [vmem:[%s555] sm:$0xff]
          %s557 = scalar_lea.vmem [#allocation4], 16
          %558 = vst [vmem:[%s557] sm:$0xff] %v556
          %s559 = scalar_lea.vmem [#allocation10], 8
          %v560 = vld [vmem:[%s559] sm:$0xff]
          %s561 = scalar_lea.vmem [#allocation4], 24
          %562 = vst [vmem:[%s561] sm:$0xff] %v560
        $region96: #{tpu_custom_call.1} parent=59 // pred_fallthru
          _
        %v563 = vld [vmem:[#allocation13] sm:$0xff]
        %v564 = vld [vmem:[#allocation13 + $0x8] sm:$0xff]
        %v565 = vld [vmem:[#allocation13 + $0x10] sm:$0xff]
        %v566 = vld [vmem:[#allocation13 + $0x18] sm:$0xff]
        %v567 = vld [vmem:[#allocation13 + $0x20] sm:$0xff]
        %v568 = vld [vmem:[#allocation13 + $0x28] sm:$0xff]
        %v569 = vld [vmem:[#allocation13 + $0x30] sm:$0xff]
        %v570 = vld [vmem:[#allocation13 + $0x38] sm:$0xff]
        %v571 = vld [vmem:[#allocation13 + $0x40] sm:$0xff]
        %v572 = vld [vmem:[#allocation13 + $0x48] sm:$0xff]
        %v573 = vld [vmem:[#allocation13 + $0x50] sm:$0xff]
        %v574 = vld [vmem:[#allocation13 + $0x58] sm:$0xff]
        %v575 = vld [vmem:[#allocation13 + $0x60] sm:$0xff]
        %v576 = vld [vmem:[#allocation13 + $0x68] sm:$0xff]
        %v577 = vld [vmem:[#allocation13 + $0x70] sm:$0xff]
        %v578 = vld [vmem:[#allocation13 + $0x78] sm:$0xff]
        %v579 = vld [vmem:[#allocation13 + $0x80] sm:$0xff]
        %v580 = vld [vmem:[#allocation13 + $0x88] sm:$0xff]
        %v581 = vld [vmem:[#allocation13 + $0x90] sm:$0xff]
        %v582 = vld [vmem:[#allocation13 + $0x98] sm:$0xff]
        %v583 = vld [vmem:[#allocation13 + $0xa0] sm:$0xff]
        %v584 = vld [vmem:[#allocation13 + $0xa8] sm:$0xff]
        %v585 = vld [vmem:[#allocation13 + $0xb0] sm:$0xff]
        %v586 = vld [vmem:[#allocation13 + $0xb8] sm:$0xff]
        %v587 = vld [vmem:[#allocation13 + $0xc0] sm:$0xff]
        %v588 = vld [vmem:[#allocation13 + $0xc8] sm:$0xff]
        %v589 = vld [vmem:[#allocation13 + $0xd0] sm:$0xff]
        %v590 = vld [vmem:[#allocation13 + $0xd8] sm:$0xff]
        %v591 = vld [vmem:[#allocation13 + $0xe0] sm:$0xff]
        %v592 = vld [vmem:[#allocation13 + $0xe8] sm:$0xff]
        %v593 = vld [vmem:[#allocation13 + $0xf0] sm:$0xff]
        %v594 = vld [vmem:[#allocation13 + $0xf8] sm:$0xff]
        %v595 = vld [vmem:[#allocation13 + $0x100] sm:$0xff]
        %v596 = vld [vmem:[#allocation13 + $0x108] sm:$0xff]
        %v597 = vld [vmem:[#allocation13 + $0x110] sm:$0xff]
        %v598 = vld [vmem:[#allocation13 + $0x118] sm:$0xff]
        %v599 = vld [vmem:[#allocation13 + $0x120] sm:$0xff]
        %v600 = vld [vmem:[#allocation13 + $0x128] sm:$0xff]
        %v601 = vld [vmem:[#allocation13 + $0x130] sm:$0xff]
        %v602 = vld [vmem:[#allocation13 + $0x138] sm:$0xff]
        %v603 = vld [vmem:[#allocation13 + $0x140] sm:$0xff]
        %v604 = vld [vmem:[#allocation13 + $0x148] sm:$0xff]
        %v605 = vld [vmem:[#allocation13 + $0x150] sm:$0xff]
        %v606 = vld [vmem:[#allocation13 + $0x158] sm:$0xff]
        %v607 = vld [vmem:[#allocation13 + $0x160] sm:$0xff]
        %v608 = vld [vmem:[#allocation13 + $0x168] sm:$0xff]
        %v609 = vld [vmem:[#allocation13 + $0x170] sm:$0xff]
        %v610 = vld [vmem:[#allocation13 + $0x178] sm:$0xff]
        %v611 = vld [vmem:[#allocation13 + $0x180] sm:$0xff]
        %v612 = vld [vmem:[#allocation13 + $0x188] sm:$0xff]
        %v613 = vld [vmem:[#allocation13 + $0x190] sm:$0xff]
        %v614 = vld [vmem:[#allocation13 + $0x198] sm:$0xff]
        %v615 = vld [vmem:[#allocation13 + $0x1a0] sm:$0xff]
        %v616 = vld [vmem:[#allocation13 + $0x1a8] sm:$0xff]
        %v617 = vld [vmem:[#allocation13 + $0x1b0] sm:$0xff]
        %v618 = vld [vmem:[#allocation13 + $0x1b8] sm:$0xff]
        %v619 = vld [vmem:[#allocation13 + $0x1c0] sm:$0xff]
        %v620 = vld [vmem:[#allocation13 + $0x1c8] sm:$0xff]
        %v621 = vld [vmem:[#allocation13 + $0x1d0] sm:$0xff]
        %v622 = vld [vmem:[#allocation13 + $0x1d8] sm:$0xff]
        %v623 = vld [vmem:[#allocation13 + $0x1e0] sm:$0xff]
        %v624 = vld [vmem:[#allocation13 + $0x1e8] sm:$0xff]
        %v625 = vld [vmem:[#allocation13 + $0x1f0] sm:$0xff]
        %v626 = vld [vmem:[#allocation13 + $0x1f8] sm:$0xff]
        %v627 = vld [vmem:[#allocation14] sm:$0xff]
        %v628 = vld [vmem:[#allocation14 + $0x8] sm:$0xff]
        %v629 = vld [vmem:[#allocation14 + $0x10] sm:$0xff]
        %v630 = vld [vmem:[#allocation14 + $0x18] sm:$0xff]
        %v631 = vld [vmem:[#allocation14 + $0x20] sm:$0xff]
        %v632 = vld [vmem:[#allocation14 + $0x28] sm:$0xff]
        %v633 = vld [vmem:[#allocation14 + $0x30] sm:$0xff]
        %v634 = vld [vmem:[#allocation14 + $0x38] sm:$0xff]
        %v635 = vld [vmem:[#allocation14 + $0x40] sm:$0xff]
        %v636 = vld [vmem:[#allocation14 + $0x48] sm:$0xff]
        %v637 = vld [vmem:[#allocation14 + $0x50] sm:$0xff]
        %v638 = vld [vmem:[#allocation14 + $0x58] sm:$0xff]
        %v639 = vld [vmem:[#allocation14 + $0x60] sm:$0xff]
        %v640 = vld [vmem:[#allocation14 + $0x68] sm:$0xff]
        %v641 = vld [vmem:[#allocation14 + $0x70] sm:$0xff]
        %v642 = vld [vmem:[#allocation14 + $0x78] sm:$0xff]
        %v643 = vld [vmem:[#allocation14 + $0x80] sm:$0xff]
        %v644 = vld [vmem:[#allocation14 + $0x88] sm:$0xff]
        %v645 = vld [vmem:[#allocation14 + $0x90] sm:$0xff]
        %v646 = vld [vmem:[#allocation14 + $0x98] sm:$0xff]
        %v647 = vld [vmem:[#allocation14 + $0xa0] sm:$0xff]
        %v648 = vld [vmem:[#allocation14 + $0xa8] sm:$0xff]
        %v649 = vld [vmem:[#allocation14 + $0xb0] sm:$0xff]
        %v650 = vld [vmem:[#allocation14 + $0xb8] sm:$0xff]
        %v651 = vld [vmem:[#allocation14 + $0xc0] sm:$0xff]
        %v652 = vld [vmem:[#allocation14 + $0xc8] sm:$0xff]
        %v653 = vld [vmem:[#allocation14 + $0xd0] sm:$0xff]
        %v654 = vld [vmem:[#allocation14 + $0xd8] sm:$0xff]
        %v655 = vld [vmem:[#allocation14 + $0xe0] sm:$0xff]
        %v656 = vld [vmem:[#allocation14 + $0xe8] sm:$0xff]
        %v657 = vld [vmem:[#allocation14 + $0xf0] sm:$0xff]
        %v658 = vld [vmem:[#allocation14 + $0xf8] sm:$0xff]
        %v659 = vld [vmem:[#allocation14 + $0x100] sm:$0xff]
        %v660 = vld [vmem:[#allocation14 + $0x108] sm:$0xff]
        %v661 = vld [vmem:[#allocation14 + $0x110] sm:$0xff]
        %v662 = vld [vmem:[#allocation14 + $0x118] sm:$0xff]
        %v663 = vld [vmem:[#allocation14 + $0x120] sm:$0xff]
        %v664 = vld [vmem:[#allocation14 + $0x128] sm:$0xff]
        %v665 = vld [vmem:[#allocation14 + $0x130] sm:$0xff]
        %v666 = vld [vmem:[#allocation14 + $0x138] sm:$0xff]
        %v667 = vld [vmem:[#allocation14 + $0x140] sm:$0xff]
        %v668 = vld [vmem:[#allocation14 + $0x148] sm:$0xff]
        %v669 = vld [vmem:[#allocation14 + $0x150] sm:$0xff]
        %v670 = vld [vmem:[#allocation14 + $0x158] sm:$0xff]
        %v671 = vld [vmem:[#allocation14 + $0x160] sm:$0xff]
        %v672 = vld [vmem:[#allocation14 + $0x168] sm:$0xff]
        %v673 = vld [vmem:[#allocation14 + $0x170] sm:$0xff]
        %v674 = vld [vmem:[#allocation14 + $0x178] sm:$0xff]
        %v675 = vld [vmem:[#allocation14 + $0x180] sm:$0xff]
        %v676 = vld [vmem:[#allocation14 + $0x188] sm:$0xff]
        %v677 = vld [vmem:[#allocation14 + $0x190] sm:$0xff]
        %v678 = vld [vmem:[#allocation14 + $0x198] sm:$0xff]
        %v679 = vld [vmem:[#allocation14 + $0x1a0] sm:$0xff]
        %v680 = vld [vmem:[#allocation14 + $0x1a8] sm:$0xff]
        %v681 = vld [vmem:[#allocation14 + $0x1b0] sm:$0xff]
        %v682 = vld [vmem:[#allocation14 + $0x1b8] sm:$0xff]
        %v683 = vld [vmem:[#allocation14 + $0x1c0] sm:$0xff]
        %v684 = vld [vmem:[#allocation14 + $0x1c8] sm:$0xff]
        %v685 = vld [vmem:[#allocation14 + $0x1d0] sm:$0xff]
        %v686 = vld [vmem:[#allocation14 + $0x1d8] sm:$0xff]
        %v687 = vld [vmem:[#allocation14 + $0x1e0] sm:$0xff]
        %v688 = vld [vmem:[#allocation14 + $0x1e8] sm:$0xff]
        %v689 = vld [vmem:[#allocation14 + $0x1f0] sm:$0xff]
        %v690 = vld [vmem:[#allocation14 + $0x1f8] sm:$0xff]
        %v691 = vld [vmem:[#allocation14 + $0x200] sm:$0xff]
        %v692 = vld [vmem:[#allocation14 + $0x208] sm:$0xff]
        %v693 = vld [vmem:[#allocation14 + $0x210] sm:$0xff]
        %v694 = vld [vmem:[#allocation14 + $0x218] sm:$0xff]
        %v695 = vld [vmem:[#allocation14 + $0x220] sm:$0xff]
        %v696 = vld [vmem:[#allocation14 + $0x228] sm:$0xff]
        %v697 = vld [vmem:[#allocation14 + $0x230] sm:$0xff]
        %v698 = vld [vmem:[#allocation14 + $0x238] sm:$0xff]
        %v699 = vld [vmem:[#allocation14 + $0x240] sm:$0xff]
        %v700 = vld [vmem:[#allocation14 + $0x248] sm:$0xff]
        %v701 = vld [vmem:[#allocation14 + $0x250] sm:$0xff]
        %v702 = vld [vmem:[#allocation14 + $0x258] sm:$0xff]
        %v703 = vld [vmem:[#allocation14 + $0x260] sm:$0xff]
        %v704 = vld [vmem:[#allocation14 + $0x268] sm:$0xff]
        %v705 = vld [vmem:[#allocation14 + $0x270] sm:$0xff]
        %v706 = vld [vmem:[#allocation14 + $0x278] sm:$0xff]
        %v707 = vld [vmem:[#allocation14 + $0x280] sm:$0xff]
        %v708 = vld [vmem:[#allocation14 + $0x288] sm:$0xff]
        %v709 = vld [vmem:[#allocation14 + $0x290] sm:$0xff]
        %v710 = vld [vmem:[#allocation14 + $0x298] sm:$0xff]
        %v711 = vld [vmem:[#allocation14 + $0x2a0] sm:$0xff]
        %v712 = vld [vmem:[#allocation14 + $0x2a8] sm:$0xff]
        %v713 = vld [vmem:[#allocation14 + $0x2b0] sm:$0xff]
        %v714 = vld [vmem:[#allocation14 + $0x2b8] sm:$0xff]
        %v715 = vld [vmem:[#allocation14 + $0x2c0] sm:$0xff]
        %v716 = vld [vmem:[#allocation14 + $0x2c8] sm:$0xff]
        %v717 = vld [vmem:[#allocation14 + $0x2d0] sm:$0xff]
        %v718 = vld [vmem:[#allocation14 + $0x2d8] sm:$0xff]
        %v719 = vld [vmem:[#allocation14 + $0x2e0] sm:$0xff]
        %v720 = vld [vmem:[#allocation14 + $0x2e8] sm:$0xff]
        %v721 = vld [vmem:[#allocation14 + $0x2f0] sm:$0xff]
        %v722 = vld [vmem:[#allocation14 + $0x2f8] sm:$0xff]
        %v723 = vld [vmem:[#allocation14 + $0x300] sm:$0xff]
        %v724 = vld [vmem:[#allocation14 + $0x308] sm:$0xff]
        %v725 = vld [vmem:[#allocation14 + $0x310] sm:$0xff]
        %v726 = vld [vmem:[#allocation14 + $0x318] sm:$0xff]
        %v727 = vld [vmem:[#allocation14 + $0x320] sm:$0xff]
        %v728 = vld [vmem:[#allocation14 + $0x328] sm:$0xff]
        %v729 = vld [vmem:[#allocation14 + $0x330] sm:$0xff]
        %v730 = vld [vmem:[#allocation14 + $0x338] sm:$0xff]
        %v731 = vld [vmem:[#allocation14 + $0x340] sm:$0xff]
        %v732 = vld [vmem:[#allocation14 + $0x348] sm:$0xff]
        %v733 = vld [vmem:[#allocation14 + $0x350] sm:$0xff]
        %v734 = vld [vmem:[#allocation14 + $0x358] sm:$0xff]
        %v735 = vld [vmem:[#allocation14 + $0x360] sm:$0xff]
        %v736 = vld [vmem:[#allocation14 + $0x368] sm:$0xff]
        %v737 = vld [vmem:[#allocation14 + $0x370] sm:$0xff]
        %v738 = vld [vmem:[#allocation14 + $0x378] sm:$0xff]
        %v739 = vld [vmem:[#allocation14 + $0x380] sm:$0xff]
        %v740 = vld [vmem:[#allocation14 + $0x388] sm:$0xff]
        %v741 = vld [vmem:[#allocation14 + $0x390] sm:$0xff]
        %v742 = vld [vmem:[#allocation14 + $0x398] sm:$0xff]
        %v743 = vld [vmem:[#allocation14 + $0x3a0] sm:$0xff]
        %v744 = vld [vmem:[#allocation14 + $0x3a8] sm:$0xff]
        %v745 = vld [vmem:[#allocation14 + $0x3b0] sm:$0xff]
        %v746 = vld [vmem:[#allocation14 + $0x3b8] sm:$0xff]
        %v747 = vld [vmem:[#allocation14 + $0x3c0] sm:$0xff]
        %v748 = vld [vmem:[#allocation14 + $0x3c8] sm:$0xff]
        %v749 = vld [vmem:[#allocation14 + $0x3d0] sm:$0xff]
        %v750 = vld [vmem:[#allocation14 + $0x3d8] sm:$0xff]
        %v751 = vld [vmem:[#allocation14 + $0x3e0] sm:$0xff]
        %v752 = vld [vmem:[#allocation14 + $0x3e8] sm:$0xff]
        %v753 = vld [vmem:[#allocation14 + $0x3f0] sm:$0xff]
        %v754 = vld [vmem:[#allocation14 + $0x3f8] sm:$0xff]
        %v755 = vld [vmem:[#allocation16] sm:$0xf]
        %v757 = vperm.slane %v755, 0
        %v758 = vperm.slane %v755, 1
        %v759 = vperm.slane %v755, 2
        %v760 = vperm.slane %v755, 3
        %v765 = vld [vmem:[%s467] sm:$0xff]
        %v766 = vld [vmem:[%s467 + $0x8] sm:$0xff]
        %v767 = vld [vmem:[%s467 + $0x10] sm:$0xff]
        %v768 = vld [vmem:[%s467 + $0x18] sm:$0xff]
        %v769 = vld [vmem:[%s467 + $0x20] sm:$0xff]
        %v770 = vld [vmem:[%s467 + $0x28] sm:$0xff]
        %v771 = vld [vmem:[%s467 + $0x30] sm:$0xff]
        %v772 = vld [vmem:[%s467 + $0x38] sm:$0xff]
        %v773 = vld [vmem:[#allocation11] sm:$0xff]
        %v774 = vld [vmem:[#allocation11 + $0x8] sm:$0xff]
        %v775 = vld [vmem:[#allocation11 + $0x10] sm:$0xff]
        %v776 = vld [vmem:[#allocation11 + $0x18] sm:$0xff]
        %v777 = vld [vmem:[#allocation11 + $0x20] sm:$0xff]
        %v778 = vld [vmem:[#allocation11 + $0x28] sm:$0xff]
        %v779 = vld [vmem:[#allocation11 + $0x30] sm:$0xff]
        %v780 = vld [vmem:[#allocation11 + $0x38] sm:$0xff]
        %v781 = vld [vmem:[#allocation11 + $0x40] sm:$0xff]
        %v782 = vld [vmem:[#allocation11 + $0x48] sm:$0xff]
        %v783 = vld [vmem:[#allocation11 + $0x50] sm:$0xff]
        %v784 = vld [vmem:[#allocation11 + $0x58] sm:$0xff]
        %v785 = vld [vmem:[#allocation11 + $0x60] sm:$0xff]
        %v786 = vld [vmem:[#allocation11 + $0x68] sm:$0xff]
        %v787 = vld [vmem:[#allocation11 + $0x70] sm:$0xff]
        %v788 = vld [vmem:[#allocation11 + $0x78] sm:$0xff]
        %v789 = vld [vmem:[#allocation11 + $0x80] sm:$0xff]
        %v790 = vld [vmem:[#allocation11 + $0x88] sm:$0xff]
        %v791 = vld [vmem:[#allocation11 + $0x90] sm:$0xff]
        %v792 = vld [vmem:[#allocation11 + $0x98] sm:$0xff]
        %v793 = vld [vmem:[#allocation11 + $0xa0] sm:$0xff]
        %v794 = vld [vmem:[#allocation11 + $0xa8] sm:$0xff]
        %v795 = vld [vmem:[#allocation11 + $0xb0] sm:$0xff]
        %v796 = vld [vmem:[#allocation11 + $0xb8] sm:$0xff]
        %v797 = vld [vmem:[#allocation11 + $0xc0] sm:$0xff]
        %v798 = vld [vmem:[#allocation11 + $0xc8] sm:$0xff]
        %v799 = vld [vmem:[#allocation11 + $0xd0] sm:$0xff]
        %v800 = vld [vmem:[#allocation11 + $0xd8] sm:$0xff]
        %v801 = vld [vmem:[#allocation11 + $0xe0] sm:$0xff]
        %v802 = vld [vmem:[#allocation11 + $0xe8] sm:$0xff]
        %v803 = vld [vmem:[#allocation11 + $0xf0] sm:$0xff]
        %v804 = vld [vmem:[#allocation11 + $0xf8] sm:$0xff]
        %v805 = vld [vmem:[%s5] sm:$0xf]
        %v807 = vperm.slane %v805, 0
        %v808 = vperm.slane %v805, 1
        %v809 = vperm.slane %v805, 2
        %v810 = vperm.slane %v805, 3
        %vm815 = vcmask 523264
        %v817 = vsel %vm815, %v765, 0
        %v820 = vsel %vm815, %v766, 0
        %v823 = vsel %vm815, %v767, 0
        %v826 = vsel %vm815, %v768, 0
        %v829 = vsel %vm815, %v769, 0
        %v832 = vsel %vm815, %v770, 0
        %v835 = vsel %vm815, %v771, 0
        %v838 = vsel %vm815, %v772, 0
        %840 = vmatpush.msra.mxu0 0.0
        %841 = vmatpush.msra.mxu0 0.0
        %842 = vmatpush.msra.mxu0 0.0
        %843 = vmatpush.msra.mxu0 0.0
        %844 = vmatpush.msra.mxu0 0.0
        %845 = vmatpush.msra.mxu0 0.0
        %846 = vmatpush.msra.mxu0 0.0
        %847 = vmatpush.msra.mxu0 0.0
        %848 = vmatpush.msra.mxu0 %v801
        %849 = vmatpush.msra.mxu0 %v797
        %850 = vmatpush.msra.mxu0 %v793
        %851 = vmatpush.msra.mxu0 %v789
        %852 = vmatpush.msra.mxu0 %v785
        %853 = vmatpush.msra.mxu0 %v781
        %854 = vmatpush.msra.mxu0 %v777
        %855 = vmatpush.msra.mxu0 %v773
        %856 = vmatmul.f32.gmra.mxu0 %v817
        %v857 = vpop.f32.mrf.mxu0
        %v858 = vadd.f32 %v807, %v857
        %859 = vmatmul.f32.gmra.mxu0 %v820
        %v860 = vpop.f32.mrf.mxu0
        %v861 = vadd.f32 %v807, %v860
        %862 = vmatmul.f32.gmra.mxu0 %v823
        %v863 = vpop.f32.mrf.mxu0
        %v864 = vadd.f32 %v807, %v863
        %865 = vmatmul.f32.gmra.mxu0 %v826
        %v866 = vpop.f32.mrf.mxu0
        %v867 = vadd.f32 %v807, %v866
        %868 = vmatmul.f32.gmra.mxu0 %v829
        %v869 = vpop.f32.mrf.mxu0
        %v870 = vadd.f32 %v807, %v869
        %871 = vmatmul.f32.gmra.mxu0 %v832
        %v872 = vpop.f32.mrf.mxu0
        %v873 = vadd.f32 %v807, %v872
        %874 = vmatmul.f32.gmra.mxu0 %v835
        %v875 = vpop.f32.mrf.mxu0
        %v876 = vadd.f32 %v807, %v875
        %877 = vmatmul.f32.gmra.mxu0 %v838
        %v878 = vpop.f32.mrf.mxu0
        %v879 = vadd.f32 %v807, %v878
        %880 = vdwg.mxu0
        %881 = vmatpush.msra.mxu0 0.0
        %882 = vmatpush.msra.mxu0 0.0
        %883 = vmatpush.msra.mxu0 0.0
        %884 = vmatpush.msra.mxu0 0.0
        %885 = vmatpush.msra.mxu0 0.0
        %886 = vmatpush.msra.mxu0 0.0
        %887 = vmatpush.msra.mxu0 0.0
        %888 = vmatpush.msra.mxu0 0.0
        %889 = vmatpush.msra.mxu0 %v802
        %890 = vmatpush.msra.mxu0 %v798
        %891 = vmatpush.msra.mxu0 %v794
        %892 = vmatpush.msra.mxu0 %v790
        %893 = vmatpush.msra.mxu0 %v786
        %894 = vmatpush.msra.mxu0 %v782
        %895 = vmatpush.msra.mxu0 %v778
        %896 = vmatpush.msra.mxu0 %v774
        %897 = vmatmul.f32.gmra.mxu0 %v817
        %v898 = vpop.f32.mrf.mxu0
        %v899 = vadd.f32 %v808, %v898
        %900 = vmatmul.f32.gmra.mxu0 %v820
        %v901 = vpop.f32.mrf.mxu0
        %v902 = vadd.f32 %v808, %v901
        %903 = vmatmul.f32.gmra.mxu0 %v823
        %v904 = vpop.f32.mrf.mxu0
        %v905 = vadd.f32 %v808, %v904
        %906 = vmatmul.f32.gmra.mxu0 %v826
        %v907 = vpop.f32.mrf.mxu0
        %v908 = vadd.f32 %v808, %v907
        %909 = vmatmul.f32.gmra.mxu0 %v829
        %v910 = vpop.f32.mrf.mxu0
        %v911 = vadd.f32 %v808, %v910
        %912 = vmatmul.f32.gmra.mxu0 %v832
        %v913 = vpop.f32.mrf.mxu0
        %v914 = vadd.f32 %v808, %v913
        %915 = vmatmul.f32.gmra.mxu0 %v835
        %v916 = vpop.f32.mrf.mxu0
        %v917 = vadd.f32 %v808, %v916
        %918 = vmatmul.f32.gmra.mxu0 %v838
        %v919 = vpop.f32.mrf.mxu0
        %v920 = vadd.f32 %v808, %v919
        %921 = vdwg.mxu0
        %922 = vmatpush.msra.mxu0 0.0
        %923 = vmatpush.msra.mxu0 0.0
        %924 = vmatpush.msra.mxu0 0.0
        %925 = vmatpush.msra.mxu0 0.0
        %926 = vmatpush.msra.mxu0 0.0
        %927 = vmatpush.msra.mxu0 0.0
        %928 = vmatpush.msra.mxu0 0.0
        %929 = vmatpush.msra.mxu0 0.0
        %930 = vmatpush.msra.mxu0 %v803
        %931 = vmatpush.msra.mxu0 %v799
        %932 = vmatpush.msra.mxu0 %v795
        %933 = vmatpush.msra.mxu0 %v791
        %934 = vmatpush.msra.mxu0 %v787
        %935 = vmatpush.msra.mxu0 %v783
        %936 = vmatpush.msra.mxu0 %v779
        %937 = vmatpush.msra.mxu0 %v775
        %938 = vmatmul.f32.gmra.mxu0 %v817
        %v939 = vpop.f32.mrf.mxu0
        %v940 = vadd.f32 %v809, %v939
        %941 = vmatmul.f32.gmra.mxu0 %v820
        %v942 = vpop.f32.mrf.mxu0
        %v943 = vadd.f32 %v809, %v942
        %944 = vmatmul.f32.gmra.mxu0 %v823
        %v945 = vpop.f32.mrf.mxu0
        %v946 = vadd.f32 %v809, %v945
        %947 = vmatmul.f32.gmra.mxu0 %v826
        %v948 = vpop.f32.mrf.mxu0
        %v949 = vadd.f32 %v809, %v948
        %950 = vmatmul.f32.gmra.mxu0 %v829
        %v951 = vpop.f32.mrf.mxu0
        %v952 = vadd.f32 %v809, %v951
        %953 = vmatmul.f32.gmra.mxu0 %v832
        %v954 = vpop.f32.mrf.mxu0
        %v955 = vadd.f32 %v809, %v954
        %956 = vmatmul.f32.gmra.mxu0 %v835
        %v957 = vpop.f32.mrf.mxu0
        %v958 = vadd.f32 %v809, %v957
        %959 = vmatmul.f32.gmra.mxu0 %v838
        %v960 = vpop.f32.mrf.mxu0
        %v961 = vadd.f32 %v809, %v960
        %962 = vdwg.mxu0
        %963 = vmatpush.msra.mxu0 0.0
        %964 = vmatpush.msra.mxu0 0.0
        %965 = vmatpush.msra.mxu0 0.0
        %966 = vmatpush.msra.mxu0 0.0
        %967 = vmatpush.msra.mxu0 0.0
        %968 = vmatpush.msra.mxu0 0.0
        %969 = vmatpush.msra.mxu0 0.0
        %970 = vmatpush.msra.mxu0 0.0
        %971 = vmatpush.msra.mxu0 %v804
        %972 = vmatpush.msra.mxu0 %v800
        %973 = vmatpush.msra.mxu0 %v796
        %974 = vmatpush.msra.mxu0 %v792
        %975 = vmatpush.msra.mxu0 %v788
        %976 = vmatpush.msra.mxu0 %v784
        %977 = vmatpush.msra.mxu0 %v780
        %978 = vmatpush.msra.mxu0 %v776
        %979 = vmatmul.f32.gmra.mxu0 %v817
        %v980 = vpop.f32.mrf.mxu0
        %v981 = vadd.f32 %v810, %v980
        %982 = vmatmul.f32.gmra.mxu0 %v820
        %v983 = vpop.f32.mrf.mxu0
        %v984 = vadd.f32 %v810, %v983
        %985 = vmatmul.f32.gmra.mxu0 %v823
        %v986 = vpop.f32.mrf.mxu0
        %v987 = vadd.f32 %v810, %v986
        %988 = vmatmul.f32.gmra.mxu0 %v826
        %v989 = vpop.f32.mrf.mxu0
        %v990 = vadd.f32 %v810, %v989
        %991 = vmatmul.f32.gmra.mxu0 %v829
        %v992 = vpop.f32.mrf.mxu0
        %v993 = vadd.f32 %v810, %v992
        %994 = vmatmul.f32.gmra.mxu0 %v832
        %v995 = vpop.f32.mrf.mxu0
        %v996 = vadd.f32 %v810, %v995
        %997 = vmatmul.f32.gmra.mxu0 %v835
        %v998 = vpop.f32.mrf.mxu0
        %v999 = vadd.f32 %v810, %v998
        %1000 = vmatmul.f32.gmra.mxu0 %v838
        %v1001 = vpop.f32.mrf.mxu0
        %v1002 = vadd.f32 %v810, %v1001
        %1003 = vdwg.mxu0
        %1004 = vst [vmem:[#allocation2] sm:$0xff] %v858
        %1005 = vst [vmem:[#allocation2 + $0x8] sm:$0xff] %v899
        %1006 = vst [vmem:[#allocation2 + $0x10] sm:$0xff] %v940
        %1007 = vst [vmem:[#allocation2 + $0x18] sm:$0xff] %v981
        %1008 = vst [vmem:[#allocation2 + $0x20] sm:$0xff] %v861
        %1009 = vst [vmem:[#allocation2 + $0x28] sm:$0xff] %v902
        %1010 = vst [vmem:[#allocation2 + $0x30] sm:$0xff] %v943
        %1011 = vst [vmem:[#allocation2 + $0x38] sm:$0xff] %v984
        %1012 = vst [vmem:[#allocation2 + $0x40] sm:$0xff] %v864
        %1013 = vst [vmem:[#allocation2 + $0x48] sm:$0xff] %v905
        %1014 = vst [vmem:[#allocation2 + $0x50] sm:$0xff] %v946
        %1015 = vst [vmem:[#allocation2 + $0x58] sm:$0xff] %v987
        %1016 = vst [vmem:[#allocation2 + $0x60] sm:$0xff] %v867
        %1017 = vst [vmem:[#allocation2 + $0x68] sm:$0xff] %v908
        %1018 = vst [vmem:[#allocation2 + $0x70] sm:$0xff] %v949
        %1019 = vst [vmem:[#allocation2 + $0x78] sm:$0xff] %v990
        %1020 = vst [vmem:[#allocation2 + $0x80] sm:$0xff] %v870
        %1021 = vst [vmem:[#allocation2 + $0x88] sm:$0xff] %v911
        %1022 = vst [vmem:[#allocation2 + $0x90] sm:$0xff] %v952
        %1023 = vst [vmem:[#allocation2 + $0x98] sm:$0xff] %v993
        %1024 = vst [vmem:[#allocation2 + $0xa0] sm:$0xff] %v873
        %1025 = vst [vmem:[#allocation2 + $0xa8] sm:$0xff] %v914
        %1026 = vst [vmem:[#allocation2 + $0xb0] sm:$0xff] %v955
        %1027 = vst [vmem:[#allocation2 + $0xb8] sm:$0xff] %v996
        %1028 = vst [vmem:[#allocation2 + $0xc0] sm:$0xff] %v876
        %1029 = vst [vmem:[#allocation2 + $0xc8] sm:$0xff] %v917
        %1030 = vst [vmem:[#allocation2 + $0xd0] sm:$0xff] %v958
        %1031 = vst [vmem:[#allocation2 + $0xd8] sm:$0xff] %v999
        %1032 = vst [vmem:[#allocation2 + $0xe0] sm:$0xff] %v879
        %1033 = vst [vmem:[#allocation2 + $0xe8] sm:$0xff] %v920
        %1034 = vst [vmem:[#allocation2 + $0xf0] sm:$0xff] %v961
        %1035 = vst [vmem:[#allocation2 + $0xf8] sm:$0xff] %v1002
        %v1036 = vld [vmem:[#allocation4] sm:$0xff]
        %s1037 = scalar_lea.vmem [#allocation4], 8
        %v1038 = vld [vmem:[%s1037] sm:$0xff]
        %s1039 = scalar_lea.vmem [#allocation4], 16
        %v1040 = vld [vmem:[%s1039] sm:$0xff]
        %s1041 = scalar_lea.vmem [#allocation4], 24
        %v1042 = vld [vmem:[%s1041] sm:$0xff]
        %v1043 = vld [vmem:[#allocation2] sm:$0xff]
        %v1044 = vld [vmem:[#allocation2 + $0x8] sm:$0xff]
        %v1045 = vld [vmem:[#allocation2 + $0x10] sm:$0xff]
        %v1046 = vld [vmem:[#allocation2 + $0x18] sm:$0xff]
        %1047 = vmatpush.msra.mxu0 %v623
        %1048 = vmatpush.msra.mxu0 %v619
        %1049 = vmatpush.msra.mxu0 %v615
        %1050 = vmatpush.msra.mxu0 %v611
        %1051 = vmatpush.msra.mxu0 %v607
        %1052 = vmatpush.msra.mxu0 %v603
        %1053 = vmatpush.msra.mxu0 %v599
        %1054 = vmatpush.msra.mxu0 %v595
        %1055 = vmatpush.msra.mxu0 %v591
        %1056 = vmatpush.msra.mxu0 %v587
        %1057 = vmatpush.msra.mxu0 %v583
        %1058 = vmatpush.msra.mxu0 %v579
        %1059 = vmatpush.msra.mxu0 %v575
        %1060 = vmatpush.msra.mxu0 %v571
        %1061 = vmatpush.msra.mxu0 %v567
        %1062 = vmatpush.msra.mxu0 %v563
        %1063 = vmatmul.f32.gmra.mxu0 %v1036
        %v1064 = vpop.f32.mrf.mxu0
        %v1065 = vadd.f32 0.0, %v1064
        %1066 = vdwg.mxu0
        %1067 = vmatpush.msra.mxu0 %v624
        %1068 = vmatpush.msra.mxu0 %v620
        %1069 = vmatpush.msra.mxu0 %v616
        %1070 = vmatpush.msra.mxu0 %v612
        %1071 = vmatpush.msra.mxu0 %v608
        %1072 = vmatpush.msra.mxu0 %v604
        %1073 = vmatpush.msra.mxu0 %v600
        %1074 = vmatpush.msra.mxu0 %v596
        %1075 = vmatpush.msra.mxu0 %v592
        %1076 = vmatpush.msra.mxu0 %v588
        %1077 = vmatpush.msra.mxu0 %v584
        %1078 = vmatpush.msra.mxu0 %v580
        %1079 = vmatpush.msra.mxu0 %v576
        %1080 = vmatpush.msra.mxu0 %v572
        %1081 = vmatpush.msra.mxu0 %v568
        %1082 = vmatpush.msra.mxu0 %v564
        %1083 = vmatmul.f32.gmra.mxu0 %v1036
        %v1084 = vpop.f32.mrf.mxu0
        %v1085 = vadd.f32 0.0, %v1084
        %1086 = vdwg.mxu0
        %1087 = vmatpush.msra.mxu0 %v625
        %1088 = vmatpush.msra.mxu0 %v621
        %1089 = vmatpush.msra.mxu0 %v617
        %1090 = vmatpush.msra.mxu0 %v613
        %1091 = vmatpush.msra.mxu0 %v609
        %1092 = vmatpush.msra.mxu0 %v605
        %1093 = vmatpush.msra.mxu0 %v601
        %1094 = vmatpush.msra.mxu0 %v597
        %1095 = vmatpush.msra.mxu0 %v593
        %1096 = vmatpush.msra.mxu0 %v589
        %1097 = vmatpush.msra.mxu0 %v585
        %1098 = vmatpush.msra.mxu0 %v581
        %1099 = vmatpush.msra.mxu0 %v577
        %1100 = vmatpush.msra.mxu0 %v573
        %1101 = vmatpush.msra.mxu0 %v569
        %1102 = vmatpush.msra.mxu0 %v565
        %1103 = vmatmul.f32.gmra.mxu0 %v1036
        %v1104 = vpop.f32.mrf.mxu0
        %v1105 = vadd.f32 0.0, %v1104
        %1106 = vdwg.mxu0
        %1107 = vmatpush.msra.mxu0 %v626
        %1108 = vmatpush.msra.mxu0 %v622
        %1109 = vmatpush.msra.mxu0 %v618
        %1110 = vmatpush.msra.mxu0 %v614
        %1111 = vmatpush.msra.mxu0 %v610
        %1112 = vmatpush.msra.mxu0 %v606
        %1113 = vmatpush.msra.mxu0 %v602
        %1114 = vmatpush.msra.mxu0 %v598
        %1115 = vmatpush.msra.mxu0 %v594
        %1116 = vmatpush.msra.mxu0 %v590
        %1117 = vmatpush.msra.mxu0 %v586
        %1118 = vmatpush.msra.mxu0 %v582
        %1119 = vmatpush.msra.mxu0 %v578
        %1120 = vmatpush.msra.mxu0 %v574
        %1121 = vmatpush.msra.mxu0 %v570
        %1122 = vmatpush.msra.mxu0 %v566
        %1123 = vmatmul.f32.gmra.mxu0 %v1036
        %v1124 = vpop.f32.mrf.mxu0
        %v1125 = vadd.f32 0.0, %v1124
        %1126 = vdwg.mxu0
        %v1127 = vadd.f32 %v1043, %v1065
        %v1128 = vadd.f32 %v1044, %v1085
        %v1129 = vadd.f32 %v1045, %v1105
        %v1130 = vadd.f32 %v1046, %v1125
        %v1131 = vxor.u32 %v1127, 2147483648
        %v1132 = vmul.f32 %v1131, 1.442695
        %v1133 = vpow.pop %v1132
        %v1134 = vadd.f32 %v1133, 1.0
        %v1135 = vrcp.pop %v1134
        %v1136 = vmul.f32 %v1134, %v1135
        %v1137 = vsub.f32 1.0, %v1136
        %v1138 = vmul.f32 %v1135, %v1137
        %v1139 = vadd.f32 %v1135, %v1138
        %vm1140 = vweird.f32 %v1134
        %vm1141 = vweird.f32 %v1135
        %vm1142 = vmor %vm1140, %vm1141
        %v1143 = vsel %vm1142, %v1135, %v1139
        %v1144 = vand.u32 2147483647, %v1134
        %vm1145 = vcmp.eq.f32.partialorder %v1144, 8.507059e+37
        %v1146 = vand.u32 %v1134, 2147483648
        %v1147 = vor.u32 1.1754944e-38, %v1146
        %v1148 = vsel %vm1145, %v1147, %v1143
        %v1149 = vmul.f32 1.0, %v1148
        %v1150 = vxor.u32 %v1128, 2147483648
        %v1151 = vmul.f32 %v1150, 1.442695
        %v1152 = vpow.pop %v1151
        %v1153 = vadd.f32 %v1152, 1.0
        %v1154 = vrcp.pop %v1153
        %v1155 = vmul.f32 %v1153, %v1154
        %v1156 = vsub.f32 1.0, %v1155
        %v1157 = vmul.f32 %v1154, %v1156
        %v1158 = vadd.f32 %v1154, %v1157
        %vm1159 = vweird.f32 %v1153
        %vm1160 = vweird.f32 %v1154
        %vm1161 = vmor %vm1159, %vm1160
        %v1162 = vsel %vm1161, %v1154, %v1158
        %v1163 = vand.u32 2147483647, %v1153
        %vm1164 = vcmp.eq.f32.partialorder %v1163, 8.507059e+37
        %v1165 = vand.u32 %v1153, 2147483648
        %v1166 = vor.u32 1.1754944e-38, %v1165
        %v1167 = vsel %vm1164, %v1166, %v1162
        %v1168 = vmul.f32 1.0, %v1167
        %v1169 = vtanh.pop %v1129
        %v1170 = vxor.u32 %v1130, 2147483648
        %v1171 = vmul.f32 %v1170, 1.442695
        %v1172 = vpow.pop %v1171
        %v1173 = vadd.f32 %v1172, 1.0
        %v1174 = vrcp.pop %v1173
        %v1175 = vmul.f32 %v1173, %v1174
        %v1176 = vsub.f32 1.0, %v1175
        %v1177 = vmul.f32 %v1174, %v1176
        %v1178 = vadd.f32 %v1174, %v1177
        %vm1179 = vweird.f32 %v1173
        %vm1180 = vweird.f32 %v1174
        %vm1181 = vmor %vm1179, %vm1180
        %v1182 = vsel %vm1181, %v1174, %v1178
        %v1183 = vand.u32 2147483647, %v1173
        %vm1184 = vcmp.eq.f32.partialorder %v1183, 8.507059e+37
        %v1185 = vand.u32 %v1173, 2147483648
        %v1186 = vor.u32 1.1754944e-38, %v1185
        %v1187 = vsel %vm1184, %v1186, %v1182
        %v1188 = vmul.f32 1.0, %v1187
        %v1189 = vmul.f32 %v1168, %v1038
        %v1190 = vmul.f32 %v1149, %v1169
        %v1191 = vadd.f32 %v1189, %v1190
        %v1192 = vtanh.pop %v1191
        %v1193 = vmul.f32 %v1188, %v1192
        %1194 = vmatpush.msra.mxu0 %v687
        %1195 = vmatpush.msra.mxu0 %v683
        %1196 = vmatpush.msra.mxu0 %v679
        %1197 = vmatpush.msra.mxu0 %v675
        %1198 = vmatpush.msra.mxu0 %v671
        %1199 = vmatpush.msra.mxu0 %v667
        %1200 = vmatpush.msra.mxu0 %v663
        %1201 = vmatpush.msra.mxu0 %v659
        %1202 = vmatpush.msra.mxu0 %v655
        %1203 = vmatpush.msra.mxu0 %v651
        %1204 = vmatpush.msra.mxu0 %v647
        %1205 = vmatpush.msra.mxu0 %v643
        %1206 = vmatpush.msra.mxu0 %v639
        %1207 = vmatpush.msra.mxu0 %v635
        %1208 = vmatpush.msra.mxu0 %v631
        %1209 = vmatpush.msra.mxu0 %v627
        %1210 = vmatmul.f32.gmra.mxu0 %v1193
        %v1211 = vpop.f32.mrf.mxu0
        %v1212 = vadd.f32 %v757, %v1211
        %1213 = vdwg.mxu0
        %1214 = vmatpush.msra.mxu0 %v751
        %1215 = vmatpush.msra.mxu0 %v747
        %1216 = vmatpush.msra.mxu0 %v743
        %1217 = vmatpush.msra.mxu0 %v739
        %1218 = vmatpush.msra.mxu0 %v735
        %1219 = vmatpush.msra.mxu0 %v731
        %1220 = vmatpush.msra.mxu0 %v727
        %1221 = vmatpush.msra.mxu0 %v723
        %1222 = vmatpush.msra.mxu0 %v719
        %1223 = vmatpush.msra.mxu0 %v715
        %1224 = vmatpush.msra.mxu0 %v711
        %1225 = vmatpush.msra.mxu0 %v707
        %1226 = vmatpush.msra.mxu0 %v703
        %1227 = vmatpush.msra.mxu0 %v699
        %1228 = vmatpush.msra.mxu0 %v695
        %1229 = vmatpush.msra.mxu0 %v691
        %1230 = vmatmul.f32.gmra.mxu0 %v1040
        %v1231 = vpop.f32.mrf.mxu0
        %v1232 = vadd.f32 %v1212, %v1231
        %1233 = vdwg.mxu0
        %1234 = vmatpush.msra.mxu0 %v688
        %1235 = vmatpush.msra.mxu0 %v684
        %1236 = vmatpush.msra.mxu0 %v680
        %1237 = vmatpush.msra.mxu0 %v676
        %1238 = vmatpush.msra.mxu0 %v672
        %1239 = vmatpush.msra.mxu0 %v668
        %1240 = vmatpush.msra.mxu0 %v664
        %1241 = vmatpush.msra.mxu0 %v660
        %1242 = vmatpush.msra.mxu0 %v656
        %1243 = vmatpush.msra.mxu0 %v652
        %1244 = vmatpush.msra.mxu0 %v648
        %1245 = vmatpush.msra.mxu0 %v644
        %1246 = vmatpush.msra.mxu0 %v640
        %1247 = vmatpush.msra.mxu0 %v636
        %1248 = vmatpush.msra.mxu0 %v632
        %1249 = vmatpush.msra.mxu0 %v628
        %1250 = vmatmul.f32.gmra.mxu0 %v1193
        %v1251 = vpop.f32.mrf.mxu0
        %v1252 = vadd.f32 %v758, %v1251
        %1253 = vdwg.mxu0
        %1254 = vmatpush.msra.mxu0 %v752
        %1255 = vmatpush.msra.mxu0 %v748
        %1256 = vmatpush.msra.mxu0 %v744
        %1257 = vmatpush.msra.mxu0 %v740
        %1258 = vmatpush.msra.mxu0 %v736
        %1259 = vmatpush.msra.mxu0 %v732
        %1260 = vmatpush.msra.mxu0 %v728
        %1261 = vmatpush.msra.mxu0 %v724
        %1262 = vmatpush.msra.mxu0 %v720
        %1263 = vmatpush.msra.mxu0 %v716
        %1264 = vmatpush.msra.mxu0 %v712
        %1265 = vmatpush.msra.mxu0 %v708
        %1266 = vmatpush.msra.mxu0 %v704
        %1267 = vmatpush.msra.mxu0 %v700
        %1268 = vmatpush.msra.mxu0 %v696
        %1269 = vmatpush.msra.mxu0 %v692
        %1270 = vmatmul.f32.gmra.mxu0 %v1040
        %v1271 = vpop.f32.mrf.mxu0
        %v1272 = vadd.f32 %v1252, %v1271
        %1273 = vdwg.mxu0
        %1274 = vmatpush.msra.mxu0 %v689
        %1275 = vmatpush.msra.mxu0 %v685
        %1276 = vmatpush.msra.mxu0 %v681
        %1277 = vmatpush.msra.mxu0 %v677
        %1278 = vmatpush.msra.mxu0 %v673
        %1279 = vmatpush.msra.mxu0 %v669
        %1280 = vmatpush.msra.mxu0 %v665
        %1281 = vmatpush.msra.mxu0 %v661
        %1282 = vmatpush.msra.mxu0 %v657
        %1283 = vmatpush.msra.mxu0 %v653
        %1284 = vmatpush.msra.mxu0 %v649
        %1285 = vmatpush.msra.mxu0 %v645
        %1286 = vmatpush.msra.mxu0 %v641
        %1287 = vmatpush.msra.mxu0 %v637
        %1288 = vmatpush.msra.mxu0 %v633
        %1289 = vmatpush.msra.mxu0 %v629
        %1290 = vmatmul.f32.gmra.mxu0 %v1193
        %v1291 = vpop.f32.mrf.mxu0
        %v1292 = vadd.f32 %v759, %v1291
        %1293 = vdwg.mxu0
        %1294 = vmatpush.msra.mxu0 %v753
        %1295 = vmatpush.msra.mxu0 %v749
        %1296 = vmatpush.msra.mxu0 %v745
        %1297 = vmatpush.msra.mxu0 %v741
        %1298 = vmatpush.msra.mxu0 %v737
        %1299 = vmatpush.msra.mxu0 %v733
        %1300 = vmatpush.msra.mxu0 %v729
        %1301 = vmatpush.msra.mxu0 %v725
        %1302 = vmatpush.msra.mxu0 %v721
        %1303 = vmatpush.msra.mxu0 %v717
        %1304 = vmatpush.msra.mxu0 %v713
        %1305 = vmatpush.msra.mxu0 %v709
        %1306 = vmatpush.msra.mxu0 %v705
        %1307 = vmatpush.msra.mxu0 %v701
        %1308 = vmatpush.msra.mxu0 %v697
        %1309 = vmatpush.msra.mxu0 %v693
        %1310 = vmatmul.f32.gmra.mxu0 %v1040
        %v1311 = vpop.f32.mrf.mxu0
        %v1312 = vadd.f32 %v1292, %v1311
        %1313 = vdwg.mxu0
        %1314 = vmatpush.msra.mxu0 %v690
        %1315 = vmatpush.msra.mxu0 %v686
        %1316 = vmatpush.msra.mxu0 %v682
        %1317 = vmatpush.msra.mxu0 %v678
        %1318 = vmatpush.msra.mxu0 %v674
        %1319 = vmatpush.msra.mxu0 %v670
        %1320 = vmatpush.msra.mxu0 %v666
        %1321 = vmatpush.msra.mxu0 %v662
        %1322 = vmatpush.msra.mxu0 %v658
        %1323 = vmatpush.msra.mxu0 %v654
        %1324 = vmatpush.msra.mxu0 %v650
        %1325 = vmatpush.msra.mxu0 %v646
        %1326 = vmatpush.msra.mxu0 %v642
        %1327 = vmatpush.msra.mxu0 %v638
        %1328 = vmatpush.msra.mxu0 %v634
        %1329 = vmatpush.msra.mxu0 %v630
        %1330 = vmatmul.f32.gmra.mxu0 %v1193
        %v1331 = vpop.f32.mrf.mxu0
        %v1332 = vadd.f32 %v760, %v1331
        %1333 = vdwg.mxu0
        %1334 = vmatpush.msra.mxu0 %v754
        %1335 = vmatpush.msra.mxu0 %v750
        %1336 = vmatpush.msra.mxu0 %v746
        %1337 = vmatpush.msra.mxu0 %v742
        %1338 = vmatpush.msra.mxu0 %v738
        %1339 = vmatpush.msra.mxu0 %v734
        %1340 = vmatpush.msra.mxu0 %v730
        %1341 = vmatpush.msra.mxu0 %v726
        %1342 = vmatpush.msra.mxu0 %v722
        %1343 = vmatpush.msra.mxu0 %v718
        %1344 = vmatpush.msra.mxu0 %v714
        %1345 = vmatpush.msra.mxu0 %v710
        %1346 = vmatpush.msra.mxu0 %v706
        %1347 = vmatpush.msra.mxu0 %v702
        %1348 = vmatpush.msra.mxu0 %v698
        %1349 = vmatpush.msra.mxu0 %v694
        %1350 = vmatmul.f32.gmra.mxu0 %v1040
        %v1351 = vpop.f32.mrf.mxu0
        %v1352 = vadd.f32 %v1332, %v1351
        %1353 = vdwg.mxu0
        %v1354 = vxor.u32 %v1232, 2147483648
        %v1355 = vmul.f32 %v1354, 1.442695
        %v1356 = vpow.pop %v1355
        %v1357 = vadd.f32 %v1356, 1.0
        %v1358 = vrcp.pop %v1357
        %v1359 = vmul.f32 %v1357, %v1358
        %v1360 = vsub.f32 1.0, %v1359
        %v1361 = vmul.f32 %v1358, %v1360
        %v1362 = vadd.f32 %v1358, %v1361
        %vm1363 = vweird.f32 %v1357
        %vm1364 = vweird.f32 %v1358
        %vm1365 = vmor %vm1363, %vm1364
        %v1366 = vsel %vm1365, %v1358, %v1362
        %v1367 = vand.u32 2147483647, %v1357
        %vm1368 = vcmp.eq.f32.partialorder %v1367, 8.507059e+37
        %v1369 = vand.u32 %v1357, 2147483648
        %v1370 = vor.u32 1.1754944e-38, %v1369
        %v1371 = vsel %vm1368, %v1370, %v1366
        %v1372 = vmul.f32 1.0, %v1371
        %v1373 = vxor.u32 %v1272, 2147483648
        %v1374 = vmul.f32 %v1373, 1.442695
        %v1375 = vpow.pop %v1374
        %v1376 = vadd.f32 %v1375, 1.0
        %v1377 = vrcp.pop %v1376
        %v1378 = vmul.f32 %v1376, %v1377
        %v1379 = vsub.f32 1.0, %v1378
        %v1380 = vmul.f32 %v1377, %v1379
        %v1381 = vadd.f32 %v1377, %v1380
        %vm1382 = vweird.f32 %v1376
        %vm1383 = vweird.f32 %v1377
        %vm1384 = vmor %vm1382, %vm1383
        %v1385 = vsel %vm1384, %v1377, %v1381
        %v1386 = vand.u32 2147483647, %v1376
        %vm1387 = vcmp.eq.f32.partialorder %v1386, 8.507059e+37
        %v1388 = vand.u32 %v1376, 2147483648
        %v1389 = vor.u32 1.1754944e-38, %v1388
        %v1390 = vsel %vm1387, %v1389, %v1385
        %v1391 = vmul.f32 1.0, %v1390
        %v1392 = vtanh.pop %v1312
        %v1393 = vxor.u32 %v1352, 2147483648
        %v1394 = vmul.f32 %v1393, 1.442695
        %v1395 = vpow.pop %v1394
        %v1396 = vadd.f32 %v1395, 1.0
        %v1397 = vrcp.pop %v1396
        %v1398 = vmul.f32 %v1396, %v1397
        %v1399 = vsub.f32 1.0, %v1398
        %v1400 = vmul.f32 %v1397, %v1399
        %v1401 = vadd.f32 %v1397, %v1400
        %vm1402 = vweird.f32 %v1396
        %vm1403 = vweird.f32 %v1397
        %vm1404 = vmor %vm1402, %vm1403
        %v1405 = vsel %vm1404, %v1397, %v1401
        %v1406 = vand.u32 2147483647, %v1396
        %vm1407 = vcmp.eq.f32.partialorder %v1406, 8.507059e+37
        %v1408 = vand.u32 %v1396, 2147483648
        %v1409 = vor.u32 1.1754944e-38, %v1408
        %v1410 = vsel %vm1407, %v1409, %v1405
        %v1411 = vmul.f32 1.0, %v1410
        %v1412 = vmul.f32 %v1391, %v1042
        %v1413 = vmul.f32 %v1372, %v1392
        %v1414 = vadd.f32 %v1412, %v1413
        %v1415 = vtanh.pop %v1414
        %v1416 = vmul.f32 %v1411, %v1415
        %1417 = vst [vmem:[#allocation3] sm:$0xff] %v1416
        %s1418 = scalar_lea.vmem [#allocation2], 32
        %v1419 = vld [vmem:[%s1418] sm:$0xff]
        %v1420 = vld [vmem:[%s1418 + $0x8] sm:$0xff]
        %v1421 = vld [vmem:[%s1418 + $0x10] sm:$0xff]
        %v1422 = vld [vmem:[%s1418 + $0x18] sm:$0xff]
        %1423 = vmatpush.msra.mxu0 %v623
        %1424 = vmatpush.msra.mxu0 %v619
        %1425 = vmatpush.msra.mxu0 %v615
        %1426 = vmatpush.msra.mxu0 %v611
        %1427 = vmatpush.msra.mxu0 %v607
        %1428 = vmatpush.msra.mxu0 %v603
        %1429 = vmatpush.msra.mxu0 %v599
        %1430 = vmatpush.msra.mxu0 %v595
        %1431 = vmatpush.msra.mxu0 %v591
        %1432 = vmatpush.msra.mxu0 %v587
        %1433 = vmatpush.msra.mxu0 %v583
        %1434 = vmatpush.msra.mxu0 %v579
        %1435 = vmatpush.msra.mxu0 %v575
        %1436 = vmatpush.msra.mxu0 %v571
        %1437 = vmatpush.msra.mxu0 %v567
        %1438 = vmatpush.msra.mxu0 %v563
        %1439 = vmatmul.f32.gmra.mxu0 %v1193
        %v1440 = vpop.f32.mrf.mxu0
        %v1441 = vadd.f32 0.0, %v1440
        %1442 = vdwg.mxu0
        %1443 = vmatpush.msra.mxu0 %v624
        %1444 = vmatpush.msra.mxu0 %v620
        %1445 = vmatpush.msra.mxu0 %v616
        %1446 = vmatpush.msra.mxu0 %v612
        %1447 = vmatpush.msra.mxu0 %v608
        %1448 = vmatpush.msra.mxu0 %v604
        %1449 = vmatpush.msra.mxu0 %v600
        %1450 = vmatpush.msra.mxu0 %v596
        %1451 = vmatpush.msra.mxu0 %v592
        %1452 = vmatpush.msra.mxu0 %v588
        %1453 = vmatpush.msra.mxu0 %v584
        %1454 = vmatpush.msra.mxu0 %v580
        %1455 = vmatpush.msra.mxu0 %v576
        %1456 = vmatpush.msra.mxu0 %v572
        %1457 = vmatpush.msra.mxu0 %v568
        %1458 = vmatpush.msra.mxu0 %v564
        %1459 = vmatmul.f32.gmra.mxu0 %v1193
        %v1460 = vpop.f32.mrf.mxu0
        %v1461 = vadd.f32 0.0, %v1460
        %1462 = vdwg.mxu0
        %1463 = vmatpush.msra.mxu0 %v625
        %1464 = vmatpush.msra.mxu0 %v621
        %1465 = vmatpush.msra.mxu0 %v617
        %1466 = vmatpush.msra.mxu0 %v613
        %1467 = vmatpush.msra.mxu0 %v609
        %1468 = vmatpush.msra.mxu0 %v605
        %1469 = vmatpush.msra.mxu0 %v601
        %1470 = vmatpush.msra.mxu0 %v597
        %1471 = vmatpush.msra.mxu0 %v593
        %1472 = vmatpush.msra.mxu0 %v589
        %1473 = vmatpush.msra.mxu0 %v585
        %1474 = vmatpush.msra.mxu0 %v581
        %1475 = vmatpush.msra.mxu0 %v577
        %1476 = vmatpush.msra.mxu0 %v573
        %1477 = vmatpush.msra.mxu0 %v569
        %1478 = vmatpush.msra.mxu0 %v565
        %1479 = vmatmul.f32.gmra.mxu0 %v1193
        %v1480 = vpop.f32.mrf.mxu0
        %v1481 = vadd.f32 0.0, %v1480
        %1482 = vdwg.mxu0
        %1483 = vmatpush.msra.mxu0 %v626
        %1484 = vmatpush.msra.mxu0 %v622
        %1485 = vmatpush.msra.mxu0 %v618
        %1486 = vmatpush.msra.mxu0 %v614
        %1487 = vmatpush.msra.mxu0 %v610
        %1488 = vmatpush.msra.mxu0 %v606
        %1489 = vmatpush.msra.mxu0 %v602
        %1490 = vmatpush.msra.mxu0 %v598
        %1491 = vmatpush.msra.mxu0 %v594
        %1492 = vmatpush.msra.mxu0 %v590
        %1493 = vmatpush.msra.mxu0 %v586
        %1494 = vmatpush.msra.mxu0 %v582
        %1495 = vmatpush.msra.mxu0 %v578
        %1496 = vmatpush.msra.mxu0 %v574
        %1497 = vmatpush.msra.mxu0 %v570
        %1498 = vmatpush.msra.mxu0 %v566
        %1499 = vmatmul.f32.gmra.mxu0 %v1193
        %v1500 = vpop.f32.mrf.mxu0
        %v1501 = vadd.f32 0.0, %v1500
        %1502 = vdwg.mxu0
        %v1503 = vadd.f32 %v1419, %v1441
        %v1504 = vadd.f32 %v1420, %v1461
        %v1505 = vadd.f32 %v1421, %v1481
        %v1506 = vadd.f32 %v1422, %v1501
        %v1507 = vxor.u32 %v1503, 2147483648
        %v1508 = vmul.f32 %v1507, 1.442695
        %v1509 = vpow.pop %v1508
        %v1510 = vadd.f32 %v1509, 1.0
        %v1511 = vrcp.pop %v1510
        %v1512 = vmul.f32 %v1510, %v1511
        %v1513 = vsub.f32 1.0, %v1512
        %v1514 = vmul.f32 %v1511, %v1513
        %v1515 = vadd.f32 %v1511, %v1514
        %vm1516 = vweird.f32 %v1510
        %vm1517 = vweird.f32 %v1511
        %vm1518 = vmor %vm1516, %vm1517
        %v1519 = vsel %vm1518, %v1511, %v1515
        %v1520 = vand.u32 2147483647, %v1510
        %vm1521 = vcmp.eq.f32.partialorder %v1520, 8.507059e+37
        %v1522 = vand.u32 %v1510, 2147483648
        %v1523 = vor.u32 1.1754944e-38, %v1522
        %v1524 = vsel %vm1521, %v1523, %v1519
        %v1525 = vmul.f32 1.0, %v1524
        %v1526 = vxor.u32 %v1504, 2147483648
        %v1527 = vmul.f32 %v1526, 1.442695
        %v1528 = vpow.pop %v1527
        %v1529 = vadd.f32 %v1528, 1.0
        %v1530 = vrcp.pop %v1529
        %v1531 = vmul.f32 %v1529, %v1530
        %v1532 = vsub.f32 1.0, %v1531
        %v1533 = vmul.f32 %v1530, %v1532
        %v1534 = vadd.f32 %v1530, %v1533
        %vm1535 = vweird.f32 %v1529
        %vm1536 = vweird.f32 %v1530
        %vm1537 = vmor %vm1535, %vm1536
        %v1538 = vsel %vm1537, %v1530, %v1534
        %v1539 = vand.u32 2147483647, %v1529
        %vm1540 = vcmp.eq.f32.partialorder %v1539, 8.507059e+37
        %v1541 = vand.u32 %v1529, 2147483648
        %v1542 = vor.u32 1.1754944e-38, %v1541
        %v1543 = vsel %vm1540, %v1542, %v1538
        %v1544 = vmul.f32 1.0, %v1543
        %v1545 = vtanh.pop %v1505
        %v1546 = vxor.u32 %v1506, 2147483648
        %v1547 = vmul.f32 %v1546, 1.442695
        %v1548 = vpow.pop %v1547
        %v1549 = vadd.f32 %v1548, 1.0
        %v1550 = vrcp.pop %v1549
        %v1551 = vmul.f32 %v1549, %v1550
        %v1552 = vsub.f32 1.0, %v1551
        %v1553 = vmul.f32 %v1550, %v1552
        %v1554 = vadd.f32 %v1550, %v1553
        %vm1555 = vweird.f32 %v1549
        %vm1556 = vweird.f32 %v1550
        %vm1557 = vmor %vm1555, %vm1556
        %v1558 = vsel %vm1557, %v1550, %v1554
        %v1559 = vand.u32 2147483647, %v1549
        %vm1560 = vcmp.eq.f32.partialorder %v1559, 8.507059e+37
        %v1561 = vand.u32 %v1549, 2147483648
        %v1562 = vor.u32 1.1754944e-38, %v1561
        %v1563 = vsel %vm1560, %v1562, %v1558
        %v1564 = vmul.f32 1.0, %v1563
        %v1565 = vmul.f32 %v1544, %v1191
        %v1566 = vmul.f32 %v1525, %v1545
        %v1567 = vadd.f32 %v1565, %v1566
        %v1568 = vtanh.pop %v1567
        %v1569 = vmul.f32 %v1564, %v1568
        %1570 = vmatpush.msra.mxu0 %v687
        %1571 = vmatpush.msra.mxu0 %v683
        %1572 = vmatpush.msra.mxu0 %v679
        %1573 = vmatpush.msra.mxu0 %v675
        %1574 = vmatpush.msra.mxu0 %v671
        %1575 = vmatpush.msra.mxu0 %v667
        %1576 = vmatpush.msra.mxu0 %v663
        %1577 = vmatpush.msra.mxu0 %v659
        %1578 = vmatpush.msra.mxu0 %v655
        %1579 = vmatpush.msra.mxu0 %v651
        %1580 = vmatpush.msra.mxu0 %v647
        %1581 = vmatpush.msra.mxu0 %v643
        %1582 = vmatpush.msra.mxu0 %v639
        %1583 = vmatpush.msra.mxu0 %v635
        %1584 = vmatpush.msra.mxu0 %v631
        %1585 = vmatpush.msra.mxu0 %v627
        %1586 = vmatmul.f32.gmra.mxu0 %v1569
        %v1587 = vpop.f32.mrf.mxu0
        %v1588 = vadd.f32 %v757, %v1587
        %1589 = vdwg.mxu0
        %1590 = vmatpush.msra.mxu0 %v751
        %1591 = vmatpush.msra.mxu0 %v747
        %1592 = vmatpush.msra.mxu0 %v743
        %1593 = vmatpush.msra.mxu0 %v739
        %1594 = vmatpush.msra.mxu0 %v735
        %1595 = vmatpush.msra.mxu0 %v731
        %1596 = vmatpush.msra.mxu0 %v727
        %1597 = vmatpush.msra.mxu0 %v723
        %1598 = vmatpush.msra.mxu0 %v719
        %1599 = vmatpush.msra.mxu0 %v715
        %1600 = vmatpush.msra.mxu0 %v711
        %1601 = vmatpush.msra.mxu0 %v707
        %1602 = vmatpush.msra.mxu0 %v703
        %1603 = vmatpush.msra.mxu0 %v699
        %1604 = vmatpush.msra.mxu0 %v695
        %1605 = vmatpush.msra.mxu0 %v691
        %1606 = vmatmul.f32.gmra.mxu0 %v1416
        %v1607 = vpop.f32.mrf.mxu0
        %v1608 = vadd.f32 %v1588, %v1607
        %1609 = vdwg.mxu0
        %1610 = vmatpush.msra.mxu0 %v688
        %1611 = vmatpush.msra.mxu0 %v684
        %1612 = vmatpush.msra.mxu0 %v680
        %1613 = vmatpush.msra.mxu0 %v676
        %1614 = vmatpush.msra.mxu0 %v672
        %1615 = vmatpush.msra.mxu0 %v668
        %1616 = vmatpush.msra.mxu0 %v664
        %1617 = vmatpush.msra.mxu0 %v660
        %1618 = vmatpush.msra.mxu0 %v656
        %1619 = vmatpush.msra.mxu0 %v652
        %1620 = vmatpush.msra.mxu0 %v648
        %1621 = vmatpush.msra.mxu0 %v644
        %1622 = vmatpush.msra.mxu0 %v640
        %1623 = vmatpush.msra.mxu0 %v636
        %1624 = vmatpush.msra.mxu0 %v632
        %1625 = vmatpush.msra.mxu0 %v628
        %1626 = vmatmul.f32.gmra.mxu0 %v1569
        %v1627 = vpop.f32.mrf.mxu0
        %v1628 = vadd.f32 %v758, %v1627
        %1629 = vdwg.mxu0
        %1630 = vmatpush.msra.mxu0 %v752
        %1631 = vmatpush.msra.mxu0 %v748
        %1632 = vmatpush.msra.mxu0 %v744
        %1633 = vmatpush.msra.mxu0 %v740
        %1634 = vmatpush.msra.mxu0 %v736
        %1635 = vmatpush.msra.mxu0 %v732
        %1636 = vmatpush.msra.mxu0 %v728
        %1637 = vmatpush.msra.mxu0 %v724
        %1638 = vmatpush.msra.mxu0 %v720
        %1639 = vmatpush.msra.mxu0 %v716
        %1640 = vmatpush.msra.mxu0 %v712
        %1641 = vmatpush.msra.mxu0 %v708
        %1642 = vmatpush.msra.mxu0 %v704
        %1643 = vmatpush.msra.mxu0 %v700
        %1644 = vmatpush.msra.mxu0 %v696
        %1645 = vmatpush.msra.mxu0 %v692
        %1646 = vmatmul.f32.gmra.mxu0 %v1416
        %v1647 = vpop.f32.mrf.mxu0
        %v1648 = vadd.f32 %v1628, %v1647
        %1649 = vdwg.mxu0
        %1650 = vmatpush.msra.mxu0 %v689
        %1651 = vmatpush.msra.mxu0 %v685
        %1652 = vmatpush.msra.mxu0 %v681
        %1653 = vmatpush.msra.mxu0 %v677
        %1654 = vmatpush.msra.mxu0 %v673
        %1655 = vmatpush.msra.mxu0 %v669
        %1656 = vmatpush.msra.mxu0 %v665
        %1657 = vmatpush.msra.mxu0 %v661
        %1658 = vmatpush.msra.mxu0 %v657
        %1659 = vmatpush.msra.mxu0 %v653
        %1660 = vmatpush.msra.mxu0 %v649
        %1661 = vmatpush.msra.mxu0 %v645
        %1662 = vmatpush.msra.mxu0 %v641
        %1663 = vmatpush.msra.mxu0 %v637
        %1664 = vmatpush.msra.mxu0 %v633
        %1665 = vmatpush.msra.mxu0 %v629
        %1666 = vmatmul.f32.gmra.mxu0 %v1569
        %v1667 = vpop.f32.mrf.mxu0
        %v1668 = vadd.f32 %v759, %v1667
        %1669 = vdwg.mxu0
        %1670 = vmatpush.msra.mxu0 %v753
        %1671 = vmatpush.msra.mxu0 %v749
        %1672 = vmatpush.msra.mxu0 %v745
        %1673 = vmatpush.msra.mxu0 %v741
        %1674 = vmatpush.msra.mxu0 %v737
        %1675 = vmatpush.msra.mxu0 %v733
        %1676 = vmatpush.msra.mxu0 %v729
        %1677 = vmatpush.msra.mxu0 %v725
        %1678 = vmatpush.msra.mxu0 %v721
        %1679 = vmatpush.msra.mxu0 %v717
        %1680 = vmatpush.msra.mxu0 %v713
        %1681 = vmatpush.msra.mxu0 %v709
        %1682 = vmatpush.msra.mxu0 %v705
        %1683 = vmatpush.msra.mxu0 %v701
        %1684 = vmatpush.msra.mxu0 %v697
        %1685 = vmatpush.msra.mxu0 %v693
        %1686 = vmatmul.f32.gmra.mxu0 %v1416
        %v1687 = vpop.f32.mrf.mxu0
        %v1688 = vadd.f32 %v1668, %v1687
        %1689 = vdwg.mxu0
        %1690 = vmatpush.msra.mxu0 %v690
        %1691 = vmatpush.msra.mxu0 %v686
        %1692 = vmatpush.msra.mxu0 %v682
        %1693 = vmatpush.msra.mxu0 %v678
        %1694 = vmatpush.msra.mxu0 %v674
        %1695 = vmatpush.msra.mxu0 %v670
        %1696 = vmatpush.msra.mxu0 %v666
        %1697 = vmatpush.msra.mxu0 %v662
        %1698 = vmatpush.msra.mxu0 %v658
        %1699 = vmatpush.msra.mxu0 %v654
        %1700 = vmatpush.msra.mxu0 %v650
        %1701 = vmatpush.msra.mxu0 %v646
        %1702 = vmatpush.msra.mxu0 %v642
        %1703 = vmatpush.msra.mxu0 %v638
        %1704 = vmatpush.msra.mxu0 %v634
        %1705 = vmatpush.msra.mxu0 %v630
        %1706 = vmatmul.f32.gmra.mxu0 %v1569
        %v1707 = vpop.f32.mrf.mxu0
        %v1708 = vadd.f32 %v760, %v1707
        %1709 = vdwg.mxu0
        %1710 = vmatpush.msra.mxu0 %v754
        %1711 = vmatpush.msra.mxu0 %v750
        %1712 = vmatpush.msra.mxu0 %v746
        %1713 = vmatpush.msra.mxu0 %v742
        %1714 = vmatpush.msra.mxu0 %v738
        %1715 = vmatpush.msra.mxu0 %v734
        %1716 = vmatpush.msra.mxu0 %v730
        %1717 = vmatpush.msra.mxu0 %v726
        %1718 = vmatpush.msra.mxu0 %v722
        %1719 = vmatpush.msra.mxu0 %v718
        %1720 = vmatpush.msra.mxu0 %v714
        %1721 = vmatpush.msra.mxu0 %v710
        %1722 = vmatpush.msra.mxu0 %v706
        %1723 = vmatpush.msra.mxu0 %v702
        %1724 = vmatpush.msra.mxu0 %v698
        %1725 = vmatpush.msra.mxu0 %v694
        %1726 = vmatmul.f32.gmra.mxu0 %v1416
        %v1727 = vpop.f32.mrf.mxu0
        %v1728 = vadd.f32 %v1708, %v1727
        %1729 = vdwg.mxu0
        %v1730 = vxor.u32 %v1608, 2147483648
        %v1731 = vmul.f32 %v1730, 1.442695
        %v1732 = vpow.pop %v1731
        %v1733 = vadd.f32 %v1732, 1.0
        %v1734 = vrcp.pop %v1733
        %v1735 = vmul.f32 %v1733, %v1734
        %v1736 = vsub.f32 1.0, %v1735
        %v1737 = vmul.f32 %v1734, %v1736
        %v1738 = vadd.f32 %v1734, %v1737
        %vm1739 = vweird.f32 %v1733
        %vm1740 = vweird.f32 %v1734
        %vm1741 = vmor %vm1739, %vm1740
        %v1742 = vsel %vm1741, %v1734, %v1738
        %v1743 = vand.u32 2147483647, %v1733
        %vm1744 = vcmp.eq.f32.partialorder %v1743, 8.507059e+37
        %v1745 = vand.u32 %v1733, 2147483648
        %v1746 = vor.u32 1.1754944e-38, %v1745
        %v1747 = vsel %vm1744, %v1746, %v1742
        %v1748 = vmul.f32 1.0, %v1747
        %v1749 = vxor.u32 %v1648, 2147483648
        %v1750 = vmul.f32 %v1749, 1.442695
        %v1751 = vpow.pop %v1750
        %v1752 = vadd.f32 %v1751, 1.0
        %v1753 = vrcp.pop %v1752
        %v1754 = vmul.f32 %v1752, %v1753
        %v1755 = vsub.f32 1.0, %v1754
        %v1756 = vmul.f32 %v1753, %v1755
        %v1757 = vadd.f32 %v1753, %v1756
        %vm1758 = vweird.f32 %v1752
        %vm1759 = vweird.f32 %v1753
        %vm1760 = vmor %vm1758, %vm1759
        %v1761 = vsel %vm1760, %v1753, %v1757
        %v1762 = vand.u32 2147483647, %v1752
        %vm1763 = vcmp.eq.f32.partialorder %v1762, 8.507059e+37
        %v1764 = vand.u32 %v1752, 2147483648
        %v1765 = vor.u32 1.1754944e-38, %v1764
        %v1766 = vsel %vm1763, %v1765, %v1761
        %v1767 = vmul.f32 1.0, %v1766
        %v1768 = vtanh.pop %v1688
        %v1769 = vxor.u32 %v1728, 2147483648
        %v1770 = vmul.f32 %v1769, 1.442695
        %v1771 = vpow.pop %v1770
        %v1772 = vadd.f32 %v1771, 1.0
        %v1773 = vrcp.pop %v1772
        %v1774 = vmul.f32 %v1772, %v1773
        %v1775 = vsub.f32 1.0, %v1774
        %v1776 = vmul.f32 %v1773, %v1775
        %v1777 = vadd.f32 %v1773, %v1776
        %vm1778 = vweird.f32 %v1772
        %vm1779 = vweird.f32 %v1773
        %vm1780 = vmor %vm1778, %vm1779
        %v1781 = vsel %vm1780, %v1773, %v1777
        %v1782 = vand.u32 2147483647, %v1772
        %vm1783 = vcmp.eq.f32.partialorder %v1782, 8.507059e+37
        %v1784 = vand.u32 %v1772, 2147483648
        %v1785 = vor.u32 1.1754944e-38, %v1784
        %v1786 = vsel %vm1783, %v1785, %v1781
        %v1787 = vmul.f32 1.0, %v1786
        %v1788 = vmul.f32 %v1767, %v1414
        %v1789 = vmul.f32 %v1748, %v1768
        %v1790 = vadd.f32 %v1788, %v1789
        %v1791 = vtanh.pop %v1790
        %v1792 = vmul.f32 %v1787, %v1791
        %s1793 = scalar_lea.vmem [#allocation3], 8
        %1794 = vst [vmem:[%s1793] sm:$0xff] %v1792
        %s1795 = scalar_lea.vmem [#allocation2], 64
        %v1796 = vld [vmem:[%s1795] sm:$0xff]
        %v1797 = vld [vmem:[%s1795 + $0x8] sm:$0xff]
        %v1798 = vld [vmem:[%s1795 + $0x10] sm:$0xff]
        %v1799 = vld [vmem:[%s1795 + $0x18] sm:$0xff]
        %1800 = vmatpush.msra.mxu0 %v623
        %1801 = vmatpush.msra.mxu0 %v619
        %1802 = vmatpush.msra.mxu0 %v615
        %1803 = vmatpush.msra.mxu0 %v611
        %1804 = vmatpush.msra.mxu0 %v607
        %1805 = vmatpush.msra.mxu0 %v603
        %1806 = vmatpush.msra.mxu0 %v599
        %1807 = vmatpush.msra.mxu0 %v595
        %1808 = vmatpush.msra.mxu0 %v591
        %1809 = vmatpush.msra.mxu0 %v587
        %1810 = vmatpush.msra.mxu0 %v583
        %1811 = vmatpush.msra.mxu0 %v579
        %1812 = vmatpush.msra.mxu0 %v575
        %1813 = vmatpush.msra.mxu0 %v571
        %1814 = vmatpush.msra.mxu0 %v567
        %1815 = vmatpush.msra.mxu0 %v563
        %1816 = vmatmul.f32.gmra.mxu0 %v1569
        %v1817 = vpop.f32.mrf.mxu0
        %v1818 = vadd.f32 0.0, %v1817
        %1819 = vdwg.mxu0
        %1820 = vmatpush.msra.mxu0 %v624
        %1821 = vmatpush.msra.mxu0 %v620
        %1822 = vmatpush.msra.mxu0 %v616
        %1823 = vmatpush.msra.mxu0 %v612
        %1824 = vmatpush.msra.mxu0 %v608
        %1825 = vmatpush.msra.mxu0 %v604
        %1826 = vmatpush.msra.mxu0 %v600
        %1827 = vmatpush.msra.mxu0 %v596
        %1828 = vmatpush.msra.mxu0 %v592
        %1829 = vmatpush.msra.mxu0 %v588
        %1830 = vmatpush.msra.mxu0 %v584
        %1831 = vmatpush.msra.mxu0 %v580
        %1832 = vmatpush.msra.mxu0 %v576
        %1833 = vmatpush.msra.mxu0 %v572
        %1834 = vmatpush.msra.mxu0 %v568
        %1835 = vmatpush.msra.mxu0 %v564
        %1836 = vmatmul.f32.gmra.mxu0 %v1569
        %v1837 = vpop.f32.mrf.mxu0
        %v1838 = vadd.f32 0.0, %v1837
        %1839 = vdwg.mxu0
        %1840 = vmatpush.msra.mxu0 %v625
        %1841 = vmatpush.msra.mxu0 %v621
        %1842 = vmatpush.msra.mxu0 %v617
        %1843 = vmatpush.msra.mxu0 %v613
        %1844 = vmatpush.msra.mxu0 %v609
        %1845 = vmatpush.msra.mxu0 %v605
        %1846 = vmatpush.msra.mxu0 %v601
        %1847 = vmatpush.msra.mxu0 %v597
        %1848 = vmatpush.msra.mxu0 %v593
        %1849 = vmatpush.msra.mxu0 %v589
        %1850 = vmatpush.msra.mxu0 %v585
        %1851 = vmatpush.msra.mxu0 %v581
        %1852 = vmatpush.msra.mxu0 %v577
        %1853 = vmatpush.msra.mxu0 %v573
        %1854 = vmatpush.msra.mxu0 %v569
        %1855 = vmatpush.msra.mxu0 %v565
        %1856 = vmatmul.f32.gmra.mxu0 %v1569
        %v1857 = vpop.f32.mrf.mxu0
        %v1858 = vadd.f32 0.0, %v1857
        %1859 = vdwg.mxu0
        %1860 = vmatpush.msra.mxu0 %v626
        %1861 = vmatpush.msra.mxu0 %v622
        %1862 = vmatpush.msra.mxu0 %v618
        %1863 = vmatpush.msra.mxu0 %v614
        %1864 = vmatpush.msra.mxu0 %v610
        %1865 = vmatpush.msra.mxu0 %v606
        %1866 = vmatpush.msra.mxu0 %v602
        %1867 = vmatpush.msra.mxu0 %v598
        %1868 = vmatpush.msra.mxu0 %v594
        %1869 = vmatpush.msra.mxu0 %v590
        %1870 = vmatpush.msra.mxu0 %v586
        %1871 = vmatpush.msra.mxu0 %v582
        %1872 = vmatpush.msra.mxu0 %v578
        %1873 = vmatpush.msra.mxu0 %v574
        %1874 = vmatpush.msra.mxu0 %v570
        %1875 = vmatpush.msra.mxu0 %v566
        %1876 = vmatmul.f32.gmra.mxu0 %v1569
        %v1877 = vpop.f32.mrf.mxu0
        %v1878 = vadd.f32 0.0, %v1877
        %1879 = vdwg.mxu0
        %v1880 = vadd.f32 %v1796, %v1818
        %v1881 = vadd.f32 %v1797, %v1838
        %v1882 = vadd.f32 %v1798, %v1858
        %v1883 = vadd.f32 %v1799, %v1878
        %v1884 = vxor.u32 %v1880, 2147483648
        %v1885 = vmul.f32 %v1884, 1.442695
        %v1886 = vpow.pop %v1885
        %v1887 = vadd.f32 %v1886, 1.0
        %v1888 = vrcp.pop %v1887
        %v1889 = vmul.f32 %v1887, %v1888
        %v1890 = vsub.f32 1.0, %v1889
        %v1891 = vmul.f32 %v1888, %v1890
        %v1892 = vadd.f32 %v1888, %v1891
        %vm1893 = vweird.f32 %v1887
        %vm1894 = vweird.f32 %v1888
        %vm1895 = vmor %vm1893, %vm1894
        %v1896 = vsel %vm1895, %v1888, %v1892
        %v1897 = vand.u32 2147483647, %v1887
        %vm1898 = vcmp.eq.f32.partialorder %v1897, 8.507059e+37
        %v1899 = vand.u32 %v1887, 2147483648
        %v1900 = vor.u32 1.1754944e-38, %v1899
        %v1901 = vsel %vm1898, %v1900, %v1896
        %v1902 = vmul.f32 1.0, %v1901
        %v1903 = vxor.u32 %v1881, 2147483648
        %v1904 = vmul.f32 %v1903, 1.442695
        %v1905 = vpow.pop %v1904
        %v1906 = vadd.f32 %v1905, 1.0
        %v1907 = vrcp.pop %v1906
        %v1908 = vmul.f32 %v1906, %v1907
        %v1909 = vsub.f32 1.0, %v1908
        %v1910 = vmul.f32 %v1907, %v1909
        %v1911 = vadd.f32 %v1907, %v1910
        %vm1912 = vweird.f32 %v1906
        %vm1913 = vweird.f32 %v1907
        %vm1914 = vmor %vm1912, %vm1913
        %v1915 = vsel %vm1914, %v1907, %v1911
        %v1916 = vand.u32 2147483647, %v1906
        %vm1917 = vcmp.eq.f32.partialorder %v1916, 8.507059e+37
        %v1918 = vand.u32 %v1906, 2147483648
        %v1919 = vor.u32 1.1754944e-38, %v1918
        %v1920 = vsel %vm1917, %v1919, %v1915
        %v1921 = vmul.f32 1.0, %v1920
        %v1922 = vtanh.pop %v1882
        %v1923 = vxor.u32 %v1883, 2147483648
        %v1924 = vmul.f32 %v1923, 1.442695
        %v1925 = vpow.pop %v1924
        %v1926 = vadd.f32 %v1925, 1.0
        %v1927 = vrcp.pop %v1926
        %v1928 = vmul.f32 %v1926, %v1927
        %v1929 = vsub.f32 1.0, %v1928
        %v1930 = vmul.f32 %v1927, %v1929
        %v1931 = vadd.f32 %v1927, %v1930
        %vm1932 = vweird.f32 %v1926
        %vm1933 = vweird.f32 %v1927
        %vm1934 = vmor %vm1932, %vm1933
        %v1935 = vsel %vm1934, %v1927, %v1931
        %v1936 = vand.u32 2147483647, %v1926
        %vm1937 = vcmp.eq.f32.partialorder %v1936, 8.507059e+37
        %v1938 = vand.u32 %v1926, 2147483648
        %v1939 = vor.u32 1.1754944e-38, %v1938
        %v1940 = vsel %vm1937, %v1939, %v1935
        %v1941 = vmul.f32 1.0, %v1940
        %v1942 = vmul.f32 %v1921, %v1567
        %v1943 = vmul.f32 %v1902, %v1922
        %v1944 = vadd.f32 %v1942, %v1943
        %v1945 = vtanh.pop %v1944
        %v1946 = vmul.f32 %v1941, %v1945
        %1947 = vmatpush.msra.mxu0 %v687
        %1948 = vmatpush.msra.mxu0 %v683
        %1949 = vmatpush.msra.mxu0 %v679
        %1950 = vmatpush.msra.mxu0 %v675
        %1951 = vmatpush.msra.mxu0 %v671
        %1952 = vmatpush.msra.mxu0 %v667
        %1953 = vmatpush.msra.mxu0 %v663
        %1954 = vmatpush.msra.mxu0 %v659
        %1955 = vmatpush.msra.mxu0 %v655
        %1956 = vmatpush.msra.mxu0 %v651
        %1957 = vmatpush.msra.mxu0 %v647
        %1958 = vmatpush.msra.mxu0 %v643
        %1959 = vmatpush.msra.mxu0 %v639
        %1960 = vmatpush.msra.mxu0 %v635
        %1961 = vmatpush.msra.mxu0 %v631
        %1962 = vmatpush.msra.mxu0 %v627
        %1963 = vmatmul.f32.gmra.mxu0 %v1946
        %v1964 = vpop.f32.mrf.mxu0
        %v1965 = vadd.f32 %v757, %v1964
        %1966 = vdwg.mxu0
        %1967 = vmatpush.msra.mxu0 %v751
        %1968 = vmatpush.msra.mxu0 %v747
        %1969 = vmatpush.msra.mxu0 %v743
        %1970 = vmatpush.msra.mxu0 %v739
        %1971 = vmatpush.msra.mxu0 %v735
        %1972 = vmatpush.msra.mxu0 %v731
        %1973 = vmatpush.msra.mxu0 %v727
        %1974 = vmatpush.msra.mxu0 %v723
        %1975 = vmatpush.msra.mxu0 %v719
        %1976 = vmatpush.msra.mxu0 %v715
        %1977 = vmatpush.msra.mxu0 %v711
        %1978 = vmatpush.msra.mxu0 %v707
        %1979 = vmatpush.msra.mxu0 %v703
        %1980 = vmatpush.msra.mxu0 %v699
        %1981 = vmatpush.msra.mxu0 %v695
        %1982 = vmatpush.msra.mxu0 %v691
        %1983 = vmatmul.f32.gmra.mxu0 %v1792
        %v1984 = vpop.f32.mrf.mxu0
        %v1985 = vadd.f32 %v1965, %v1984
        %1986 = vdwg.mxu0
        %1987 = vmatpush.msra.mxu0 %v688
        %1988 = vmatpush.msra.mxu0 %v684
        %1989 = vmatpush.msra.mxu0 %v680
        %1990 = vmatpush.msra.mxu0 %v676
        %1991 = vmatpush.msra.mxu0 %v672
        %1992 = vmatpush.msra.mxu0 %v668
        %1993 = vmatpush.msra.mxu0 %v664
        %1994 = vmatpush.msra.mxu0 %v660
        %1995 = vmatpush.msra.mxu0 %v656
        %1996 = vmatpush.msra.mxu0 %v652
        %1997 = vmatpush.msra.mxu0 %v648
        %1998 = vmatpush.msra.mxu0 %v644
        %1999 = vmatpush.msra.mxu0 %v640
        %2000 = vmatpush.msra.mxu0 %v636
        %2001 = vmatpush.msra.mxu0 %v632
        %2002 = vmatpush.msra.mxu0 %v628
        %2003 = vmatmul.f32.gmra.mxu0 %v1946
        %v2004 = vpop.f32.mrf.mxu0
        %v2005 = vadd.f32 %v758, %v2004
        %2006 = vdwg.mxu0
        %2007 = vmatpush.msra.mxu0 %v752
        %2008 = vmatpush.msra.mxu0 %v748
        %2009 = vmatpush.msra.mxu0 %v744
        %2010 = vmatpush.msra.mxu0 %v740
        %2011 = vmatpush.msra.mxu0 %v736
        %2012 = vmatpush.msra.mxu0 %v732
        %2013 = vmatpush.msra.mxu0 %v728
        %2014 = vmatpush.msra.mxu0 %v724
        %2015 = vmatpush.msra.mxu0 %v720
        %2016 = vmatpush.msra.mxu0 %v716
        %2017 = vmatpush.msra.mxu0 %v712
        %2018 = vmatpush.msra.mxu0 %v708
        %2019 = vmatpush.msra.mxu0 %v704
        %2020 = vmatpush.msra.mxu0 %v700
        %2021 = vmatpush.msra.mxu0 %v696
        %2022 = vmatpush.msra.mxu0 %v692
        %2023 = vmatmul.f32.gmra.mxu0 %v1792
        %v2024 = vpop.f32.mrf.mxu0
        %v2025 = vadd.f32 %v2005, %v2024
        %2026 = vdwg.mxu0
        %2027 = vmatpush.msra.mxu0 %v689
        %2028 = vmatpush.msra.mxu0 %v685
        %2029 = vmatpush.msra.mxu0 %v681
        %2030 = vmatpush.msra.mxu0 %v677
        %2031 = vmatpush.msra.mxu0 %v673
        %2032 = vmatpush.msra.mxu0 %v669
        %2033 = vmatpush.msra.mxu0 %v665
        %2034 = vmatpush.msra.mxu0 %v661
        %2035 = vmatpush.msra.mxu0 %v657
        %2036 = vmatpush.msra.mxu0 %v653
        %2037 = vmatpush.msra.mxu0 %v649
        %2038 = vmatpush.msra.mxu0 %v645
        %2039 = vmatpush.msra.mxu0 %v641
        %2040 = vmatpush.msra.mxu0 %v637
        %2041 = vmatpush.msra.mxu0 %v633
        %2042 = vmatpush.msra.mxu0 %v629
        %2043 = vmatmul.f32.gmra.mxu0 %v1946
        %v2044 = vpop.f32.mrf.mxu0
        %v2045 = vadd.f32 %v759, %v2044
        %2046 = vdwg.mxu0
        %2047 = vmatpush.msra.mxu0 %v753
        %2048 = vmatpush.msra.mxu0 %v749
        %2049 = vmatpush.msra.mxu0 %v745
        %2050 = vmatpush.msra.mxu0 %v741
        %2051 = vmatpush.msra.mxu0 %v737
        %2052 = vmatpush.msra.mxu0 %v733
        %2053 = vmatpush.msra.mxu0 %v729
        %2054 = vmatpush.msra.mxu0 %v725
        %2055 = vmatpush.msra.mxu0 %v721
        %2056 = vmatpush.msra.mxu0 %v717
        %2057 = vmatpush.msra.mxu0 %v713
        %2058 = vmatpush.msra.mxu0 %v709
        %2059 = vmatpush.msra.mxu0 %v705
        %2060 = vmatpush.msra.mxu0 %v701
        %2061 = vmatpush.msra.mxu0 %v697
        %2062 = vmatpush.msra.mxu0 %v693
        %2063 = vmatmul.f32.gmra.mxu0 %v1792
        %v2064 = vpop.f32.mrf.mxu0
        %v2065 = vadd.f32 %v2045, %v2064
        %2066 = vdwg.mxu0
        %2067 = vmatpush.msra.mxu0 %v690
        %2068 = vmatpush.msra.mxu0 %v686
        %2069 = vmatpush.msra.mxu0 %v682
        %2070 = vmatpush.msra.mxu0 %v678
        %2071 = vmatpush.msra.mxu0 %v674
        %2072 = vmatpush.msra.mxu0 %v670
        %2073 = vmatpush.msra.mxu0 %v666
        %2074 = vmatpush.msra.mxu0 %v662
        %2075 = vmatpush.msra.mxu0 %v658
        %2076 = vmatpush.msra.mxu0 %v654
        %2077 = vmatpush.msra.mxu0 %v650
        %2078 = vmatpush.msra.mxu0 %v646
        %2079 = vmatpush.msra.mxu0 %v642
        %2080 = vmatpush.msra.mxu0 %v638
        %2081 = vmatpush.msra.mxu0 %v634
        %2082 = vmatpush.msra.mxu0 %v630
        %2083 = vmatmul.f32.gmra.mxu0 %v1946
        %v2084 = vpop.f32.mrf.mxu0
        %v2085 = vadd.f32 %v760, %v2084
        %2086 = vdwg.mxu0
        %2087 = vmatpush.msra.mxu0 %v754
        %2088 = vmatpush.msra.mxu0 %v750
        %2089 = vmatpush.msra.mxu0 %v746
        %2090 = vmatpush.msra.mxu0 %v742
        %2091 = vmatpush.msra.mxu0 %v738
        %2092 = vmatpush.msra.mxu0 %v734
        %2093 = vmatpush.msra.mxu0 %v730
        %2094 = vmatpush.msra.mxu0 %v726
        %2095 = vmatpush.msra.mxu0 %v722
        %2096 = vmatpush.msra.mxu0 %v718
        %2097 = vmatpush.msra.mxu0 %v714
        %2098 = vmatpush.msra.mxu0 %v710
        %2099 = vmatpush.msra.mxu0 %v706
        %2100 = vmatpush.msra.mxu0 %v702
        %2101 = vmatpush.msra.mxu0 %v698
        %2102 = vmatpush.msra.mxu0 %v694
        %2103 = vmatmul.f32.gmra.mxu0 %v1792
        %v2104 = vpop.f32.mrf.mxu0
        %v2105 = vadd.f32 %v2085, %v2104
        %2106 = vdwg.mxu0
        %v2107 = vxor.u32 %v1985, 2147483648
        %v2108 = vmul.f32 %v2107, 1.442695
        %v2109 = vpow.pop %v2108
        %v2110 = vadd.f32 %v2109, 1.0
        %v2111 = vrcp.pop %v2110
        %v2112 = vmul.f32 %v2110, %v2111
        %v2113 = vsub.f32 1.0, %v2112
        %v2114 = vmul.f32 %v2111, %v2113
        %v2115 = vadd.f32 %v2111, %v2114
        %vm2116 = vweird.f32 %v2110
        %vm2117 = vweird.f32 %v2111
        %vm2118 = vmor %vm2116, %vm2117
        %v2119 = vsel %vm2118, %v2111, %v2115
        %v2120 = vand.u32 2147483647, %v2110
        %vm2121 = vcmp.eq.f32.partialorder %v2120, 8.507059e+37
        %v2122 = vand.u32 %v2110, 2147483648
        %v2123 = vor.u32 1.1754944e-38, %v2122
        %v2124 = vsel %vm2121, %v2123, %v2119
        %v2125 = vmul.f32 1.0, %v2124
        %v2126 = vxor.u32 %v2025, 2147483648
        %v2127 = vmul.f32 %v2126, 1.442695
        %v2128 = vpow.pop %v2127
        %v2129 = vadd.f32 %v2128, 1.0
        %v2130 = vrcp.pop %v2129
        %v2131 = vmul.f32 %v2129, %v2130
        %v2132 = vsub.f32 1.0, %v2131
        %v2133 = vmul.f32 %v2130, %v2132
        %v2134 = vadd.f32 %v2130, %v2133
        %vm2135 = vweird.f32 %v2129
        %vm2136 = vweird.f32 %v2130
        %vm2137 = vmor %vm2135, %vm2136
        %v2138 = vsel %vm2137, %v2130, %v2134
        %v2139 = vand.u32 2147483647, %v2129
        %vm2140 = vcmp.eq.f32.partialorder %v2139, 8.507059e+37
        %v2141 = vand.u32 %v2129, 2147483648
        %v2142 = vor.u32 1.1754944e-38, %v2141
        %v2143 = vsel %vm2140, %v2142, %v2138
        %v2144 = vmul.f32 1.0, %v2143
        %v2145 = vtanh.pop %v2065
        %v2146 = vxor.u32 %v2105, 2147483648
        %v2147 = vmul.f32 %v2146, 1.442695
        %v2148 = vpow.pop %v2147
        %v2149 = vadd.f32 %v2148, 1.0
        %v2150 = vrcp.pop %v2149
        %v2151 = vmul.f32 %v2149, %v2150
        %v2152 = vsub.f32 1.0, %v2151
        %v2153 = vmul.f32 %v2150, %v2152
        %v2154 = vadd.f32 %v2150, %v2153
        %vm2155 = vweird.f32 %v2149
        %vm2156 = vweird.f32 %v2150
        %vm2157 = vmor %vm2155, %vm2156
        %v2158 = vsel %vm2157, %v2150, %v2154
        %v2159 = vand.u32 2147483647, %v2149
        %vm2160 = vcmp.eq.f32.partialorder %v2159, 8.507059e+37
        %v2161 = vand.u32 %v2149, 2147483648
        %v2162 = vor.u32 1.1754944e-38, %v2161
        %v2163 = vsel %vm2160, %v2162, %v2158
        %v2164 = vmul.f32 1.0, %v2163
        %v2165 = vmul.f32 %v2144, %v1790
        %v2166 = vmul.f32 %v2125, %v2145
        %v2167 = vadd.f32 %v2165, %v2166
        %v2168 = vtanh.pop %v2167
        %v2169 = vmul.f32 %v2164, %v2168
        %s2170 = scalar_lea.vmem [#allocation3], 16
        %2171 = vst [vmem:[%s2170] sm:$0xff] %v2169
        %s2172 = scalar_lea.vmem [#allocation2], 96
        %v2173 = vld [vmem:[%s2172] sm:$0xff]
        %v2174 = vld [vmem:[%s2172 + $0x8] sm:$0xff]
        %v2175 = vld [vmem:[%s2172 + $0x10] sm:$0xff]
        %v2176 = vld [vmem:[%s2172 + $0x18] sm:$0xff]
        %2177 = vmatpush.msra.mxu0 %v623
        %2178 = vmatpush.msra.mxu0 %v619
        %2179 = vmatpush.msra.mxu0 %v615
        %2180 = vmatpush.msra.mxu0 %v611
        %2181 = vmatpush.msra.mxu0 %v607
        %2182 = vmatpush.msra.mxu0 %v603
        %2183 = vmatpush.msra.mxu0 %v599
        %2184 = vmatpush.msra.mxu0 %v595
        %2185 = vmatpush.msra.mxu0 %v591
        %2186 = vmatpush.msra.mxu0 %v587
        %2187 = vmatpush.msra.mxu0 %v583
        %2188 = vmatpush.msra.mxu0 %v579
        %2189 = vmatpush.msra.mxu0 %v575
        %2190 = vmatpush.msra.mxu0 %v571
        %2191 = vmatpush.msra.mxu0 %v567
        %2192 = vmatpush.msra.mxu0 %v563
        %2193 = vmatmul.f32.gmra.mxu0 %v1946
        %v2194 = vpop.f32.mrf.mxu0
        %v2195 = vadd.f32 0.0, %v2194
        %2196 = vdwg.mxu0
        %2197 = vmatpush.msra.mxu0 %v624
        %2198 = vmatpush.msra.mxu0 %v620
        %2199 = vmatpush.msra.mxu0 %v616
        %2200 = vmatpush.msra.mxu0 %v612
        %2201 = vmatpush.msra.mxu0 %v608
        %2202 = vmatpush.msra.mxu0 %v604
        %2203 = vmatpush.msra.mxu0 %v600
        %2204 = vmatpush.msra.mxu0 %v596
        %2205 = vmatpush.msra.mxu0 %v592
        %2206 = vmatpush.msra.mxu0 %v588
        %2207 = vmatpush.msra.mxu0 %v584
        %2208 = vmatpush.msra.mxu0 %v580
        %2209 = vmatpush.msra.mxu0 %v576
        %2210 = vmatpush.msra.mxu0 %v572
        %2211 = vmatpush.msra.mxu0 %v568
        %2212 = vmatpush.msra.mxu0 %v564
        %2213 = vmatmul.f32.gmra.mxu0 %v1946
        %v2214 = vpop.f32.mrf.mxu0
        %v2215 = vadd.f32 0.0, %v2214
        %2216 = vdwg.mxu0
        %2217 = vmatpush.msra.mxu0 %v625
        %2218 = vmatpush.msra.mxu0 %v621
        %2219 = vmatpush.msra.mxu0 %v617
        %2220 = vmatpush.msra.mxu0 %v613
        %2221 = vmatpush.msra.mxu0 %v609
        %2222 = vmatpush.msra.mxu0 %v605
        %2223 = vmatpush.msra.mxu0 %v601
        %2224 = vmatpush.msra.mxu0 %v597
        %2225 = vmatpush.msra.mxu0 %v593
        %2226 = vmatpush.msra.mxu0 %v589
        %2227 = vmatpush.msra.mxu0 %v585
        %2228 = vmatpush.msra.mxu0 %v581
        %2229 = vmatpush.msra.mxu0 %v577
        %2230 = vmatpush.msra.mxu0 %v573
        %2231 = vmatpush.msra.mxu0 %v569
        %2232 = vmatpush.msra.mxu0 %v565
        %2233 = vmatmul.f32.gmra.mxu0 %v1946
        %v2234 = vpop.f32.mrf.mxu0
        %v2235 = vadd.f32 0.0, %v2234
        %2236 = vdwg.mxu0
        %2237 = vmatpush.msra.mxu0 %v626
        %2238 = vmatpush.msra.mxu0 %v622
        %2239 = vmatpush.msra.mxu0 %v618
        %2240 = vmatpush.msra.mxu0 %v614
        %2241 = vmatpush.msra.mxu0 %v610
        %2242 = vmatpush.msra.mxu0 %v606
        %2243 = vmatpush.msra.mxu0 %v602
        %2244 = vmatpush.msra.mxu0 %v598
        %2245 = vmatpush.msra.mxu0 %v594
        %2246 = vmatpush.msra.mxu0 %v590
        %2247 = vmatpush.msra.mxu0 %v586
        %2248 = vmatpush.msra.mxu0 %v582
        %2249 = vmatpush.msra.mxu0 %v578
        %2250 = vmatpush.msra.mxu0 %v574
        %2251 = vmatpush.msra.mxu0 %v570
        %2252 = vmatpush.msra.mxu0 %v566
        %2253 = vmatmul.f32.gmra.mxu0 %v1946
        %v2254 = vpop.f32.mrf.mxu0
        %v2255 = vadd.f32 0.0, %v2254
        %2256 = vdwg.mxu0
        %v2257 = vadd.f32 %v2173, %v2195
        %v2258 = vadd.f32 %v2174, %v2215
        %v2259 = vadd.f32 %v2175, %v2235
        %v2260 = vadd.f32 %v2176, %v2255
        %v2261 = vxor.u32 %v2257, 2147483648
        %v2262 = vmul.f32 %v2261, 1.442695
        %v2263 = vpow.pop %v2262
        %v2264 = vadd.f32 %v2263, 1.0
        %v2265 = vrcp.pop %v2264
        %v2266 = vmul.f32 %v2264, %v2265
        %v2267 = vsub.f32 1.0, %v2266
        %v2268 = vmul.f32 %v2265, %v2267
        %v2269 = vadd.f32 %v2265, %v2268
        %vm2270 = vweird.f32 %v2264
        %vm2271 = vweird.f32 %v2265
        %vm2272 = vmor %vm2270, %vm2271
        %v2273 = vsel %vm2272, %v2265, %v2269
        %v2274 = vand.u32 2147483647, %v2264
        %vm2275 = vcmp.eq.f32.partialorder %v2274, 8.507059e+37
        %v2276 = vand.u32 %v2264, 2147483648
        %v2277 = vor.u32 1.1754944e-38, %v2276
        %v2278 = vsel %vm2275, %v2277, %v2273
        %v2279 = vmul.f32 1.0, %v2278
        %v2280 = vxor.u32 %v2258, 2147483648
        %v2281 = vmul.f32 %v2280, 1.442695
        %v2282 = vpow.pop %v2281
        %v2283 = vadd.f32 %v2282, 1.0
        %v2284 = vrcp.pop %v2283
        %v2285 = vmul.f32 %v2283, %v2284
        %v2286 = vsub.f32 1.0, %v2285
        %v2287 = vmul.f32 %v2284, %v2286
        %v2288 = vadd.f32 %v2284, %v2287
        %vm2289 = vweird.f32 %v2283
        %vm2290 = vweird.f32 %v2284
        %vm2291 = vmor %vm2289, %vm2290
        %v2292 = vsel %vm2291, %v2284, %v2288
        %v2293 = vand.u32 2147483647, %v2283
        %vm2294 = vcmp.eq.f32.partialorder %v2293, 8.507059e+37
        %v2295 = vand.u32 %v2283, 2147483648
        %v2296 = vor.u32 1.1754944e-38, %v2295
        %v2297 = vsel %vm2294, %v2296, %v2292
        %v2298 = vmul.f32 1.0, %v2297
        %v2299 = vtanh.pop %v2259
        %v2300 = vxor.u32 %v2260, 2147483648
        %v2301 = vmul.f32 %v2300, 1.442695
        %v2302 = vpow.pop %v2301
        %v2303 = vadd.f32 %v2302, 1.0
        %v2304 = vrcp.pop %v2303
        %v2305 = vmul.f32 %v2303, %v2304
        %v2306 = vsub.f32 1.0, %v2305
        %v2307 = vmul.f32 %v2304, %v2306
        %v2308 = vadd.f32 %v2304, %v2307
        %vm2309 = vweird.f32 %v2303
        %vm2310 = vweird.f32 %v2304
        %vm2311 = vmor %vm2309, %vm2310
        %v2312 = vsel %vm2311, %v2304, %v2308
        %v2313 = vand.u32 2147483647, %v2303
        %vm2314 = vcmp.eq.f32.partialorder %v2313, 8.507059e+37
        %v2315 = vand.u32 %v2303, 2147483648
        %v2316 = vor.u32 1.1754944e-38, %v2315
        %v2317 = vsel %vm2314, %v2316, %v2312
        %v2318 = vmul.f32 1.0, %v2317
        %v2319 = vmul.f32 %v2298, %v1944
        %v2320 = vmul.f32 %v2279, %v2299
        %v2321 = vadd.f32 %v2319, %v2320
        %v2322 = vtanh.pop %v2321
        %v2323 = vmul.f32 %v2318, %v2322
        %2324 = vmatpush.msra.mxu0 %v687
        %2325 = vmatpush.msra.mxu0 %v683
        %2326 = vmatpush.msra.mxu0 %v679
        %2327 = vmatpush.msra.mxu0 %v675
        %2328 = vmatpush.msra.mxu0 %v671
        %2329 = vmatpush.msra.mxu0 %v667
        %2330 = vmatpush.msra.mxu0 %v663
        %2331 = vmatpush.msra.mxu0 %v659
        %2332 = vmatpush.msra.mxu0 %v655
        %2333 = vmatpush.msra.mxu0 %v651
        %2334 = vmatpush.msra.mxu0 %v647
        %2335 = vmatpush.msra.mxu0 %v643
        %2336 = vmatpush.msra.mxu0 %v639
        %2337 = vmatpush.msra.mxu0 %v635
        %2338 = vmatpush.msra.mxu0 %v631
        %2339 = vmatpush.msra.mxu0 %v627
        %2340 = vmatmul.f32.gmra.mxu0 %v2323
        %v2341 = vpop.f32.mrf.mxu0
        %v2342 = vadd.f32 %v757, %v2341
        %2343 = vdwg.mxu0
        %2344 = vmatpush.msra.mxu0 %v751
        %2345 = vmatpush.msra.mxu0 %v747
        %2346 = vmatpush.msra.mxu0 %v743
        %2347 = vmatpush.msra.mxu0 %v739
        %2348 = vmatpush.msra.mxu0 %v735
        %2349 = vmatpush.msra.mxu0 %v731
        %2350 = vmatpush.msra.mxu0 %v727
        %2351 = vmatpush.msra.mxu0 %v723
        %2352 = vmatpush.msra.mxu0 %v719
        %2353 = vmatpush.msra.mxu0 %v715
        %2354 = vmatpush.msra.mxu0 %v711
        %2355 = vmatpush.msra.mxu0 %v707
        %2356 = vmatpush.msra.mxu0 %v703
        %2357 = vmatpush.msra.mxu0 %v699
        %2358 = vmatpush.msra.mxu0 %v695
        %2359 = vmatpush.msra.mxu0 %v691
        %2360 = vmatmul.f32.gmra.mxu0 %v2169
        %v2361 = vpop.f32.mrf.mxu0
        %v2362 = vadd.f32 %v2342, %v2361
        %2363 = vdwg.mxu0
        %2364 = vmatpush.msra.mxu0 %v688
        %2365 = vmatpush.msra.mxu0 %v684
        %2366 = vmatpush.msra.mxu0 %v680
        %2367 = vmatpush.msra.mxu0 %v676
        %2368 = vmatpush.msra.mxu0 %v672
        %2369 = vmatpush.msra.mxu0 %v668
        %2370 = vmatpush.msra.mxu0 %v664
        %2371 = vmatpush.msra.mxu0 %v660
        %2372 = vmatpush.msra.mxu0 %v656
        %2373 = vmatpush.msra.mxu0 %v652
        %2374 = vmatpush.msra.mxu0 %v648
        %2375 = vmatpush.msra.mxu0 %v644
        %2376 = vmatpush.msra.mxu0 %v640
        %2377 = vmatpush.msra.mxu0 %v636
        %2378 = vmatpush.msra.mxu0 %v632
        %2379 = vmatpush.msra.mxu0 %v628
        %2380 = vmatmul.f32.gmra.mxu0 %v2323
        %v2381 = vpop.f32.mrf.mxu0
        %v2382 = vadd.f32 %v758, %v2381
        %2383 = vdwg.mxu0
        %2384 = vmatpush.msra.mxu0 %v752
        %2385 = vmatpush.msra.mxu0 %v748
        %2386 = vmatpush.msra.mxu0 %v744
        %2387 = vmatpush.msra.mxu0 %v740
        %2388 = vmatpush.msra.mxu0 %v736
        %2389 = vmatpush.msra.mxu0 %v732
        %2390 = vmatpush.msra.mxu0 %v728
        %2391 = vmatpush.msra.mxu0 %v724
        %2392 = vmatpush.msra.mxu0 %v720
        %2393 = vmatpush.msra.mxu0 %v716
        %2394 = vmatpush.msra.mxu0 %v712
        %2395 = vmatpush.msra.mxu0 %v708
        %2396 = vmatpush.msra.mxu0 %v704
        %2397 = vmatpush.msra.mxu0 %v700
        %2398 = vmatpush.msra.mxu0 %v696
        %2399 = vmatpush.msra.mxu0 %v692
        %2400 = vmatmul.f32.gmra.mxu0 %v2169
        %v2401 = vpop.f32.mrf.mxu0
        %v2402 = vadd.f32 %v2382, %v2401
        %2403 = vdwg.mxu0
        %2404 = vmatpush.msra.mxu0 %v689
        %2405 = vmatpush.msra.mxu0 %v685
        %2406 = vmatpush.msra.mxu0 %v681
        %2407 = vmatpush.msra.mxu0 %v677
        %2408 = vmatpush.msra.mxu0 %v673
        %2409 = vmatpush.msra.mxu0 %v669
        %2410 = vmatpush.msra.mxu0 %v665
        %2411 = vmatpush.msra.mxu0 %v661
        %2412 = vmatpush.msra.mxu0 %v657
        %2413 = vmatpush.msra.mxu0 %v653
        %2414 = vmatpush.msra.mxu0 %v649
        %2415 = vmatpush.msra.mxu0 %v645
        %2416 = vmatpush.msra.mxu0 %v641
        %2417 = vmatpush.msra.mxu0 %v637
        %2418 = vmatpush.msra.mxu0 %v633
        %2419 = vmatpush.msra.mxu0 %v629
        %2420 = vmatmul.f32.gmra.mxu0 %v2323
        %v2421 = vpop.f32.mrf.mxu0
        %v2422 = vadd.f32 %v759, %v2421
        %2423 = vdwg.mxu0
        %2424 = vmatpush.msra.mxu0 %v753
        %2425 = vmatpush.msra.mxu0 %v749
        %2426 = vmatpush.msra.mxu0 %v745
        %2427 = vmatpush.msra.mxu0 %v741
        %2428 = vmatpush.msra.mxu0 %v737
        %2429 = vmatpush.msra.mxu0 %v733
        %2430 = vmatpush.msra.mxu0 %v729
        %2431 = vmatpush.msra.mxu0 %v725
        %2432 = vmatpush.msra.mxu0 %v721
        %2433 = vmatpush.msra.mxu0 %v717
        %2434 = vmatpush.msra.mxu0 %v713
        %2435 = vmatpush.msra.mxu0 %v709
        %2436 = vmatpush.msra.mxu0 %v705
        %2437 = vmatpush.msra.mxu0 %v701
        %2438 = vmatpush.msra.mxu0 %v697
        %2439 = vmatpush.msra.mxu0 %v693
        %2440 = vmatmul.f32.gmra.mxu0 %v2169
        %v2441 = vpop.f32.mrf.mxu0
        %v2442 = vadd.f32 %v2422, %v2441
        %2443 = vdwg.mxu0
        %2444 = vmatpush.msra.mxu0 %v690
        %2445 = vmatpush.msra.mxu0 %v686
        %2446 = vmatpush.msra.mxu0 %v682
        %2447 = vmatpush.msra.mxu0 %v678
        %2448 = vmatpush.msra.mxu0 %v674
        %2449 = vmatpush.msra.mxu0 %v670
        %2450 = vmatpush.msra.mxu0 %v666
        %2451 = vmatpush.msra.mxu0 %v662
        %2452 = vmatpush.msra.mxu0 %v658
        %2453 = vmatpush.msra.mxu0 %v654
        %2454 = vmatpush.msra.mxu0 %v650
        %2455 = vmatpush.msra.mxu0 %v646
        %2456 = vmatpush.msra.mxu0 %v642
        %2457 = vmatpush.msra.mxu0 %v638
        %2458 = vmatpush.msra.mxu0 %v634
        %2459 = vmatpush.msra.mxu0 %v630
        %2460 = vmatmul.f32.gmra.mxu0 %v2323
        %v2461 = vpop.f32.mrf.mxu0
        %v2462 = vadd.f32 %v760, %v2461
        %2463 = vdwg.mxu0
        %2464 = vmatpush.msra.mxu0 %v754
        %2465 = vmatpush.msra.mxu0 %v750
        %2466 = vmatpush.msra.mxu0 %v746
        %2467 = vmatpush.msra.mxu0 %v742
        %2468 = vmatpush.msra.mxu0 %v738
        %2469 = vmatpush.msra.mxu0 %v734
        %2470 = vmatpush.msra.mxu0 %v730
        %2471 = vmatpush.msra.mxu0 %v726
        %2472 = vmatpush.msra.mxu0 %v722
        %2473 = vmatpush.msra.mxu0 %v718
        %2474 = vmatpush.msra.mxu0 %v714
        %2475 = vmatpush.msra.mxu0 %v710
        %2476 = vmatpush.msra.mxu0 %v706
        %2477 = vmatpush.msra.mxu0 %v702
        %2478 = vmatpush.msra.mxu0 %v698
        %2479 = vmatpush.msra.mxu0 %v694
        %2480 = vmatmul.f32.gmra.mxu0 %v2169
        %v2481 = vpop.f32.mrf.mxu0
        %v2482 = vadd.f32 %v2462, %v2481
        %2483 = vdwg.mxu0
        %v2484 = vxor.u32 %v2362, 2147483648
        %v2485 = vmul.f32 %v2484, 1.442695
        %v2486 = vpow.pop %v2485
        %v2487 = vadd.f32 %v2486, 1.0
        %v2488 = vrcp.pop %v2487
        %v2489 = vmul.f32 %v2487, %v2488
        %v2490 = vsub.f32 1.0, %v2489
        %v2491 = vmul.f32 %v2488, %v2490
        %v2492 = vadd.f32 %v2488, %v2491
        %vm2493 = vweird.f32 %v2487
        %vm2494 = vweird.f32 %v2488
        %vm2495 = vmor %vm2493, %vm2494
        %v2496 = vsel %vm2495, %v2488, %v2492
        %v2497 = vand.u32 2147483647, %v2487
        %vm2498 = vcmp.eq.f32.partialorder %v2497, 8.507059e+37
        %v2499 = vand.u32 %v2487, 2147483648
        %v2500 = vor.u32 1.1754944e-38, %v2499
        %v2501 = vsel %vm2498, %v2500, %v2496
        %v2502 = vmul.f32 1.0, %v2501
        %v2503 = vxor.u32 %v2402, 2147483648
        %v2504 = vmul.f32 %v2503, 1.442695
        %v2505 = vpow.pop %v2504
        %v2506 = vadd.f32 %v2505, 1.0
        %v2507 = vrcp.pop %v2506
        %v2508 = vmul.f32 %v2506, %v2507
        %v2509 = vsub.f32 1.0, %v2508
        %v2510 = vmul.f32 %v2507, %v2509
        %v2511 = vadd.f32 %v2507, %v2510
        %vm2512 = vweird.f32 %v2506
        %vm2513 = vweird.f32 %v2507
        %vm2514 = vmor %vm2512, %vm2513
        %v2515 = vsel %vm2514, %v2507, %v2511
        %v2516 = vand.u32 2147483647, %v2506
        %vm2517 = vcmp.eq.f32.partialorder %v2516, 8.507059e+37
        %v2518 = vand.u32 %v2506, 2147483648
        %v2519 = vor.u32 1.1754944e-38, %v2518
        %v2520 = vsel %vm2517, %v2519, %v2515
        %v2521 = vmul.f32 1.0, %v2520
        %v2522 = vtanh.pop %v2442
        %v2523 = vxor.u32 %v2482, 2147483648
        %v2524 = vmul.f32 %v2523, 1.442695
        %v2525 = vpow.pop %v2524
        %v2526 = vadd.f32 %v2525, 1.0
        %v2527 = vrcp.pop %v2526
        %v2528 = vmul.f32 %v2526, %v2527
        %v2529 = vsub.f32 1.0, %v2528
        %v2530 = vmul.f32 %v2527, %v2529
        %v2531 = vadd.f32 %v2527, %v2530
        %vm2532 = vweird.f32 %v2526
        %vm2533 = vweird.f32 %v2527
        %vm2534 = vmor %vm2532, %vm2533
        %v2535 = vsel %vm2534, %v2527, %v2531
        %v2536 = vand.u32 2147483647, %v2526
        %vm2537 = vcmp.eq.f32.partialorder %v2536, 8.507059e+37
        %v2538 = vand.u32 %v2526, 2147483648
        %v2539 = vor.u32 1.1754944e-38, %v2538
        %v2540 = vsel %vm2537, %v2539, %v2535
        %v2541 = vmul.f32 1.0, %v2540
        %v2542 = vmul.f32 %v2521, %v2167
        %v2543 = vmul.f32 %v2502, %v2522
        %v2544 = vadd.f32 %v2542, %v2543
        %v2545 = vtanh.pop %v2544
        %v2546 = vmul.f32 %v2541, %v2545
        %s2547 = scalar_lea.vmem [#allocation3], 24
        %2548 = vst [vmem:[%s2547] sm:$0xff] %v2546
        %s2549 = scalar_lea.vmem [#allocation2], 128
        %v2550 = vld [vmem:[%s2549] sm:$0xff]
        %v2551 = vld [vmem:[%s2549 + $0x8] sm:$0xff]
        %v2552 = vld [vmem:[%s2549 + $0x10] sm:$0xff]
        %v2553 = vld [vmem:[%s2549 + $0x18] sm:$0xff]
        %2554 = vmatpush.msra.mxu0 %v623
        %2555 = vmatpush.msra.mxu0 %v619
        %2556 = vmatpush.msra.mxu0 %v615
        %2557 = vmatpush.msra.mxu0 %v611
        %2558 = vmatpush.msra.mxu0 %v607
        %2559 = vmatpush.msra.mxu0 %v603
        %2560 = vmatpush.msra.mxu0 %v599
        %2561 = vmatpush.msra.mxu0 %v595
        %2562 = vmatpush.msra.mxu0 %v591
        %2563 = vmatpush.msra.mxu0 %v587
        %2564 = vmatpush.msra.mxu0 %v583
        %2565 = vmatpush.msra.mxu0 %v579
        %2566 = vmatpush.msra.mxu0 %v575
        %2567 = vmatpush.msra.mxu0 %v571
        %2568 = vmatpush.msra.mxu0 %v567
        %2569 = vmatpush.msra.mxu0 %v563
        %2570 = vmatmul.f32.gmra.mxu0 %v2323
        %v2571 = vpop.f32.mrf.mxu0
        %v2572 = vadd.f32 0.0, %v2571
        %2573 = vdwg.mxu0
        %2574 = vmatpush.msra.mxu0 %v624
        %2575 = vmatpush.msra.mxu0 %v620
        %2576 = vmatpush.msra.mxu0 %v616
        %2577 = vmatpush.msra.mxu0 %v612
        %2578 = vmatpush.msra.mxu0 %v608
        %2579 = vmatpush.msra.mxu0 %v604
        %2580 = vmatpush.msra.mxu0 %v600
        %2581 = vmatpush.msra.mxu0 %v596
        %2582 = vmatpush.msra.mxu0 %v592
        %2583 = vmatpush.msra.mxu0 %v588
        %2584 = vmatpush.msra.mxu0 %v584
        %2585 = vmatpush.msra.mxu0 %v580
        %2586 = vmatpush.msra.mxu0 %v576
        %2587 = vmatpush.msra.mxu0 %v572
        %2588 = vmatpush.msra.mxu0 %v568
        %2589 = vmatpush.msra.mxu0 %v564
        %2590 = vmatmul.f32.gmra.mxu0 %v2323
        %v2591 = vpop.f32.mrf.mxu0
        %v2592 = vadd.f32 0.0, %v2591
        %2593 = vdwg.mxu0
        %2594 = vmatpush.msra.mxu0 %v625
        %2595 = vmatpush.msra.mxu0 %v621
        %2596 = vmatpush.msra.mxu0 %v617
        %2597 = vmatpush.msra.mxu0 %v613
        %2598 = vmatpush.msra.mxu0 %v609
        %2599 = vmatpush.msra.mxu0 %v605
        %2600 = vmatpush.msra.mxu0 %v601
        %2601 = vmatpush.msra.mxu0 %v597
        %2602 = vmatpush.msra.mxu0 %v593
        %2603 = vmatpush.msra.mxu0 %v589
        %2604 = vmatpush.msra.mxu0 %v585
        %2605 = vmatpush.msra.mxu0 %v581
        %2606 = vmatpush.msra.mxu0 %v577
        %2607 = vmatpush.msra.mxu0 %v573
        %2608 = vmatpush.msra.mxu0 %v569
        %2609 = vmatpush.msra.mxu0 %v565
        %2610 = vmatmul.f32.gmra.mxu0 %v2323
        %v2611 = vpop.f32.mrf.mxu0
        %v2612 = vadd.f32 0.0, %v2611
        %2613 = vdwg.mxu0
        %2614 = vmatpush.msra.mxu0 %v626
        %2615 = vmatpush.msra.mxu0 %v622
        %2616 = vmatpush.msra.mxu0 %v618
        %2617 = vmatpush.msra.mxu0 %v614
        %2618 = vmatpush.msra.mxu0 %v610
        %2619 = vmatpush.msra.mxu0 %v606
        %2620 = vmatpush.msra.mxu0 %v602
        %2621 = vmatpush.msra.mxu0 %v598
        %2622 = vmatpush.msra.mxu0 %v594
        %2623 = vmatpush.msra.mxu0 %v590
        %2624 = vmatpush.msra.mxu0 %v586
        %2625 = vmatpush.msra.mxu0 %v582
        %2626 = vmatpush.msra.mxu0 %v578
        %2627 = vmatpush.msra.mxu0 %v574
        %2628 = vmatpush.msra.mxu0 %v570
        %2629 = vmatpush.msra.mxu0 %v566
        %2630 = vmatmul.f32.gmra.mxu0 %v2323
        %v2631 = vpop.f32.mrf.mxu0
        %v2632 = vadd.f32 0.0, %v2631
        %2633 = vdwg.mxu0
        %v2634 = vadd.f32 %v2550, %v2572
        %v2635 = vadd.f32 %v2551, %v2592
        %v2636 = vadd.f32 %v2552, %v2612
        %v2637 = vadd.f32 %v2553, %v2632
        %v2638 = vxor.u32 %v2634, 2147483648
        %v2639 = vmul.f32 %v2638, 1.442695
        %v2640 = vpow.pop %v2639
        %v2641 = vadd.f32 %v2640, 1.0
        %v2642 = vrcp.pop %v2641
        %v2643 = vmul.f32 %v2641, %v2642
        %v2644 = vsub.f32 1.0, %v2643
        %v2645 = vmul.f32 %v2642, %v2644
        %v2646 = vadd.f32 %v2642, %v2645
        %vm2647 = vweird.f32 %v2641
        %vm2648 = vweird.f32 %v2642
        %vm2649 = vmor %vm2647, %vm2648
        %v2650 = vsel %vm2649, %v2642, %v2646
        %v2651 = vand.u32 2147483647, %v2641
        %vm2652 = vcmp.eq.f32.partialorder %v2651, 8.507059e+37
        %v2653 = vand.u32 %v2641, 2147483648
        %v2654 = vor.u32 1.1754944e-38, %v2653
        %v2655 = vsel %vm2652, %v2654, %v2650
        %v2656 = vmul.f32 1.0, %v2655
        %v2657 = vxor.u32 %v2635, 2147483648
        %v2658 = vmul.f32 %v2657, 1.442695
        %v2659 = vpow.pop %v2658
        %v2660 = vadd.f32 %v2659, 1.0
        %v2661 = vrcp.pop %v2660
        %v2662 = vmul.f32 %v2660, %v2661
        %v2663 = vsub.f32 1.0, %v2662
        %v2664 = vmul.f32 %v2661, %v2663
        %v2665 = vadd.f32 %v2661, %v2664
        %vm2666 = vweird.f32 %v2660
        %vm2667 = vweird.f32 %v2661
        %vm2668 = vmor %vm2666, %vm2667
        %v2669 = vsel %vm2668, %v2661, %v2665
        %v2670 = vand.u32 2147483647, %v2660
        %vm2671 = vcmp.eq.f32.partialorder %v2670, 8.507059e+37
        %v2672 = vand.u32 %v2660, 2147483648
        %v2673 = vor.u32 1.1754944e-38, %v2672
        %v2674 = vsel %vm2671, %v2673, %v2669
        %v2675 = vmul.f32 1.0, %v2674
        %v2676 = vtanh.pop %v2636
        %v2677 = vxor.u32 %v2637, 2147483648
        %v2678 = vmul.f32 %v2677, 1.442695
        %v2679 = vpow.pop %v2678
        %v2680 = vadd.f32 %v2679, 1.0
        %v2681 = vrcp.pop %v2680
        %v2682 = vmul.f32 %v2680, %v2681
        %v2683 = vsub.f32 1.0, %v2682
        %v2684 = vmul.f32 %v2681, %v2683
        %v2685 = vadd.f32 %v2681, %v2684
        %vm2686 = vweird.f32 %v2680
        %vm2687 = vweird.f32 %v2681
        %vm2688 = vmor %vm2686, %vm2687
        %v2689 = vsel %vm2688, %v2681, %v2685
        %v2690 = vand.u32 2147483647, %v2680
        %vm2691 = vcmp.eq.f32.partialorder %v2690, 8.507059e+37
        %v2692 = vand.u32 %v2680, 2147483648
        %v2693 = vor.u32 1.1754944e-38, %v2692
        %v2694 = vsel %vm2691, %v2693, %v2689
        %v2695 = vmul.f32 1.0, %v2694
        %v2696 = vmul.f32 %v2675, %v2321
        %v2697 = vmul.f32 %v2656, %v2676
        %v2698 = vadd.f32 %v2696, %v2697
        %v2699 = vtanh.pop %v2698
        %v2700 = vmul.f32 %v2695, %v2699
        %2701 = vmatpush.msra.mxu0 %v687
        %2702 = vmatpush.msra.mxu0 %v683
        %2703 = vmatpush.msra.mxu0 %v679
        %2704 = vmatpush.msra.mxu0 %v675
        %2705 = vmatpush.msra.mxu0 %v671
        %2706 = vmatpush.msra.mxu0 %v667
        %2707 = vmatpush.msra.mxu0 %v663
        %2708 = vmatpush.msra.mxu0 %v659
        %2709 = vmatpush.msra.mxu0 %v655
        %2710 = vmatpush.msra.mxu0 %v651
        %2711 = vmatpush.msra.mxu0 %v647
        %2712 = vmatpush.msra.mxu0 %v643
        %2713 = vmatpush.msra.mxu0 %v639
        %2714 = vmatpush.msra.mxu0 %v635
        %2715 = vmatpush.msra.mxu0 %v631
        %2716 = vmatpush.msra.mxu0 %v627
        %2717 = vmatmul.f32.gmra.mxu0 %v2700
        %v2718 = vpop.f32.mrf.mxu0
        %v2719 = vadd.f32 %v757, %v2718
        %2720 = vdwg.mxu0
        %2721 = vmatpush.msra.mxu0 %v751
        %2722 = vmatpush.msra.mxu0 %v747
        %2723 = vmatpush.msra.mxu0 %v743
        %2724 = vmatpush.msra.mxu0 %v739
        %2725 = vmatpush.msra.mxu0 %v735
        %2726 = vmatpush.msra.mxu0 %v731
        %2727 = vmatpush.msra.mxu0 %v727
        %2728 = vmatpush.msra.mxu0 %v723
        %2729 = vmatpush.msra.mxu0 %v719
        %2730 = vmatpush.msra.mxu0 %v715
        %2731 = vmatpush.msra.mxu0 %v711
        %2732 = vmatpush.msra.mxu0 %v707
        %2733 = vmatpush.msra.mxu0 %v703
        %2734 = vmatpush.msra.mxu0 %v699
        %2735 = vmatpush.msra.mxu0 %v695
        %2736 = vmatpush.msra.mxu0 %v691
        %2737 = vmatmul.f32.gmra.mxu0 %v2546
        %v2738 = vpop.f32.mrf.mxu0
        %v2739 = vadd.f32 %v2719, %v2738
        %2740 = vdwg.mxu0
        %2741 = vmatpush.msra.mxu0 %v688
        %2742 = vmatpush.msra.mxu0 %v684
        %2743 = vmatpush.msra.mxu0 %v680
        %2744 = vmatpush.msra.mxu0 %v676
        %2745 = vmatpush.msra.mxu0 %v672
        %2746 = vmatpush.msra.mxu0 %v668
        %2747 = vmatpush.msra.mxu0 %v664
        %2748 = vmatpush.msra.mxu0 %v660
        %2749 = vmatpush.msra.mxu0 %v656
        %2750 = vmatpush.msra.mxu0 %v652
        %2751 = vmatpush.msra.mxu0 %v648
        %2752 = vmatpush.msra.mxu0 %v644
        %2753 = vmatpush.msra.mxu0 %v640
        %2754 = vmatpush.msra.mxu0 %v636
        %2755 = vmatpush.msra.mxu0 %v632
        %2756 = vmatpush.msra.mxu0 %v628
        %2757 = vmatmul.f32.gmra.mxu0 %v2700
        %v2758 = vpop.f32.mrf.mxu0
        %v2759 = vadd.f32 %v758, %v2758
        %2760 = vdwg.mxu0
        %2761 = vmatpush.msra.mxu0 %v752
        %2762 = vmatpush.msra.mxu0 %v748
        %2763 = vmatpush.msra.mxu0 %v744
        %2764 = vmatpush.msra.mxu0 %v740
        %2765 = vmatpush.msra.mxu0 %v736
        %2766 = vmatpush.msra.mxu0 %v732
        %2767 = vmatpush.msra.mxu0 %v728
        %2768 = vmatpush.msra.mxu0 %v724
        %2769 = vmatpush.msra.mxu0 %v720
        %2770 = vmatpush.msra.mxu0 %v716
        %2771 = vmatpush.msra.mxu0 %v712
        %2772 = vmatpush.msra.mxu0 %v708
        %2773 = vmatpush.msra.mxu0 %v704
        %2774 = vmatpush.msra.mxu0 %v700
        %2775 = vmatpush.msra.mxu0 %v696
        %2776 = vmatpush.msra.mxu0 %v692
        %2777 = vmatmul.f32.gmra.mxu0 %v2546
        %v2778 = vpop.f32.mrf.mxu0
        %v2779 = vadd.f32 %v2759, %v2778
        %2780 = vdwg.mxu0
        %2781 = vmatpush.msra.mxu0 %v689
        %2782 = vmatpush.msra.mxu0 %v685
        %2783 = vmatpush.msra.mxu0 %v681
        %2784 = vmatpush.msra.mxu0 %v677
        %2785 = vmatpush.msra.mxu0 %v673
        %2786 = vmatpush.msra.mxu0 %v669
        %2787 = vmatpush.msra.mxu0 %v665
        %2788 = vmatpush.msra.mxu0 %v661
        %2789 = vmatpush.msra.mxu0 %v657
        %2790 = vmatpush.msra.mxu0 %v653
        %2791 = vmatpush.msra.mxu0 %v649
        %2792 = vmatpush.msra.mxu0 %v645
        %2793 = vmatpush.msra.mxu0 %v641
        %2794 = vmatpush.msra.mxu0 %v637
        %2795 = vmatpush.msra.mxu0 %v633
        %2796 = vmatpush.msra.mxu0 %v629
        %2797 = vmatmul.f32.gmra.mxu0 %v2700
        %v2798 = vpop.f32.mrf.mxu0
        %v2799 = vadd.f32 %v759, %v2798
        %2800 = vdwg.mxu0
        %2801 = vmatpush.msra.mxu0 %v753
        %2802 = vmatpush.msra.mxu0 %v749
        %2803 = vmatpush.msra.mxu0 %v745
        %2804 = vmatpush.msra.mxu0 %v741
        %2805 = vmatpush.msra.mxu0 %v737
        %2806 = vmatpush.msra.mxu0 %v733
        %2807 = vmatpush.msra.mxu0 %v729
        %2808 = vmatpush.msra.mxu0 %v725
        %2809 = vmatpush.msra.mxu0 %v721
        %2810 = vmatpush.msra.mxu0 %v717
        %2811 = vmatpush.msra.mxu0 %v713
        %2812 = vmatpush.msra.mxu0 %v709
        %2813 = vmatpush.msra.mxu0 %v705
        %2814 = vmatpush.msra.mxu0 %v701
        %2815 = vmatpush.msra.mxu0 %v697
        %2816 = vmatpush.msra.mxu0 %v693
        %2817 = vmatmul.f32.gmra.mxu0 %v2546
        %v2818 = vpop.f32.mrf.mxu0
        %v2819 = vadd.f32 %v2799, %v2818
        %2820 = vdwg.mxu0
        %2821 = vmatpush.msra.mxu0 %v690
        %2822 = vmatpush.msra.mxu0 %v686
        %2823 = vmatpush.msra.mxu0 %v682
        %2824 = vmatpush.msra.mxu0 %v678
        %2825 = vmatpush.msra.mxu0 %v674
        %2826 = vmatpush.msra.mxu0 %v670
        %2827 = vmatpush.msra.mxu0 %v666
        %2828 = vmatpush.msra.mxu0 %v662
        %2829 = vmatpush.msra.mxu0 %v658
        %2830 = vmatpush.msra.mxu0 %v654
        %2831 = vmatpush.msra.mxu0 %v650
        %2832 = vmatpush.msra.mxu0 %v646
        %2833 = vmatpush.msra.mxu0 %v642
        %2834 = vmatpush.msra.mxu0 %v638
        %2835 = vmatpush.msra.mxu0 %v634
        %2836 = vmatpush.msra.mxu0 %v630
        %2837 = vmatmul.f32.gmra.mxu0 %v2700
        %v2838 = vpop.f32.mrf.mxu0
        %v2839 = vadd.f32 %v760, %v2838
        %2840 = vdwg.mxu0
        %2841 = vmatpush.msra.mxu0 %v754
        %2842 = vmatpush.msra.mxu0 %v750
        %2843 = vmatpush.msra.mxu0 %v746
        %2844 = vmatpush.msra.mxu0 %v742
        %2845 = vmatpush.msra.mxu0 %v738
        %2846 = vmatpush.msra.mxu0 %v734
        %2847 = vmatpush.msra.mxu0 %v730
        %2848 = vmatpush.msra.mxu0 %v726
        %2849 = vmatpush.msra.mxu0 %v722
        %2850 = vmatpush.msra.mxu0 %v718
        %2851 = vmatpush.msra.mxu0 %v714
        %2852 = vmatpush.msra.mxu0 %v710
        %2853 = vmatpush.msra.mxu0 %v706
        %2854 = vmatpush.msra.mxu0 %v702
        %2855 = vmatpush.msra.mxu0 %v698
        %2856 = vmatpush.msra.mxu0 %v694
        %2857 = vmatmul.f32.gmra.mxu0 %v2546
        %v2858 = vpop.f32.mrf.mxu0
        %v2859 = vadd.f32 %v2839, %v2858
        %2860 = vdwg.mxu0
        %v2861 = vxor.u32 %v2739, 2147483648
        %v2862 = vmul.f32 %v2861, 1.442695
        %v2863 = vpow.pop %v2862
        %v2864 = vadd.f32 %v2863, 1.0
        %v2865 = vrcp.pop %v2864
        %v2866 = vmul.f32 %v2864, %v2865
        %v2867 = vsub.f32 1.0, %v2866
        %v2868 = vmul.f32 %v2865, %v2867
        %v2869 = vadd.f32 %v2865, %v2868
        %vm2870 = vweird.f32 %v2864
        %vm2871 = vweird.f32 %v2865
        %vm2872 = vmor %vm2870, %vm2871
        %v2873 = vsel %vm2872, %v2865, %v2869
        %v2874 = vand.u32 2147483647, %v2864
        %vm2875 = vcmp.eq.f32.partialorder %v2874, 8.507059e+37
        %v2876 = vand.u32 %v2864, 2147483648
        %v2877 = vor.u32 1.1754944e-38, %v2876
        %v2878 = vsel %vm2875, %v2877, %v2873
        %v2879 = vmul.f32 1.0, %v2878
        %v2880 = vxor.u32 %v2779, 2147483648
        %v2881 = vmul.f32 %v2880, 1.442695
        %v2882 = vpow.pop %v2881
        %v2883 = vadd.f32 %v2882, 1.0
        %v2884 = vrcp.pop %v2883
        %v2885 = vmul.f32 %v2883, %v2884
        %v2886 = vsub.f32 1.0, %v2885
        %v2887 = vmul.f32 %v2884, %v2886
        %v2888 = vadd.f32 %v2884, %v2887
        %vm2889 = vweird.f32 %v2883
        %vm2890 = vweird.f32 %v2884
        %vm2891 = vmor %vm2889, %vm2890
        %v2892 = vsel %vm2891, %v2884, %v2888
        %v2893 = vand.u32 2147483647, %v2883
        %vm2894 = vcmp.eq.f32.partialorder %v2893, 8.507059e+37
        %v2895 = vand.u32 %v2883, 2147483648
        %v2896 = vor.u32 1.1754944e-38, %v2895
        %v2897 = vsel %vm2894, %v2896, %v2892
        %v2898 = vmul.f32 1.0, %v2897
        %v2899 = vtanh.pop %v2819
        %v2900 = vxor.u32 %v2859, 2147483648
        %v2901 = vmul.f32 %v2900, 1.442695
        %v2902 = vpow.pop %v2901
        %v2903 = vadd.f32 %v2902, 1.0
        %v2904 = vrcp.pop %v2903
        %v2905 = vmul.f32 %v2903, %v2904
        %v2906 = vsub.f32 1.0, %v2905
        %v2907 = vmul.f32 %v2904, %v2906
        %v2908 = vadd.f32 %v2904, %v2907
        %vm2909 = vweird.f32 %v2903
        %vm2910 = vweird.f32 %v2904
        %vm2911 = vmor %vm2909, %vm2910
        %v2912 = vsel %vm2911, %v2904, %v2908
        %v2913 = vand.u32 2147483647, %v2903
        %vm2914 = vcmp.eq.f32.partialorder %v2913, 8.507059e+37
        %v2915 = vand.u32 %v2903, 2147483648
        %v2916 = vor.u32 1.1754944e-38, %v2915
        %v2917 = vsel %vm2914, %v2916, %v2912
        %v2918 = vmul.f32 1.0, %v2917
        %v2919 = vmul.f32 %v2898, %v2544
        %v2920 = vmul.f32 %v2879, %v2899
        %v2921 = vadd.f32 %v2919, %v2920
        %v2922 = vtanh.pop %v2921
        %v2923 = vmul.f32 %v2918, %v2922
        %s2924 = scalar_lea.vmem [#allocation3], 32
        %2925 = vst [vmem:[%s2924] sm:$0xff] %v2923
        %s2926 = scalar_lea.vmem [#allocation2], 160
        %v2927 = vld [vmem:[%s2926] sm:$0xff]
        %v2928 = vld [vmem:[%s2926 + $0x8] sm:$0xff]
        %v2929 = vld [vmem:[%s2926 + $0x10] sm:$0xff]
        %v2930 = vld [vmem:[%s2926 + $0x18] sm:$0xff]
        %2931 = vmatpush.msra.mxu0 %v623
        %2932 = vmatpush.msra.mxu0 %v619
        %2933 = vmatpush.msra.mxu0 %v615
        %2934 = vmatpush.msra.mxu0 %v611
        %2935 = vmatpush.msra.mxu0 %v607
        %2936 = vmatpush.msra.mxu0 %v603
        %2937 = vmatpush.msra.mxu0 %v599
        %2938 = vmatpush.msra.mxu0 %v595
        %2939 = vmatpush.msra.mxu0 %v591
        %2940 = vmatpush.msra.mxu0 %v587
        %2941 = vmatpush.msra.mxu0 %v583
        %2942 = vmatpush.msra.mxu0 %v579
        %2943 = vmatpush.msra.mxu0 %v575
        %2944 = vmatpush.msra.mxu0 %v571
        %2945 = vmatpush.msra.mxu0 %v567
        %2946 = vmatpush.msra.mxu0 %v563
        %2947 = vmatmul.f32.gmra.mxu0 %v2700
        %v2948 = vpop.f32.mrf.mxu0
        %v2949 = vadd.f32 0.0, %v2948
        %2950 = vdwg.mxu0
        %2951 = vmatpush.msra.mxu0 %v624
        %2952 = vmatpush.msra.mxu0 %v620
        %2953 = vmatpush.msra.mxu0 %v616
        %2954 = vmatpush.msra.mxu0 %v612
        %2955 = vmatpush.msra.mxu0 %v608
        %2956 = vmatpush.msra.mxu0 %v604
        %2957 = vmatpush.msra.mxu0 %v600
        %2958 = vmatpush.msra.mxu0 %v596
        %2959 = vmatpush.msra.mxu0 %v592
        %2960 = vmatpush.msra.mxu0 %v588
        %2961 = vmatpush.msra.mxu0 %v584
        %2962 = vmatpush.msra.mxu0 %v580
        %2963 = vmatpush.msra.mxu0 %v576
        %2964 = vmatpush.msra.mxu0 %v572
        %2965 = vmatpush.msra.mxu0 %v568
        %2966 = vmatpush.msra.mxu0 %v564
        %2967 = vmatmul.f32.gmra.mxu0 %v2700
        %v2968 = vpop.f32.mrf.mxu0
        %v2969 = vadd.f32 0.0, %v2968
        %2970 = vdwg.mxu0
        %2971 = vmatpush.msra.mxu0 %v625
        %2972 = vmatpush.msra.mxu0 %v621
        %2973 = vmatpush.msra.mxu0 %v617
        %2974 = vmatpush.msra.mxu0 %v613
        %2975 = vmatpush.msra.mxu0 %v609
        %2976 = vmatpush.msra.mxu0 %v605
        %2977 = vmatpush.msra.mxu0 %v601
        %2978 = vmatpush.msra.mxu0 %v597
        %2979 = vmatpush.msra.mxu0 %v593
        %2980 = vmatpush.msra.mxu0 %v589
        %2981 = vmatpush.msra.mxu0 %v585
        %2982 = vmatpush.msra.mxu0 %v581
        %2983 = vmatpush.msra.mxu0 %v577
        %2984 = vmatpush.msra.mxu0 %v573
        %2985 = vmatpush.msra.mxu0 %v569
        %2986 = vmatpush.msra.mxu0 %v565
        %2987 = vmatmul.f32.gmra.mxu0 %v2700
        %v2988 = vpop.f32.mrf.mxu0
        %v2989 = vadd.f32 0.0, %v2988
        %2990 = vdwg.mxu0
        %2991 = vmatpush.msra.mxu0 %v626
        %2992 = vmatpush.msra.mxu0 %v622
        %2993 = vmatpush.msra.mxu0 %v618
        %2994 = vmatpush.msra.mxu0 %v614
        %2995 = vmatpush.msra.mxu0 %v610
        %2996 = vmatpush.msra.mxu0 %v606
        %2997 = vmatpush.msra.mxu0 %v602
        %2998 = vmatpush.msra.mxu0 %v598
        %2999 = vmatpush.msra.mxu0 %v594
        %3000 = vmatpush.msra.mxu0 %v590
        %3001 = vmatpush.msra.mxu0 %v586
        %3002 = vmatpush.msra.mxu0 %v582
        %3003 = vmatpush.msra.mxu0 %v578
        %3004 = vmatpush.msra.mxu0 %v574
        %3005 = vmatpush.msra.mxu0 %v570
        %3006 = vmatpush.msra.mxu0 %v566
        %3007 = vmatmul.f32.gmra.mxu0 %v2700
        %v3008 = vpop.f32.mrf.mxu0
        %v3009 = vadd.f32 0.0, %v3008
        %3010 = vdwg.mxu0
        %v3011 = vadd.f32 %v2927, %v2949
        %v3012 = vadd.f32 %v2928, %v2969
        %v3013 = vadd.f32 %v2929, %v2989
        %v3014 = vadd.f32 %v2930, %v3009
        %v3015 = vxor.u32 %v3011, 2147483648
        %v3016 = vmul.f32 %v3015, 1.442695
        %v3017 = vpow.pop %v3016
        %v3018 = vadd.f32 %v3017, 1.0
        %v3019 = vrcp.pop %v3018
        %v3020 = vmul.f32 %v3018, %v3019
        %v3021 = vsub.f32 1.0, %v3020
        %v3022 = vmul.f32 %v3019, %v3021
        %v3023 = vadd.f32 %v3019, %v3022
        %vm3024 = vweird.f32 %v3018
        %vm3025 = vweird.f32 %v3019
        %vm3026 = vmor %vm3024, %vm3025
        %v3027 = vsel %vm3026, %v3019, %v3023
        %v3028 = vand.u32 2147483647, %v3018
        %vm3029 = vcmp.eq.f32.partialorder %v3028, 8.507059e+37
        %v3030 = vand.u32 %v3018, 2147483648
        %v3031 = vor.u32 1.1754944e-38, %v3030
        %v3032 = vsel %vm3029, %v3031, %v3027
        %v3033 = vmul.f32 1.0, %v3032
        %v3034 = vxor.u32 %v3012, 2147483648
        %v3035 = vmul.f32 %v3034, 1.442695
        %v3036 = vpow.pop %v3035
        %v3037 = vadd.f32 %v3036, 1.0
        %v3038 = vrcp.pop %v3037
        %v3039 = vmul.f32 %v3037, %v3038
        %v3040 = vsub.f32 1.0, %v3039
        %v3041 = vmul.f32 %v3038, %v3040
        %v3042 = vadd.f32 %v3038, %v3041
        %vm3043 = vweird.f32 %v3037
        %vm3044 = vweird.f32 %v3038
        %vm3045 = vmor %vm3043, %vm3044
        %v3046 = vsel %vm3045, %v3038, %v3042
        %v3047 = vand.u32 2147483647, %v3037
        %vm3048 = vcmp.eq.f32.partialorder %v3047, 8.507059e+37
        %v3049 = vand.u32 %v3037, 2147483648
        %v3050 = vor.u32 1.1754944e-38, %v3049
        %v3051 = vsel %vm3048, %v3050, %v3046
        %v3052 = vmul.f32 1.0, %v3051
        %v3053 = vtanh.pop %v3013
        %v3054 = vxor.u32 %v3014, 2147483648
        %v3055 = vmul.f32 %v3054, 1.442695
        %v3056 = vpow.pop %v3055
        %v3057 = vadd.f32 %v3056, 1.0
        %v3058 = vrcp.pop %v3057
        %v3059 = vmul.f32 %v3057, %v3058
        %v3060 = vsub.f32 1.0, %v3059
        %v3061 = vmul.f32 %v3058, %v3060
        %v3062 = vadd.f32 %v3058, %v3061
        %vm3063 = vweird.f32 %v3057
        %vm3064 = vweird.f32 %v3058
        %vm3065 = vmor %vm3063, %vm3064
        %v3066 = vsel %vm3065, %v3058, %v3062
        %v3067 = vand.u32 2147483647, %v3057
        %vm3068 = vcmp.eq.f32.partialorder %v3067, 8.507059e+37
        %v3069 = vand.u32 %v3057, 2147483648
        %v3070 = vor.u32 1.1754944e-38, %v3069
        %v3071 = vsel %vm3068, %v3070, %v3066
        %v3072 = vmul.f32 1.0, %v3071
        %v3073 = vmul.f32 %v3052, %v2698
        %v3074 = vmul.f32 %v3033, %v3053
        %v3075 = vadd.f32 %v3073, %v3074
        %v3076 = vtanh.pop %v3075
        %v3077 = vmul.f32 %v3072, %v3076
        %3078 = vmatpush.msra.mxu0 %v687
        %3079 = vmatpush.msra.mxu0 %v683
        %3080 = vmatpush.msra.mxu0 %v679
        %3081 = vmatpush.msra.mxu0 %v675
        %3082 = vmatpush.msra.mxu0 %v671
        %3083 = vmatpush.msra.mxu0 %v667
        %3084 = vmatpush.msra.mxu0 %v663
        %3085 = vmatpush.msra.mxu0 %v659
        %3086 = vmatpush.msra.mxu0 %v655
        %3087 = vmatpush.msra.mxu0 %v651
        %3088 = vmatpush.msra.mxu0 %v647
        %3089 = vmatpush.msra.mxu0 %v643
        %3090 = vmatpush.msra.mxu0 %v639
        %3091 = vmatpush.msra.mxu0 %v635
        %3092 = vmatpush.msra.mxu0 %v631
        %3093 = vmatpush.msra.mxu0 %v627
        %3094 = vmatmul.f32.gmra.mxu0 %v3077
        %v3095 = vpop.f32.mrf.mxu0
        %v3096 = vadd.f32 %v757, %v3095
        %3097 = vdwg.mxu0
        %3098 = vmatpush.msra.mxu0 %v751
        %3099 = vmatpush.msra.mxu0 %v747
        %3100 = vmatpush.msra.mxu0 %v743
        %3101 = vmatpush.msra.mxu0 %v739
        %3102 = vmatpush.msra.mxu0 %v735
        %3103 = vmatpush.msra.mxu0 %v731
        %3104 = vmatpush.msra.mxu0 %v727
        %3105 = vmatpush.msra.mxu0 %v723
        %3106 = vmatpush.msra.mxu0 %v719
        %3107 = vmatpush.msra.mxu0 %v715
        %3108 = vmatpush.msra.mxu0 %v711
        %3109 = vmatpush.msra.mxu0 %v707
        %3110 = vmatpush.msra.mxu0 %v703
        %3111 = vmatpush.msra.mxu0 %v699
        %3112 = vmatpush.msra.mxu0 %v695
        %3113 = vmatpush.msra.mxu0 %v691
        %3114 = vmatmul.f32.gmra.mxu0 %v2923
        %v3115 = vpop.f32.mrf.mxu0
        %v3116 = vadd.f32 %v3096, %v3115
        %3117 = vdwg.mxu0
        %3118 = vmatpush.msra.mxu0 %v688
        %3119 = vmatpush.msra.mxu0 %v684
        %3120 = vmatpush.msra.mxu0 %v680
        %3121 = vmatpush.msra.mxu0 %v676
        %3122 = vmatpush.msra.mxu0 %v672
        %3123 = vmatpush.msra.mxu0 %v668
        %3124 = vmatpush.msra.mxu0 %v664
        %3125 = vmatpush.msra.mxu0 %v660
        %3126 = vmatpush.msra.mxu0 %v656
        %3127 = vmatpush.msra.mxu0 %v652
        %3128 = vmatpush.msra.mxu0 %v648
        %3129 = vmatpush.msra.mxu0 %v644
        %3130 = vmatpush.msra.mxu0 %v640
        %3131 = vmatpush.msra.mxu0 %v636
        %3132 = vmatpush.msra.mxu0 %v632
        %3133 = vmatpush.msra.mxu0 %v628
        %3134 = vmatmul.f32.gmra.mxu0 %v3077
        %v3135 = vpop.f32.mrf.mxu0
        %v3136 = vadd.f32 %v758, %v3135
        %3137 = vdwg.mxu0
        %3138 = vmatpush.msra.mxu0 %v752
        %3139 = vmatpush.msra.mxu0 %v748
        %3140 = vmatpush.msra.mxu0 %v744
        %3141 = vmatpush.msra.mxu0 %v740
        %3142 = vmatpush.msra.mxu0 %v736
        %3143 = vmatpush.msra.mxu0 %v732
        %3144 = vmatpush.msra.mxu0 %v728
        %3145 = vmatpush.msra.mxu0 %v724
        %3146 = vmatpush.msra.mxu0 %v720
        %3147 = vmatpush.msra.mxu0 %v716
        %3148 = vmatpush.msra.mxu0 %v712
        %3149 = vmatpush.msra.mxu0 %v708
        %3150 = vmatpush.msra.mxu0 %v704
        %3151 = vmatpush.msra.mxu0 %v700
        %3152 = vmatpush.msra.mxu0 %v696
        %3153 = vmatpush.msra.mxu0 %v692
        %3154 = vmatmul.f32.gmra.mxu0 %v2923
        %v3155 = vpop.f32.mrf.mxu0
        %v3156 = vadd.f32 %v3136, %v3155
        %3157 = vdwg.mxu0
        %3158 = vmatpush.msra.mxu0 %v689
        %3159 = vmatpush.msra.mxu0 %v685
        %3160 = vmatpush.msra.mxu0 %v681
        %3161 = vmatpush.msra.mxu0 %v677
        %3162 = vmatpush.msra.mxu0 %v673
        %3163 = vmatpush.msra.mxu0 %v669
        %3164 = vmatpush.msra.mxu0 %v665
        %3165 = vmatpush.msra.mxu0 %v661
        %3166 = vmatpush.msra.mxu0 %v657
        %3167 = vmatpush.msra.mxu0 %v653
        %3168 = vmatpush.msra.mxu0 %v649
        %3169 = vmatpush.msra.mxu0 %v645
        %3170 = vmatpush.msra.mxu0 %v641
        %3171 = vmatpush.msra.mxu0 %v637
        %3172 = vmatpush.msra.mxu0 %v633
        %3173 = vmatpush.msra.mxu0 %v629
        %3174 = vmatmul.f32.gmra.mxu0 %v3077
        %v3175 = vpop.f32.mrf.mxu0
        %v3176 = vadd.f32 %v759, %v3175
        %3177 = vdwg.mxu0
        %3178 = vmatpush.msra.mxu0 %v753
        %3179 = vmatpush.msra.mxu0 %v749
        %3180 = vmatpush.msra.mxu0 %v745
        %3181 = vmatpush.msra.mxu0 %v741
        %3182 = vmatpush.msra.mxu0 %v737
        %3183 = vmatpush.msra.mxu0 %v733
        %3184 = vmatpush.msra.mxu0 %v729
        %3185 = vmatpush.msra.mxu0 %v725
        %3186 = vmatpush.msra.mxu0 %v721
        %3187 = vmatpush.msra.mxu0 %v717
        %3188 = vmatpush.msra.mxu0 %v713
        %3189 = vmatpush.msra.mxu0 %v709
        %3190 = vmatpush.msra.mxu0 %v705
        %3191 = vmatpush.msra.mxu0 %v701
        %3192 = vmatpush.msra.mxu0 %v697
        %3193 = vmatpush.msra.mxu0 %v693
        %3194 = vmatmul.f32.gmra.mxu0 %v2923
        %v3195 = vpop.f32.mrf.mxu0
        %v3196 = vadd.f32 %v3176, %v3195
        %3197 = vdwg.mxu0
        %3198 = vmatpush.msra.mxu0 %v690
        %3199 = vmatpush.msra.mxu0 %v686
        %3200 = vmatpush.msra.mxu0 %v682
        %3201 = vmatpush.msra.mxu0 %v678
        %3202 = vmatpush.msra.mxu0 %v674
        %3203 = vmatpush.msra.mxu0 %v670
        %3204 = vmatpush.msra.mxu0 %v666
        %3205 = vmatpush.msra.mxu0 %v662
        %3206 = vmatpush.msra.mxu0 %v658
        %3207 = vmatpush.msra.mxu0 %v654
        %3208 = vmatpush.msra.mxu0 %v650
        %3209 = vmatpush.msra.mxu0 %v646
        %3210 = vmatpush.msra.mxu0 %v642
        %3211 = vmatpush.msra.mxu0 %v638
        %3212 = vmatpush.msra.mxu0 %v634
        %3213 = vmatpush.msra.mxu0 %v630
        %3214 = vmatmul.f32.gmra.mxu0 %v3077
        %v3215 = vpop.f32.mrf.mxu0
        %v3216 = vadd.f32 %v760, %v3215
        %3217 = vdwg.mxu0
        %3218 = vmatpush.msra.mxu0 %v754
        %3219 = vmatpush.msra.mxu0 %v750
        %3220 = vmatpush.msra.mxu0 %v746
        %3221 = vmatpush.msra.mxu0 %v742
        %3222 = vmatpush.msra.mxu0 %v738
        %3223 = vmatpush.msra.mxu0 %v734
        %3224 = vmatpush.msra.mxu0 %v730
        %3225 = vmatpush.msra.mxu0 %v726
        %3226 = vmatpush.msra.mxu0 %v722
        %3227 = vmatpush.msra.mxu0 %v718
        %3228 = vmatpush.msra.mxu0 %v714
        %3229 = vmatpush.msra.mxu0 %v710
        %3230 = vmatpush.msra.mxu0 %v706
        %3231 = vmatpush.msra.mxu0 %v702
        %3232 = vmatpush.msra.mxu0 %v698
        %3233 = vmatpush.msra.mxu0 %v694
        %3234 = vmatmul.f32.gmra.mxu0 %v2923
        %v3235 = vpop.f32.mrf.mxu0
        %v3236 = vadd.f32 %v3216, %v3235
        %3237 = vdwg.mxu0
        %v3238 = vxor.u32 %v3116, 2147483648
        %v3239 = vmul.f32 %v3238, 1.442695
        %v3240 = vpow.pop %v3239
        %v3241 = vadd.f32 %v3240, 1.0
        %v3242 = vrcp.pop %v3241
        %v3243 = vmul.f32 %v3241, %v3242
        %v3244 = vsub.f32 1.0, %v3243
        %v3245 = vmul.f32 %v3242, %v3244
        %v3246 = vadd.f32 %v3242, %v3245
        %vm3247 = vweird.f32 %v3241
        %vm3248 = vweird.f32 %v3242
        %vm3249 = vmor %vm3247, %vm3248
        %v3250 = vsel %vm3249, %v3242, %v3246
        %v3251 = vand.u32 2147483647, %v3241
        %vm3252 = vcmp.eq.f32.partialorder %v3251, 8.507059e+37
        %v3253 = vand.u32 %v3241, 2147483648
        %v3254 = vor.u32 1.1754944e-38, %v3253
        %v3255 = vsel %vm3252, %v3254, %v3250
        %v3256 = vmul.f32 1.0, %v3255
        %v3257 = vxor.u32 %v3156, 2147483648
        %v3258 = vmul.f32 %v3257, 1.442695
        %v3259 = vpow.pop %v3258
        %v3260 = vadd.f32 %v3259, 1.0
        %v3261 = vrcp.pop %v3260
        %v3262 = vmul.f32 %v3260, %v3261
        %v3263 = vsub.f32 1.0, %v3262
        %v3264 = vmul.f32 %v3261, %v3263
        %v3265 = vadd.f32 %v3261, %v3264
        %vm3266 = vweird.f32 %v3260
        %vm3267 = vweird.f32 %v3261
        %vm3268 = vmor %vm3266, %vm3267
        %v3269 = vsel %vm3268, %v3261, %v3265
        %v3270 = vand.u32 2147483647, %v3260
        %vm3271 = vcmp.eq.f32.partialorder %v3270, 8.507059e+37
        %v3272 = vand.u32 %v3260, 2147483648
        %v3273 = vor.u32 1.1754944e-38, %v3272
        %v3274 = vsel %vm3271, %v3273, %v3269
        %v3275 = vmul.f32 1.0, %v3274
        %v3276 = vtanh.pop %v3196
        %v3277 = vxor.u32 %v3236, 2147483648
        %v3278 = vmul.f32 %v3277, 1.442695
        %v3279 = vpow.pop %v3278
        %v3280 = vadd.f32 %v3279, 1.0
        %v3281 = vrcp.pop %v3280
        %v3282 = vmul.f32 %v3280, %v3281
        %v3283 = vsub.f32 1.0, %v3282
        %v3284 = vmul.f32 %v3281, %v3283
        %v3285 = vadd.f32 %v3281, %v3284
        %vm3286 = vweird.f32 %v3280
        %vm3287 = vweird.f32 %v3281
        %vm3288 = vmor %vm3286, %vm3287
        %v3289 = vsel %vm3288, %v3281, %v3285
        %v3290 = vand.u32 2147483647, %v3280
        %vm3291 = vcmp.eq.f32.partialorder %v3290, 8.507059e+37
        %v3292 = vand.u32 %v3280, 2147483648
        %v3293 = vor.u32 1.1754944e-38, %v3292
        %v3294 = vsel %vm3291, %v3293, %v3289
        %v3295 = vmul.f32 1.0, %v3294
        %v3296 = vmul.f32 %v3275, %v2921
        %v3297 = vmul.f32 %v3256, %v3276
        %v3298 = vadd.f32 %v3296, %v3297
        %v3299 = vtanh.pop %v3298
        %v3300 = vmul.f32 %v3295, %v3299
        %s3301 = scalar_lea.vmem [#allocation3], 40
        %3302 = vst [vmem:[%s3301] sm:$0xff] %v3300
        %s3303 = scalar_lea.vmem [#allocation2], 192
        %v3304 = vld [vmem:[%s3303] sm:$0xff]
        %v3305 = vld [vmem:[%s3303 + $0x8] sm:$0xff]
        %v3306 = vld [vmem:[%s3303 + $0x10] sm:$0xff]
        %v3307 = vld [vmem:[%s3303 + $0x18] sm:$0xff]
        %3308 = vmatpush.msra.mxu0 %v623
        %3309 = vmatpush.msra.mxu0 %v619
        %3310 = vmatpush.msra.mxu0 %v615
        %3311 = vmatpush.msra.mxu0 %v611
        %3312 = vmatpush.msra.mxu0 %v607
        %3313 = vmatpush.msra.mxu0 %v603
        %3314 = vmatpush.msra.mxu0 %v599
        %3315 = vmatpush.msra.mxu0 %v595
        %3316 = vmatpush.msra.mxu0 %v591
        %3317 = vmatpush.msra.mxu0 %v587
        %3318 = vmatpush.msra.mxu0 %v583
        %3319 = vmatpush.msra.mxu0 %v579
        %3320 = vmatpush.msra.mxu0 %v575
        %3321 = vmatpush.msra.mxu0 %v571
        %3322 = vmatpush.msra.mxu0 %v567
        %3323 = vmatpush.msra.mxu0 %v563
        %3324 = vmatmul.f32.gmra.mxu0 %v3077
        %v3325 = vpop.f32.mrf.mxu0
        %v3326 = vadd.f32 0.0, %v3325
        %3327 = vdwg.mxu0
        %3328 = vmatpush.msra.mxu0 %v624
        %3329 = vmatpush.msra.mxu0 %v620
        %3330 = vmatpush.msra.mxu0 %v616
        %3331 = vmatpush.msra.mxu0 %v612
        %3332 = vmatpush.msra.mxu0 %v608
        %3333 = vmatpush.msra.mxu0 %v604
        %3334 = vmatpush.msra.mxu0 %v600
        %3335 = vmatpush.msra.mxu0 %v596
        %3336 = vmatpush.msra.mxu0 %v592
        %3337 = vmatpush.msra.mxu0 %v588
        %3338 = vmatpush.msra.mxu0 %v584
        %3339 = vmatpush.msra.mxu0 %v580
        %3340 = vmatpush.msra.mxu0 %v576
        %3341 = vmatpush.msra.mxu0 %v572
        %3342 = vmatpush.msra.mxu0 %v568
        %3343 = vmatpush.msra.mxu0 %v564
        %3344 = vmatmul.f32.gmra.mxu0 %v3077
        %v3345 = vpop.f32.mrf.mxu0
        %v3346 = vadd.f32 0.0, %v3345
        %3347 = vdwg.mxu0
        %3348 = vmatpush.msra.mxu0 %v625
        %3349 = vmatpush.msra.mxu0 %v621
        %3350 = vmatpush.msra.mxu0 %v617
        %3351 = vmatpush.msra.mxu0 %v613
        %3352 = vmatpush.msra.mxu0 %v609
        %3353 = vmatpush.msra.mxu0 %v605
        %3354 = vmatpush.msra.mxu0 %v601
        %3355 = vmatpush.msra.mxu0 %v597
        %3356 = vmatpush.msra.mxu0 %v593
        %3357 = vmatpush.msra.mxu0 %v589
        %3358 = vmatpush.msra.mxu0 %v585
        %3359 = vmatpush.msra.mxu0 %v581
        %3360 = vmatpush.msra.mxu0 %v577
        %3361 = vmatpush.msra.mxu0 %v573
        %3362 = vmatpush.msra.mxu0 %v569
        %3363 = vmatpush.msra.mxu0 %v565
        %3364 = vmatmul.f32.gmra.mxu0 %v3077
        %v3365 = vpop.f32.mrf.mxu0
        %v3366 = vadd.f32 0.0, %v3365
        %3367 = vdwg.mxu0
        %3368 = vmatpush.msra.mxu0 %v626
        %3369 = vmatpush.msra.mxu0 %v622
        %3370 = vmatpush.msra.mxu0 %v618
        %3371 = vmatpush.msra.mxu0 %v614
        %3372 = vmatpush.msra.mxu0 %v610
        %3373 = vmatpush.msra.mxu0 %v606
        %3374 = vmatpush.msra.mxu0 %v602
        %3375 = vmatpush.msra.mxu0 %v598
        %3376 = vmatpush.msra.mxu0 %v594
        %3377 = vmatpush.msra.mxu0 %v590
        %3378 = vmatpush.msra.mxu0 %v586
        %3379 = vmatpush.msra.mxu0 %v582
        %3380 = vmatpush.msra.mxu0 %v578
        %3381 = vmatpush.msra.mxu0 %v574
        %3382 = vmatpush.msra.mxu0 %v570
        %3383 = vmatpush.msra.mxu0 %v566
        %3384 = vmatmul.f32.gmra.mxu0 %v3077
        %v3385 = vpop.f32.mrf.mxu0
        %v3386 = vadd.f32 0.0, %v3385
        %3387 = vdwg.mxu0
        %v3388 = vadd.f32 %v3304, %v3326
        %v3389 = vadd.f32 %v3305, %v3346
        %v3390 = vadd.f32 %v3306, %v3366
        %v3391 = vadd.f32 %v3307, %v3386
        %v3392 = vxor.u32 %v3388, 2147483648
        %v3393 = vmul.f32 %v3392, 1.442695
        %v3394 = vpow.pop %v3393
        %v3395 = vadd.f32 %v3394, 1.0
        %v3396 = vrcp.pop %v3395
        %v3397 = vmul.f32 %v3395, %v3396
        %v3398 = vsub.f32 1.0, %v3397
        %v3399 = vmul.f32 %v3396, %v3398
        %v3400 = vadd.f32 %v3396, %v3399
        %vm3401 = vweird.f32 %v3395
        %vm3402 = vweird.f32 %v3396
        %vm3403 = vmor %vm3401, %vm3402
        %v3404 = vsel %vm3403, %v3396, %v3400
        %v3405 = vand.u32 2147483647, %v3395
        %vm3406 = vcmp.eq.f32.partialorder %v3405, 8.507059e+37
        %v3407 = vand.u32 %v3395, 2147483648
        %v3408 = vor.u32 1.1754944e-38, %v3407
        %v3409 = vsel %vm3406, %v3408, %v3404
        %v3410 = vmul.f32 1.0, %v3409
        %v3411 = vxor.u32 %v3389, 2147483648
        %v3412 = vmul.f32 %v3411, 1.442695
        %v3413 = vpow.pop %v3412
        %v3414 = vadd.f32 %v3413, 1.0
        %v3415 = vrcp.pop %v3414
        %v3416 = vmul.f32 %v3414, %v3415
        %v3417 = vsub.f32 1.0, %v3416
        %v3418 = vmul.f32 %v3415, %v3417
        %v3419 = vadd.f32 %v3415, %v3418
        %vm3420 = vweird.f32 %v3414
        %vm3421 = vweird.f32 %v3415
        %vm3422 = vmor %vm3420, %vm3421
        %v3423 = vsel %vm3422, %v3415, %v3419
        %v3424 = vand.u32 2147483647, %v3414
        %vm3425 = vcmp.eq.f32.partialorder %v3424, 8.507059e+37
        %v3426 = vand.u32 %v3414, 2147483648
        %v3427 = vor.u32 1.1754944e-38, %v3426
        %v3428 = vsel %vm3425, %v3427, %v3423
        %v3429 = vmul.f32 1.0, %v3428
        %v3430 = vtanh.pop %v3390
        %v3431 = vxor.u32 %v3391, 2147483648
        %v3432 = vmul.f32 %v3431, 1.442695
        %v3433 = vpow.pop %v3432
        %v3434 = vadd.f32 %v3433, 1.0
        %v3435 = vrcp.pop %v3434
        %v3436 = vmul.f32 %v3434, %v3435
        %v3437 = vsub.f32 1.0, %v3436
        %v3438 = vmul.f32 %v3435, %v3437
        %v3439 = vadd.f32 %v3435, %v3438
        %vm3440 = vweird.f32 %v3434
        %vm3441 = vweird.f32 %v3435
        %vm3442 = vmor %vm3440, %vm3441
        %v3443 = vsel %vm3442, %v3435, %v3439
        %v3444 = vand.u32 2147483647, %v3434
        %vm3445 = vcmp.eq.f32.partialorder %v3444, 8.507059e+37
        %v3446 = vand.u32 %v3434, 2147483648
        %v3447 = vor.u32 1.1754944e-38, %v3446
        %v3448 = vsel %vm3445, %v3447, %v3443
        %v3449 = vmul.f32 1.0, %v3448
        %v3450 = vmul.f32 %v3429, %v3075
        %v3451 = vmul.f32 %v3410, %v3430
        %v3452 = vadd.f32 %v3450, %v3451
        %v3453 = vtanh.pop %v3452
        %v3454 = vmul.f32 %v3449, %v3453
        %3455 = vmatpush.msra.mxu0 %v687
        %3456 = vmatpush.msra.mxu0 %v683
        %3457 = vmatpush.msra.mxu0 %v679
        %3458 = vmatpush.msra.mxu0 %v675
        %3459 = vmatpush.msra.mxu0 %v671
        %3460 = vmatpush.msra.mxu0 %v667
        %3461 = vmatpush.msra.mxu0 %v663
        %3462 = vmatpush.msra.mxu0 %v659
        %3463 = vmatpush.msra.mxu0 %v655
        %3464 = vmatpush.msra.mxu0 %v651
        %3465 = vmatpush.msra.mxu0 %v647
        %3466 = vmatpush.msra.mxu0 %v643
        %3467 = vmatpush.msra.mxu0 %v639
        %3468 = vmatpush.msra.mxu0 %v635
        %3469 = vmatpush.msra.mxu0 %v631
        %3470 = vmatpush.msra.mxu0 %v627
        %3471 = vmatmul.f32.gmra.mxu0 %v3454
        %v3472 = vpop.f32.mrf.mxu0
        %v3473 = vadd.f32 %v757, %v3472
        %3474 = vdwg.mxu0
        %3475 = vmatpush.msra.mxu0 %v751
        %3476 = vmatpush.msra.mxu0 %v747
        %3477 = vmatpush.msra.mxu0 %v743
        %3478 = vmatpush.msra.mxu0 %v739
        %3479 = vmatpush.msra.mxu0 %v735
        %3480 = vmatpush.msra.mxu0 %v731
        %3481 = vmatpush.msra.mxu0 %v727
        %3482 = vmatpush.msra.mxu0 %v723
        %3483 = vmatpush.msra.mxu0 %v719
        %3484 = vmatpush.msra.mxu0 %v715
        %3485 = vmatpush.msra.mxu0 %v711
        %3486 = vmatpush.msra.mxu0 %v707
        %3487 = vmatpush.msra.mxu0 %v703
        %3488 = vmatpush.msra.mxu0 %v699
        %3489 = vmatpush.msra.mxu0 %v695
        %3490 = vmatpush.msra.mxu0 %v691
        %3491 = vmatmul.f32.gmra.mxu0 %v3300
        %v3492 = vpop.f32.mrf.mxu0
        %v3493 = vadd.f32 %v3473, %v3492
        %3494 = vdwg.mxu0
        %3495 = vmatpush.msra.mxu0 %v688
        %3496 = vmatpush.msra.mxu0 %v684
        %3497 = vmatpush.msra.mxu0 %v680
        %3498 = vmatpush.msra.mxu0 %v676
        %3499 = vmatpush.msra.mxu0 %v672
        %3500 = vmatpush.msra.mxu0 %v668
        %3501 = vmatpush.msra.mxu0 %v664
        %3502 = vmatpush.msra.mxu0 %v660
        %3503 = vmatpush.msra.mxu0 %v656
        %3504 = vmatpush.msra.mxu0 %v652
        %3505 = vmatpush.msra.mxu0 %v648
        %3506 = vmatpush.msra.mxu0 %v644
        %3507 = vmatpush.msra.mxu0 %v640
        %3508 = vmatpush.msra.mxu0 %v636
        %3509 = vmatpush.msra.mxu0 %v632
        %3510 = vmatpush.msra.mxu0 %v628
        %3511 = vmatmul.f32.gmra.mxu0 %v3454
        %v3512 = vpop.f32.mrf.mxu0
        %v3513 = vadd.f32 %v758, %v3512
        %3514 = vdwg.mxu0
        %3515 = vmatpush.msra.mxu0 %v752
        %3516 = vmatpush.msra.mxu0 %v748
        %3517 = vmatpush.msra.mxu0 %v744
        %3518 = vmatpush.msra.mxu0 %v740
        %3519 = vmatpush.msra.mxu0 %v736
        %3520 = vmatpush.msra.mxu0 %v732
        %3521 = vmatpush.msra.mxu0 %v728
        %3522 = vmatpush.msra.mxu0 %v724
        %3523 = vmatpush.msra.mxu0 %v720
        %3524 = vmatpush.msra.mxu0 %v716
        %3525 = vmatpush.msra.mxu0 %v712
        %3526 = vmatpush.msra.mxu0 %v708
        %3527 = vmatpush.msra.mxu0 %v704
        %3528 = vmatpush.msra.mxu0 %v700
        %3529 = vmatpush.msra.mxu0 %v696
        %3530 = vmatpush.msra.mxu0 %v692
        %3531 = vmatmul.f32.gmra.mxu0 %v3300
        %v3532 = vpop.f32.mrf.mxu0
        %v3533 = vadd.f32 %v3513, %v3532
        %3534 = vdwg.mxu0
        %3535 = vmatpush.msra.mxu0 %v689
        %3536 = vmatpush.msra.mxu0 %v685
        %3537 = vmatpush.msra.mxu0 %v681
        %3538 = vmatpush.msra.mxu0 %v677
        %3539 = vmatpush.msra.mxu0 %v673
        %3540 = vmatpush.msra.mxu0 %v669
        %3541 = vmatpush.msra.mxu0 %v665
        %3542 = vmatpush.msra.mxu0 %v661
        %3543 = vmatpush.msra.mxu0 %v657
        %3544 = vmatpush.msra.mxu0 %v653
        %3545 = vmatpush.msra.mxu0 %v649
        %3546 = vmatpush.msra.mxu0 %v645
        %3547 = vmatpush.msra.mxu0 %v641
        %3548 = vmatpush.msra.mxu0 %v637
        %3549 = vmatpush.msra.mxu0 %v633
        %3550 = vmatpush.msra.mxu0 %v629
        %3551 = vmatmul.f32.gmra.mxu0 %v3454
        %v3552 = vpop.f32.mrf.mxu0
        %v3553 = vadd.f32 %v759, %v3552
        %3554 = vdwg.mxu0
        %3555 = vmatpush.msra.mxu0 %v753
        %3556 = vmatpush.msra.mxu0 %v749
        %3557 = vmatpush.msra.mxu0 %v745
        %3558 = vmatpush.msra.mxu0 %v741
        %3559 = vmatpush.msra.mxu0 %v737
        %3560 = vmatpush.msra.mxu0 %v733
        %3561 = vmatpush.msra.mxu0 %v729
        %3562 = vmatpush.msra.mxu0 %v725
        %3563 = vmatpush.msra.mxu0 %v721
        %3564 = vmatpush.msra.mxu0 %v717
        %3565 = vmatpush.msra.mxu0 %v713
        %3566 = vmatpush.msra.mxu0 %v709
        %3567 = vmatpush.msra.mxu0 %v705
        %3568 = vmatpush.msra.mxu0 %v701
        %3569 = vmatpush.msra.mxu0 %v697
        %3570 = vmatpush.msra.mxu0 %v693
        %3571 = vmatmul.f32.gmra.mxu0 %v3300
        %v3572 = vpop.f32.mrf.mxu0
        %v3573 = vadd.f32 %v3553, %v3572
        %3574 = vdwg.mxu0
        %3575 = vmatpush.msra.mxu0 %v690
        %3576 = vmatpush.msra.mxu0 %v686
        %3577 = vmatpush.msra.mxu0 %v682
        %3578 = vmatpush.msra.mxu0 %v678
        %3579 = vmatpush.msra.mxu0 %v674
        %3580 = vmatpush.msra.mxu0 %v670
        %3581 = vmatpush.msra.mxu0 %v666
        %3582 = vmatpush.msra.mxu0 %v662
        %3583 = vmatpush.msra.mxu0 %v658
        %3584 = vmatpush.msra.mxu0 %v654
        %3585 = vmatpush.msra.mxu0 %v650
        %3586 = vmatpush.msra.mxu0 %v646
        %3587 = vmatpush.msra.mxu0 %v642
        %3588 = vmatpush.msra.mxu0 %v638
        %3589 = vmatpush.msra.mxu0 %v634
        %3590 = vmatpush.msra.mxu0 %v630
        %3591 = vmatmul.f32.gmra.mxu0 %v3454
        %v3592 = vpop.f32.mrf.mxu0
        %v3593 = vadd.f32 %v760, %v3592
        %3594 = vdwg.mxu0
        %3595 = vmatpush.msra.mxu0 %v754
        %3596 = vmatpush.msra.mxu0 %v750
        %3597 = vmatpush.msra.mxu0 %v746
        %3598 = vmatpush.msra.mxu0 %v742
        %3599 = vmatpush.msra.mxu0 %v738
        %3600 = vmatpush.msra.mxu0 %v734
        %3601 = vmatpush.msra.mxu0 %v730
        %3602 = vmatpush.msra.mxu0 %v726
        %3603 = vmatpush.msra.mxu0 %v722
        %3604 = vmatpush.msra.mxu0 %v718
        %3605 = vmatpush.msra.mxu0 %v714
        %3606 = vmatpush.msra.mxu0 %v710
        %3607 = vmatpush.msra.mxu0 %v706
        %3608 = vmatpush.msra.mxu0 %v702
        %3609 = vmatpush.msra.mxu0 %v698
        %3610 = vmatpush.msra.mxu0 %v694
        %3611 = vmatmul.f32.gmra.mxu0 %v3300
        %v3612 = vpop.f32.mrf.mxu0
        %v3613 = vadd.f32 %v3593, %v3612
        %3614 = vdwg.mxu0
        %v3615 = vxor.u32 %v3493, 2147483648
        %v3616 = vmul.f32 %v3615, 1.442695
        %v3617 = vpow.pop %v3616
        %v3618 = vadd.f32 %v3617, 1.0
        %v3619 = vrcp.pop %v3618
        %v3620 = vmul.f32 %v3618, %v3619
        %v3621 = vsub.f32 1.0, %v3620
        %v3622 = vmul.f32 %v3619, %v3621
        %v3623 = vadd.f32 %v3619, %v3622
        %vm3624 = vweird.f32 %v3618
        %vm3625 = vweird.f32 %v3619
        %vm3626 = vmor %vm3624, %vm3625
        %v3627 = vsel %vm3626, %v3619, %v3623
        %v3628 = vand.u32 2147483647, %v3618
        %vm3629 = vcmp.eq.f32.partialorder %v3628, 8.507059e+37
        %v3630 = vand.u32 %v3618, 2147483648
        %v3631 = vor.u32 1.1754944e-38, %v3630
        %v3632 = vsel %vm3629, %v3631, %v3627
        %v3633 = vmul.f32 1.0, %v3632
        %v3634 = vxor.u32 %v3533, 2147483648
        %v3635 = vmul.f32 %v3634, 1.442695
        %v3636 = vpow.pop %v3635
        %v3637 = vadd.f32 %v3636, 1.0
        %v3638 = vrcp.pop %v3637
        %v3639 = vmul.f32 %v3637, %v3638
        %v3640 = vsub.f32 1.0, %v3639
        %v3641 = vmul.f32 %v3638, %v3640
        %v3642 = vadd.f32 %v3638, %v3641
        %vm3643 = vweird.f32 %v3637
        %vm3644 = vweird.f32 %v3638
        %vm3645 = vmor %vm3643, %vm3644
        %v3646 = vsel %vm3645, %v3638, %v3642
        %v3647 = vand.u32 2147483647, %v3637
        %vm3648 = vcmp.eq.f32.partialorder %v3647, 8.507059e+37
        %v3649 = vand.u32 %v3637, 2147483648
        %v3650 = vor.u32 1.1754944e-38, %v3649
        %v3651 = vsel %vm3648, %v3650, %v3646
        %v3652 = vmul.f32 1.0, %v3651
        %v3653 = vtanh.pop %v3573
        %v3654 = vxor.u32 %v3613, 2147483648
        %v3655 = vmul.f32 %v3654, 1.442695
        %v3656 = vpow.pop %v3655
        %v3657 = vadd.f32 %v3656, 1.0
        %v3658 = vrcp.pop %v3657
        %v3659 = vmul.f32 %v3657, %v3658
        %v3660 = vsub.f32 1.0, %v3659
        %v3661 = vmul.f32 %v3658, %v3660
        %v3662 = vadd.f32 %v3658, %v3661
        %vm3663 = vweird.f32 %v3657
        %vm3664 = vweird.f32 %v3658
        %vm3665 = vmor %vm3663, %vm3664
        %v3666 = vsel %vm3665, %v3658, %v3662
        %v3667 = vand.u32 2147483647, %v3657
        %vm3668 = vcmp.eq.f32.partialorder %v3667, 8.507059e+37
        %v3669 = vand.u32 %v3657, 2147483648
        %v3670 = vor.u32 1.1754944e-38, %v3669
        %v3671 = vsel %vm3668, %v3670, %v3666
        %v3672 = vmul.f32 1.0, %v3671
        %v3673 = vmul.f32 %v3652, %v3298
        %v3674 = vmul.f32 %v3633, %v3653
        %v3675 = vadd.f32 %v3673, %v3674
        %v3676 = vtanh.pop %v3675
        %v3677 = vmul.f32 %v3672, %v3676
        %s3678 = scalar_lea.vmem [#allocation3], 48
        %3679 = vst [vmem:[%s3678] sm:$0xff] %v3677
        %s3680 = scalar_lea.vmem [#allocation2], 224
        %v3681 = vld [vmem:[%s3680] sm:$0xff]
        %v3682 = vld [vmem:[%s3680 + $0x8] sm:$0xff]
        %v3683 = vld [vmem:[%s3680 + $0x10] sm:$0xff]
        %v3684 = vld [vmem:[%s3680 + $0x18] sm:$0xff]
        %3685 = vmatpush.msra.mxu0 %v623
        %3686 = vmatpush.msra.mxu0 %v619
        %3687 = vmatpush.msra.mxu0 %v615
        %3688 = vmatpush.msra.mxu0 %v611
        %3689 = vmatpush.msra.mxu0 %v607
        %3690 = vmatpush.msra.mxu0 %v603
        %3691 = vmatpush.msra.mxu0 %v599
        %3692 = vmatpush.msra.mxu0 %v595
        %3693 = vmatpush.msra.mxu0 %v591
        %3694 = vmatpush.msra.mxu0 %v587
        %3695 = vmatpush.msra.mxu0 %v583
        %3696 = vmatpush.msra.mxu0 %v579
        %3697 = vmatpush.msra.mxu0 %v575
        %3698 = vmatpush.msra.mxu0 %v571
        %3699 = vmatpush.msra.mxu0 %v567
        %3700 = vmatpush.msra.mxu0 %v563
        %3701 = vmatmul.f32.gmra.mxu0 %v3454
        %v3702 = vpop.f32.mrf.mxu0
        %v3703 = vadd.f32 0.0, %v3702
        %3704 = vdwg.mxu0
        %3705 = vmatpush.msra.mxu0 %v624
        %3706 = vmatpush.msra.mxu0 %v620
        %3707 = vmatpush.msra.mxu0 %v616
        %3708 = vmatpush.msra.mxu0 %v612
        %3709 = vmatpush.msra.mxu0 %v608
        %3710 = vmatpush.msra.mxu0 %v604
        %3711 = vmatpush.msra.mxu0 %v600
        %3712 = vmatpush.msra.mxu0 %v596
        %3713 = vmatpush.msra.mxu0 %v592
        %3714 = vmatpush.msra.mxu0 %v588
        %3715 = vmatpush.msra.mxu0 %v584
        %3716 = vmatpush.msra.mxu0 %v580
        %3717 = vmatpush.msra.mxu0 %v576
        %3718 = vmatpush.msra.mxu0 %v572
        %3719 = vmatpush.msra.mxu0 %v568
        %3720 = vmatpush.msra.mxu0 %v564
        %3721 = vmatmul.f32.gmra.mxu0 %v3454
        %v3722 = vpop.f32.mrf.mxu0
        %v3723 = vadd.f32 0.0, %v3722
        %3724 = vdwg.mxu0
        %3725 = vmatpush.msra.mxu0 %v625
        %3726 = vmatpush.msra.mxu0 %v621
        %3727 = vmatpush.msra.mxu0 %v617
        %3728 = vmatpush.msra.mxu0 %v613
        %3729 = vmatpush.msra.mxu0 %v609
        %3730 = vmatpush.msra.mxu0 %v605
        %3731 = vmatpush.msra.mxu0 %v601
        %3732 = vmatpush.msra.mxu0 %v597
        %3733 = vmatpush.msra.mxu0 %v593
        %3734 = vmatpush.msra.mxu0 %v589
        %3735 = vmatpush.msra.mxu0 %v585
        %3736 = vmatpush.msra.mxu0 %v581
        %3737 = vmatpush.msra.mxu0 %v577
        %3738 = vmatpush.msra.mxu0 %v573
        %3739 = vmatpush.msra.mxu0 %v569
        %3740 = vmatpush.msra.mxu0 %v565
        %3741 = vmatmul.f32.gmra.mxu0 %v3454
        %v3742 = vpop.f32.mrf.mxu0
        %v3743 = vadd.f32 0.0, %v3742
        %3744 = vdwg.mxu0
        %3745 = vmatpush.msra.mxu0 %v626
        %3746 = vmatpush.msra.mxu0 %v622
        %3747 = vmatpush.msra.mxu0 %v618
        %3748 = vmatpush.msra.mxu0 %v614
        %3749 = vmatpush.msra.mxu0 %v610
        %3750 = vmatpush.msra.mxu0 %v606
        %3751 = vmatpush.msra.mxu0 %v602
        %3752 = vmatpush.msra.mxu0 %v598
        %3753 = vmatpush.msra.mxu0 %v594
        %3754 = vmatpush.msra.mxu0 %v590
        %3755 = vmatpush.msra.mxu0 %v586
        %3756 = vmatpush.msra.mxu0 %v582
        %3757 = vmatpush.msra.mxu0 %v578
        %3758 = vmatpush.msra.mxu0 %v574
        %3759 = vmatpush.msra.mxu0 %v570
        %3760 = vmatpush.msra.mxu0 %v566
        %3761 = vmatmul.f32.gmra.mxu0 %v3454
        %v3762 = vpop.f32.mrf.mxu0
        %v3763 = vadd.f32 0.0, %v3762
        %3764 = vdwg.mxu0
        %v3765 = vadd.f32 %v3681, %v3703
        %v3766 = vadd.f32 %v3682, %v3723
        %v3767 = vadd.f32 %v3683, %v3743
        %v3768 = vadd.f32 %v3684, %v3763
        %v3769 = vxor.u32 %v3765, 2147483648
        %v3770 = vmul.f32 %v3769, 1.442695
        %v3771 = vpow.pop %v3770
        %v3772 = vadd.f32 %v3771, 1.0
        %v3773 = vrcp.pop %v3772
        %v3774 = vmul.f32 %v3772, %v3773
        %v3775 = vsub.f32 1.0, %v3774
        %v3776 = vmul.f32 %v3773, %v3775
        %v3777 = vadd.f32 %v3773, %v3776
        %vm3778 = vweird.f32 %v3772
        %vm3779 = vweird.f32 %v3773
        %vm3780 = vmor %vm3778, %vm3779
        %v3781 = vsel %vm3780, %v3773, %v3777
        %v3782 = vand.u32 2147483647, %v3772
        %vm3783 = vcmp.eq.f32.partialorder %v3782, 8.507059e+37
        %v3784 = vand.u32 %v3772, 2147483648
        %v3785 = vor.u32 1.1754944e-38, %v3784
        %v3786 = vsel %vm3783, %v3785, %v3781
        %v3787 = vmul.f32 1.0, %v3786
        %v3788 = vxor.u32 %v3766, 2147483648
        %v3789 = vmul.f32 %v3788, 1.442695
        %v3790 = vpow.pop %v3789
        %v3791 = vadd.f32 %v3790, 1.0
        %v3792 = vrcp.pop %v3791
        %v3793 = vmul.f32 %v3791, %v3792
        %v3794 = vsub.f32 1.0, %v3793
        %v3795 = vmul.f32 %v3792, %v3794
        %v3796 = vadd.f32 %v3792, %v3795
        %vm3797 = vweird.f32 %v3791
        %vm3798 = vweird.f32 %v3792
        %vm3799 = vmor %vm3797, %vm3798
        %v3800 = vsel %vm3799, %v3792, %v3796
        %v3801 = vand.u32 2147483647, %v3791
        %vm3802 = vcmp.eq.f32.partialorder %v3801, 8.507059e+37
        %v3803 = vand.u32 %v3791, 2147483648
        %v3804 = vor.u32 1.1754944e-38, %v3803
        %v3805 = vsel %vm3802, %v3804, %v3800
        %v3806 = vmul.f32 1.0, %v3805
        %v3807 = vtanh.pop %v3767
        %v3808 = vxor.u32 %v3768, 2147483648
        %v3809 = vmul.f32 %v3808, 1.442695
        %v3810 = vpow.pop %v3809
        %v3811 = vadd.f32 %v3810, 1.0
        %v3812 = vrcp.pop %v3811
        %v3813 = vmul.f32 %v3811, %v3812
        %v3814 = vsub.f32 1.0, %v3813
        %v3815 = vmul.f32 %v3812, %v3814
        %v3816 = vadd.f32 %v3812, %v3815
        %vm3817 = vweird.f32 %v3811
        %vm3818 = vweird.f32 %v3812
        %vm3819 = vmor %vm3817, %vm3818
        %v3820 = vsel %vm3819, %v3812, %v3816
        %v3821 = vand.u32 2147483647, %v3811
        %vm3822 = vcmp.eq.f32.partialorder %v3821, 8.507059e+37
        %v3823 = vand.u32 %v3811, 2147483648
        %v3824 = vor.u32 1.1754944e-38, %v3823
        %v3825 = vsel %vm3822, %v3824, %v3820
        %v3826 = vmul.f32 1.0, %v3825
        %v3827 = vmul.f32 %v3806, %v3452
        %v3828 = vmul.f32 %v3787, %v3807
        %v3829 = vadd.f32 %v3827, %v3828
        %v3830 = vtanh.pop %v3829
        %v3831 = vmul.f32 %v3826, %v3830
        %3832 = vmatpush.msra.mxu0 %v687
        %3833 = vmatpush.msra.mxu0 %v683
        %3834 = vmatpush.msra.mxu0 %v679
        %3835 = vmatpush.msra.mxu0 %v675
        %3836 = vmatpush.msra.mxu0 %v671
        %3837 = vmatpush.msra.mxu0 %v667
        %3838 = vmatpush.msra.mxu0 %v663
        %3839 = vmatpush.msra.mxu0 %v659
        %3840 = vmatpush.msra.mxu0 %v655
        %3841 = vmatpush.msra.mxu0 %v651
        %3842 = vmatpush.msra.mxu0 %v647
        %3843 = vmatpush.msra.mxu0 %v643
        %3844 = vmatpush.msra.mxu0 %v639
        %3845 = vmatpush.msra.mxu0 %v635
        %3846 = vmatpush.msra.mxu0 %v631
        %3847 = vmatpush.msra.mxu0 %v627
        %3848 = vmatmul.f32.gmra.mxu0 %v3831
        %v3849 = vpop.f32.mrf.mxu0
        %v3850 = vadd.f32 %v757, %v3849
        %3851 = vdwg.mxu0
        %3852 = vmatpush.msra.mxu0 %v751
        %3853 = vmatpush.msra.mxu0 %v747
        %3854 = vmatpush.msra.mxu0 %v743
        %3855 = vmatpush.msra.mxu0 %v739
        %3856 = vmatpush.msra.mxu0 %v735
        %3857 = vmatpush.msra.mxu0 %v731
        %3858 = vmatpush.msra.mxu0 %v727
        %3859 = vmatpush.msra.mxu0 %v723
        %3860 = vmatpush.msra.mxu0 %v719
        %3861 = vmatpush.msra.mxu0 %v715
        %3862 = vmatpush.msra.mxu0 %v711
        %3863 = vmatpush.msra.mxu0 %v707
        %3864 = vmatpush.msra.mxu0 %v703
        %3865 = vmatpush.msra.mxu0 %v699
        %3866 = vmatpush.msra.mxu0 %v695
        %3867 = vmatpush.msra.mxu0 %v691
        %3868 = vmatmul.f32.gmra.mxu0 %v3677
        %v3869 = vpop.f32.mrf.mxu0
        %v3870 = vadd.f32 %v3850, %v3869
        %3871 = vdwg.mxu0
        %3872 = vmatpush.msra.mxu0 %v688
        %3873 = vmatpush.msra.mxu0 %v684
        %3874 = vmatpush.msra.mxu0 %v680
        %3875 = vmatpush.msra.mxu0 %v676
        %3876 = vmatpush.msra.mxu0 %v672
        %3877 = vmatpush.msra.mxu0 %v668
        %3878 = vmatpush.msra.mxu0 %v664
        %3879 = vmatpush.msra.mxu0 %v660
        %3880 = vmatpush.msra.mxu0 %v656
        %3881 = vmatpush.msra.mxu0 %v652
        %3882 = vmatpush.msra.mxu0 %v648
        %3883 = vmatpush.msra.mxu0 %v644
        %3884 = vmatpush.msra.mxu0 %v640
        %3885 = vmatpush.msra.mxu0 %v636
        %3886 = vmatpush.msra.mxu0 %v632
        %3887 = vmatpush.msra.mxu0 %v628
        %3888 = vmatmul.f32.gmra.mxu0 %v3831
        %v3889 = vpop.f32.mrf.mxu0
        %v3890 = vadd.f32 %v758, %v3889
        %3891 = vdwg.mxu0
        %3892 = vmatpush.msra.mxu0 %v752
        %3893 = vmatpush.msra.mxu0 %v748
        %3894 = vmatpush.msra.mxu0 %v744
        %3895 = vmatpush.msra.mxu0 %v740
        %3896 = vmatpush.msra.mxu0 %v736
        %3897 = vmatpush.msra.mxu0 %v732
        %3898 = vmatpush.msra.mxu0 %v728
        %3899 = vmatpush.msra.mxu0 %v724
        %3900 = vmatpush.msra.mxu0 %v720
        %3901 = vmatpush.msra.mxu0 %v716
        %3902 = vmatpush.msra.mxu0 %v712
        %3903 = vmatpush.msra.mxu0 %v708
        %3904 = vmatpush.msra.mxu0 %v704
        %3905 = vmatpush.msra.mxu0 %v700
        %3906 = vmatpush.msra.mxu0 %v696
        %3907 = vmatpush.msra.mxu0 %v692
        %3908 = vmatmul.f32.gmra.mxu0 %v3677
        %v3909 = vpop.f32.mrf.mxu0
        %v3910 = vadd.f32 %v3890, %v3909
        %3911 = vdwg.mxu0
        %3912 = vmatpush.msra.mxu0 %v689
        %3913 = vmatpush.msra.mxu0 %v685
        %3914 = vmatpush.msra.mxu0 %v681
        %3915 = vmatpush.msra.mxu0 %v677
        %3916 = vmatpush.msra.mxu0 %v673
        %3917 = vmatpush.msra.mxu0 %v669
        %3918 = vmatpush.msra.mxu0 %v665
        %3919 = vmatpush.msra.mxu0 %v661
        %3920 = vmatpush.msra.mxu0 %v657
        %3921 = vmatpush.msra.mxu0 %v653
        %3922 = vmatpush.msra.mxu0 %v649
        %3923 = vmatpush.msra.mxu0 %v645
        %3924 = vmatpush.msra.mxu0 %v641
        %3925 = vmatpush.msra.mxu0 %v637
        %3926 = vmatpush.msra.mxu0 %v633
        %3927 = vmatpush.msra.mxu0 %v629
        %3928 = vmatmul.f32.gmra.mxu0 %v3831
        %v3929 = vpop.f32.mrf.mxu0
        %v3930 = vadd.f32 %v759, %v3929
        %3931 = vdwg.mxu0
        %3932 = vmatpush.msra.mxu0 %v753
        %3933 = vmatpush.msra.mxu0 %v749
        %3934 = vmatpush.msra.mxu0 %v745
        %3935 = vmatpush.msra.mxu0 %v741
        %3936 = vmatpush.msra.mxu0 %v737
        %3937 = vmatpush.msra.mxu0 %v733
        %3938 = vmatpush.msra.mxu0 %v729
        %3939 = vmatpush.msra.mxu0 %v725
        %3940 = vmatpush.msra.mxu0 %v721
        %3941 = vmatpush.msra.mxu0 %v717
        %3942 = vmatpush.msra.mxu0 %v713
        %3943 = vmatpush.msra.mxu0 %v709
        %3944 = vmatpush.msra.mxu0 %v705
        %3945 = vmatpush.msra.mxu0 %v701
        %3946 = vmatpush.msra.mxu0 %v697
        %3947 = vmatpush.msra.mxu0 %v693
        %3948 = vmatmul.f32.gmra.mxu0 %v3677
        %v3949 = vpop.f32.mrf.mxu0
        %v3950 = vadd.f32 %v3930, %v3949
        %3951 = vdwg.mxu0
        %3952 = vmatpush.msra.mxu0 %v690
        %3953 = vmatpush.msra.mxu0 %v686
        %3954 = vmatpush.msra.mxu0 %v682
        %3955 = vmatpush.msra.mxu0 %v678
        %3956 = vmatpush.msra.mxu0 %v674
        %3957 = vmatpush.msra.mxu0 %v670
        %3958 = vmatpush.msra.mxu0 %v666
        %3959 = vmatpush.msra.mxu0 %v662
        %3960 = vmatpush.msra.mxu0 %v658
        %3961 = vmatpush.msra.mxu0 %v654
        %3962 = vmatpush.msra.mxu0 %v650
        %3963 = vmatpush.msra.mxu0 %v646
        %3964 = vmatpush.msra.mxu0 %v642
        %3965 = vmatpush.msra.mxu0 %v638
        %3966 = vmatpush.msra.mxu0 %v634
        %3967 = vmatpush.msra.mxu0 %v630
        %3968 = vmatmul.f32.gmra.mxu0 %v3831
        %v3969 = vpop.f32.mrf.mxu0
        %v3970 = vadd.f32 %v760, %v3969
        %3971 = vdwg.mxu0
        %3972 = vmatpush.msra.mxu0 %v754
        %3973 = vmatpush.msra.mxu0 %v750
        %3974 = vmatpush.msra.mxu0 %v746
        %3975 = vmatpush.msra.mxu0 %v742
        %3976 = vmatpush.msra.mxu0 %v738
        %3977 = vmatpush.msra.mxu0 %v734
        %3978 = vmatpush.msra.mxu0 %v730
        %3979 = vmatpush.msra.mxu0 %v726
        %3980 = vmatpush.msra.mxu0 %v722
        %3981 = vmatpush.msra.mxu0 %v718
        %3982 = vmatpush.msra.mxu0 %v714
        %3983 = vmatpush.msra.mxu0 %v710
        %3984 = vmatpush.msra.mxu0 %v706
        %3985 = vmatpush.msra.mxu0 %v702
        %3986 = vmatpush.msra.mxu0 %v698
        %3987 = vmatpush.msra.mxu0 %v694
        %3988 = vmatmul.f32.gmra.mxu0 %v3677
        %v3989 = vpop.f32.mrf.mxu0
        %v3990 = vadd.f32 %v3970, %v3989
        %3991 = vdwg.mxu0
        %v3992 = vxor.u32 %v3870, 2147483648
        %v3993 = vmul.f32 %v3992, 1.442695
        %v3994 = vpow.pop %v3993
        %v3995 = vadd.f32 %v3994, 1.0
        %v3996 = vrcp.pop %v3995
        %v3997 = vmul.f32 %v3995, %v3996
        %v3998 = vsub.f32 1.0, %v3997
        %v3999 = vmul.f32 %v3996, %v3998
        %v4000 = vadd.f32 %v3996, %v3999
        %vm4001 = vweird.f32 %v3995
        %vm4002 = vweird.f32 %v3996
        %vm4003 = vmor %vm4001, %vm4002
        %v4004 = vsel %vm4003, %v3996, %v4000
        %v4005 = vand.u32 2147483647, %v3995
        %vm4006 = vcmp.eq.f32.partialorder %v4005, 8.507059e+37
        %v4007 = vand.u32 %v3995, 2147483648
        %v4008 = vor.u32 1.1754944e-38, %v4007
        %v4009 = vsel %vm4006, %v4008, %v4004
        %v4010 = vmul.f32 1.0, %v4009
        %v4011 = vxor.u32 %v3910, 2147483648
        %v4012 = vmul.f32 %v4011, 1.442695
        %v4013 = vpow.pop %v4012
        %v4014 = vadd.f32 %v4013, 1.0
        %v4015 = vrcp.pop %v4014
        %v4016 = vmul.f32 %v4014, %v4015
        %v4017 = vsub.f32 1.0, %v4016
        %v4018 = vmul.f32 %v4015, %v4017
        %v4019 = vadd.f32 %v4015, %v4018
        %vm4020 = vweird.f32 %v4014
        %vm4021 = vweird.f32 %v4015
        %vm4022 = vmor %vm4020, %vm4021
        %v4023 = vsel %vm4022, %v4015, %v4019
        %v4024 = vand.u32 2147483647, %v4014
        %vm4025 = vcmp.eq.f32.partialorder %v4024, 8.507059e+37
        %v4026 = vand.u32 %v4014, 2147483648
        %v4027 = vor.u32 1.1754944e-38, %v4026
        %v4028 = vsel %vm4025, %v4027, %v4023
        %v4029 = vmul.f32 1.0, %v4028
        %v4030 = vtanh.pop %v3950
        %v4031 = vxor.u32 %v3990, 2147483648
        %v4032 = vmul.f32 %v4031, 1.442695
        %v4033 = vpow.pop %v4032
        %v4034 = vadd.f32 %v4033, 1.0
        %v4035 = vrcp.pop %v4034
        %v4036 = vmul.f32 %v4034, %v4035
        %v4037 = vsub.f32 1.0, %v4036
        %v4038 = vmul.f32 %v4035, %v4037
        %v4039 = vadd.f32 %v4035, %v4038
        %vm4040 = vweird.f32 %v4034
        %vm4041 = vweird.f32 %v4035
        %vm4042 = vmor %vm4040, %vm4041
        %v4043 = vsel %vm4042, %v4035, %v4039
        %v4044 = vand.u32 2147483647, %v4034
        %vm4045 = vcmp.eq.f32.partialorder %v4044, 8.507059e+37
        %v4046 = vand.u32 %v4034, 2147483648
        %v4047 = vor.u32 1.1754944e-38, %v4046
        %v4048 = vsel %vm4045, %v4047, %v4043
        %v4049 = vmul.f32 1.0, %v4048
        %v4050 = vmul.f32 %v4029, %v3675
        %v4051 = vmul.f32 %v4010, %v4030
        %v4052 = vadd.f32 %v4050, %v4051
        %v4053 = vtanh.pop %v4052
        %v4054 = vmul.f32 %v4049, %v4053
        %s4055 = scalar_lea.vmem [#allocation3], 56
        %4056 = vst [vmem:[%s4055] sm:$0xff] %v4054
        %4057 = vst [vmem:[#allocation4] sm:$0xff] %v3831
        %4058 = vst [vmem:[%s1037] sm:$0xff] %v3829
        %4059 = vst [vmem:[%s1039] sm:$0xff] %v4054
        %4060 = vst [vmem:[%s1041] sm:$0xff] %v4052
        %v4061 = vld [vmem:[#allocation3] sm:$0xff]
        %v4062 = vld [vmem:[#allocation3 + $0x8] sm:$0xff]
        %v4063 = vld [vmem:[#allocation3 + $0x10] sm:$0xff]
        %v4064 = vld [vmem:[#allocation3 + $0x18] sm:$0xff]
        %v4065 = vld [vmem:[#allocation3 + $0x20] sm:$0xff]
        %v4066 = vld [vmem:[#allocation3 + $0x28] sm:$0xff]
        %v4067 = vld [vmem:[#allocation3 + $0x30] sm:$0xff]
        %v4068 = vld [vmem:[#allocation3 + $0x38] sm:$0xff]
        %v4069 = vld [vmem:[#allocation17] sm:$0xff]
        %v4070 = vld [vmem:[#allocation17 + $0x8] sm:$0xff]
        %v4071 = vld [vmem:[#allocation17 + $0x10] sm:$0xff]
        %v4072 = vld [vmem:[#allocation17 + $0x18] sm:$0xff]
        %v4073 = vld [vmem:[#allocation17 + $0x20] sm:$0xff]
        %v4074 = vld [vmem:[#allocation17 + $0x28] sm:$0xff]
        %v4075 = vld [vmem:[#allocation17 + $0x30] sm:$0xff]
        %v4076 = vld [vmem:[#allocation17 + $0x38] sm:$0xff]
        %v4077 = vld [vmem:[#allocation17 + $0x40] sm:$0xff]
        %v4078 = vld [vmem:[#allocation17 + $0x48] sm:$0xff]
        %v4079 = vld [vmem:[#allocation17 + $0x50] sm:$0xff]
        %v4080 = vld [vmem:[#allocation17 + $0x58] sm:$0xff]
        %v4081 = vld [vmem:[#allocation17 + $0x60] sm:$0xff]
        %v4082 = vld [vmem:[#allocation17 + $0x68] sm:$0xff]
        %v4083 = vld [vmem:[#allocation17 + $0x70] sm:$0xff]
        %v4084 = vld [vmem:[#allocation17 + $0x78] sm:$0xff]
        %v4085 = vld [vmem:[%s9] sm:$0x1]
        %v4087 = vperm.slane %v4085, 0
        %4089 = vmatpush.msra.mxu0 %v4084
        %4090 = vmatpush.msra.mxu0 %v4083
        %4091 = vmatpush.msra.mxu0 %v4082
        %4092 = vmatpush.msra.mxu0 %v4081
        %4093 = vmatpush.msra.mxu0 %v4080
        %4094 = vmatpush.msra.mxu0 %v4079
        %4095 = vmatpush.msra.mxu0 %v4078
        %4096 = vmatpush.msra.mxu0 %v4077
        %4097 = vmatpush.msra.mxu0 %v4076
        %4098 = vmatpush.msra.mxu0 %v4075
        %4099 = vmatpush.msra.mxu0 %v4074
        %4100 = vmatpush.msra.mxu0 %v4073
        %4101 = vmatpush.msra.mxu0 %v4072
        %4102 = vmatpush.msra.mxu0 %v4071
        %4103 = vmatpush.msra.mxu0 %v4070
        %4104 = vmatpush.msra.mxu0 %v4069
        %4105 = vmatmul.f32.gmra.mxu0 %v4061
        %v4106 = vpop.f32.mrf.mxu0
        %v4107 = vadd.f32 %v4087, %v4106
        %4108 = vmatmul.f32.gmra.mxu0 %v4062
        %v4109 = vpop.f32.mrf.mxu0
        %v4110 = vadd.f32 %v4087, %v4109
        %4111 = vmatmul.f32.gmra.mxu0 %v4063
        %v4112 = vpop.f32.mrf.mxu0
        %v4113 = vadd.f32 %v4087, %v4112
        %4114 = vmatmul.f32.gmra.mxu0 %v4064
        %v4115 = vpop.f32.mrf.mxu0
        %v4116 = vadd.f32 %v4087, %v4115
        %4117 = vmatmul.f32.gmra.mxu0 %v4065
        %v4118 = vpop.f32.mrf.mxu0
        %v4119 = vadd.f32 %v4087, %v4118
        %4120 = vmatmul.f32.gmra.mxu0 %v4066
        %v4121 = vpop.f32.mrf.mxu0
        %v4122 = vadd.f32 %v4087, %v4121
        %4123 = vmatmul.f32.gmra.mxu0 %v4067
        %v4124 = vpop.f32.mrf.mxu0
        %v4125 = vadd.f32 %v4087, %v4124
        %4126 = vmatmul.f32.gmra.mxu0 %v4068
        %v4127 = vpop.f32.mrf.mxu0
        %v4128 = vadd.f32 %v4087, %v4127
        %4129 = vdwg.mxu0
        %4130 = vst [vmem:[%s539] sm:$0xff] %v4107
        %4131 = vst [vmem:[%s539 + $0x8] sm:$0xff] %v4110
        %4132 = vst [vmem:[%s539 + $0x10] sm:$0xff] %v4113
        %4133 = vst [vmem:[%s539 + $0x18] sm:$0xff] %v4116
        %4134 = vst [vmem:[%s539 + $0x20] sm:$0xff] %v4119
        %4135 = vst [vmem:[%s539 + $0x28] sm:$0xff] %v4122
        %4136 = vst [vmem:[%s539 + $0x30] sm:$0xff] %v4125
        %4137 = vst [vmem:[%s539 + $0x38] sm:$0xff] %v4128
        %p4138 = scmp.eq.s32.totalorder %s35, 1
        // Predicated region
        $region97: #{tpu_custom_call.1} parent=59 // pred_check
          %p4139 = pneg %p4138
        $region98: #{tpu_custom_call.1} parent=59 // pred_check_branch
          %4141 = sbr.rel (%p4139) target = $region100
        $region99: #{tpu_custom_call.1} parent=59 // pred_region
          %4142 = vst [vmem:[#allocation20] sm:$0xff] %v3831
          %s4143 = scalar_lea.vmem [#allocation20], 8
          %4144 = vst [vmem:[%s4143] sm:$0xff] %v4054
          %4145 = vst [vmem:[#allocation22] sm:$0xff] %v3829
          %s4146 = scalar_lea.vmem [#allocation22], 8
          %4147 = vst [vmem:[%s4146] sm:$0xff] %v4052
        $region100: #{tpu_custom_call.1} parent=59 // pred_fallthru
          _
        %s4148 = sand.u32 %s258, 1
        %s4149 = scalar_lea.sflag [#allocation7], %s4148
        %s4150 = sand.u32 %s258, 1
        %s4151 = smul.addr %s4150, 64
        %s4152 = scalar_lea.vmem [#allocation19], %s4151
        // Predicated region
        $region101: #{tpu_custom_call.1} parent=59 // pred_check
          %p4153 = pneg %p268
        $region102: #{tpu_custom_call.1} parent=59 // pred_check_branch
          %4155 = sbr.rel (%p4153) target = $region104
        $region103: #{tpu_custom_call.1} parent=59 // pred_region
          %s4156 = smul.u32 8, %s35
          %4158 = vsyncadd %s4149, 0
          %s4159 = smul.addr %s4156, 8
          %s4160 = scalar_lea.hbm %s10, %s4159
          %s4161 = sshll.u32 %s4152, 4
          %s4162 = int_to_ptr.vmem [resolvable:$true] %s4161
          %s4163 = sshll.u32 %s4160, 4
          %s4164 = int_to_ptr.hbm [resolvable:$true] %s4163
          %4169 = dma.vmem_to_hbm [thread:$0]  %s4162, 1024, %s4164, %s4149, 128, 128, 8
        $region104: #{tpu_custom_call.1} parent=59 // pred_fallthru
          _
        // Predicated region
        $region105: #{tpu_custom_call.1} parent=59 // pred_check
          %p4170 = pneg %p289
        $region106: #{tpu_custom_call.1} parent=59 // pred_check_branch
          %4172 = sbr.rel (%p4170) target = $region108
        $region107: #{tpu_custom_call.1} parent=59 // pred_region
          %4174 = vsyncadd [#allocation21], 0
          %s4175 = sshll.u32 [#allocation20], 4
          %s4176 = int_to_ptr.vmem [resolvable:$true] %s4175
          %s4177 = sshll.u32 %s11, 4
          %s4178 = int_to_ptr.hbm [resolvable:$true] %s4177
          %4183 = dma.vmem_to_hbm [thread:$0]  %s4176, 256, %s4178, [#allocation21], 128, 128, 8
        $region108: #{tpu_custom_call.1} parent=59 // pred_fallthru
          _
        // Predicated region
        $region109: #{tpu_custom_call.1} parent=59 // pred_check
          %p4184 = pneg %p310
        $region110: #{tpu_custom_call.1} parent=59 // pred_check_branch
          %4186 = sbr.rel (%p4184) target = $region112
        $region111: #{tpu_custom_call.1} parent=59 // pred_region
          %4188 = vsyncadd [#allocation21], 0
          %s4189 = sshll.u32 [#allocation22], 4
          %s4190 = int_to_ptr.vmem [resolvable:$true] %s4189
          %s4191 = sshll.u32 %s12, 4
          %s4192 = int_to_ptr.hbm [resolvable:$true] %s4191
          %4197 = dma.vmem_to_hbm [thread:$0]  %s4190, 256, %s4192, [#allocation21], 128, 128, 8
        $region112: #{tpu_custom_call.1} parent=59 // pred_fallthru
          _
        // Predicated region
        $region113: #{tpu_custom_call.1} parent=59 // pred_check
          %p4198 = pneg %p289
        $region114: #{tpu_custom_call.1} parent=59 // pred_check_branch
          %4200 = sbr.rel (%p4198) target = $region116
        $region115: #{tpu_custom_call.1} parent=59 // pred_region
          %4202 = dma.done [#allocation21], 256
        $region116: #{tpu_custom_call.1} parent=59 // pred_fallthru
          _
        // Predicated region
        $region117: #{tpu_custom_call.1} parent=59 // pred_check
          %p4203 = pneg %p310
        $region118: #{tpu_custom_call.1} parent=59 // pred_check_branch
          %4205 = sbr.rel (%p4203) target = $region120
        $region119: #{tpu_custom_call.1} parent=59 // pred_region
          %4207 = dma.done [#allocation21], 256
        $region120: #{tpu_custom_call.1} parent=59 // pred_fallthru
          _
      $region60: #{tpu_custom_call.1} parent=5 // pred_fallthru
        _
      %p4208 = scmp.le.s32.totalorder 2, %s30
      // Predicated region
      $region121: #{tpu_custom_call.1} parent=5 // pred_check
        %p4209 = pneg %p4208
      $region122: #{tpu_custom_call.1} parent=5 // pred_check_branch
        %4211 = sbr.rel (%p4209) target = $region124
      $region123: #{tpu_custom_call.1} parent=5 // pred_region
        %s4212 = ssub.s32 %s30, 2
        // Predicated region
        $region125: #{tpu_custom_call.1} parent=123 // pred_check
          %p4213 = pneg %p274
        $region126: #{tpu_custom_call.1} parent=123 // pred_check_branch
          %4215 = sbr.rel (%p4213) target = $region128
        $region127: #{tpu_custom_call.1} parent=123 // pred_region
          %s4216 = sand.u32 %s259, 1
          %s4217 = scalar_lea.sflag [#allocation7], %s4216
          %s4218 = sand.u32 %s259, 1
          %s4219 = smul.addr %s4218, 64
          %s4220 = scalar_lea.vmem [#allocation19], %s4219
          %4222 = dma.done %s4217, 1024
        $region128: #{tpu_custom_call.1} parent=123 // pred_fallthru
          _
      $region124: #{tpu_custom_call.1} parent=5 // pred_fallthru
        _
    $region6: #{tpu_custom_call.1} parent=1 // loop_footer
      %s34 = sadd.s32 1, %s30
    $region7: #{tpu_custom_call.1} parent=1 // loop_footer_branch
      %29 = sbr.rel target = $region3
    $region8: #{tpu_custom_call.1} parent=1 // loop_exit
      _
    %4223 = vsyncpa [#allocation6], 1
    %s4224 = scalar_lea.sflag [#allocation6], 1
    %4225 = vsyncpa %s4224, 1
    %4226 = vsyncpa [#allocation9], 1
    %4227 = vsyncpa [#allocation12], 1
    %4228 = vsyncpa [#allocation15], 1
    %4229 = vsyncpa [#allocation18], 1
    %4230 = vsyncpa [#allocation7], 1
    %s4231 = scalar_lea.sflag [#allocation7], 1
    %4232 = vsyncpa %s4231, 1
    %4233 = vsyncpa [#allocation21], 1

</llo_original>
